<compile_context>
chip_gen: v7x
topology: tpu7x:2x2x1
jax: 0.10.0
libtpu: 0.0.40
codegen_flags: <defaults>
</compile_context>

<pallas_src>
import numpy as np
import jax
import jax.numpy as jnp
from jax.experimental import pallas as pl
from jax.experimental.pallas import tpu as pltpu


# ----------------------------------------------------------------------------
# Fused kernel: conv1+BN+ReLU -> conv2+BN+ReLU+pool -> conv3+BN+ReLU+pool -> fc
# All convs are block-banded MXU matmuls on lane-concatenated channel slabs.
# ----------------------------------------------------------------------------
def _conv_stack_kernel(x_ref, w1_ref, b1_ref, w2e_ref, w2o_ref, b2_ref,
                       w3e_ref, w3o_ref, b3_ref, wfc_ref, bfc_ref,
                       out_ref, pad1, pad2, pad3):
    f32 = jnp.float32
    Bt, T, _ = x_ref.shape          # elements per grid step, time frames, freq bins
    R = T + 2                        # per-element padded rows (1-row time halo each side)
    RT = Bt * R                      # total stacked rows
    L = RT - 2                       # rows touched by the shifted tap matmuls

    def zero_borders(dst):
        # Only the 1-row time halos need zeroing; the interior is rewritten every step.
        z = jnp.zeros((1, dst.shape[1]), f32)
        for e in range(Bt):
            dst[e * R:e * R + 1, :] = z                  # top halo of element e
            dst[e * R + T + 1:e * R + T + 2, :] = z      # bottom halo of element e

    def conv_taps(pad, w_ref):
        # sum over the 3 time taps: shifted slab @ banded weight (freq taps are in the band)
        acc = jnp.dot(pad[0:L, :], w_ref[0], preferred_element_type=f32)
        for dt in (1, 2):
            acc = acc + jnp.dot(pad[dt:dt + L, :], w_ref[dt],
                                preferred_element_type=f32)
        return acc

    # ---- stage input spectrograms into the padded (time-halo) scratch ----------
    for e in range(Bt):
        pad1[e * R + 1:e * R + 1 + T, :] = x_ref[e]
    zero_borders(pad1)

    # ---- layer 1: Conv2d(1 -> C1, 3x3, pad 1) + folded BN + ReLU ----------------
    h1 = jnp.maximum(conv_taps(pad1, w1_ref) + b1_ref[...], 0.0)
    pad2[1:RT - 1, :] = h1           # inter-element garbage rows fixed by zero_borders
    zero_borders(pad2)

    # ---- layer 2: Conv2d(C1 -> C1) + BN + ReLU + MaxPool2d((1,2)) ---------------
    # pool folded into even/odd banded matrices; max commutes with per-channel bias+ReLU
    ev = conv_taps(pad2, w2e_ref)
    od = conv_taps(pad2, w2o_ref)
    h2 = jnp.maximum(jnp.maximum(ev, od) + b2_ref[...], 0.0)
    pad3[1:RT - 1, :] = h2
    zero_borders(pad3)

    # ---- layer 3: Conv2d(C1 -> C2) + BN + ReLU + MaxPool2d((1,2)) ---------------
    ev = conv_taps(pad3, w3e_ref)
    od = conv_taps(pad3, w3o_ref)
    # column index is co*F4 + f == torch's x.transpose(1,2).flatten(-2) layout already
    h3 = jnp.maximum(jnp.maximum(ev, od) + b3_ref[...], 0.0)

    # ---- fc: Linear(C2*F4 -> O); bf16 operands (weight pre-cast), f32 accumulate --
    y = jnp.dot(h3.astype(jnp.bfloat16), wfc_ref[...],
                preferred_element_type=f32) + bfc_ref[...]
    for e in range(Bt):
        out_ref[e] = y[e * R:e * R + T, :]
    # TODO(synk): Dropout layers are identity in this eval-mode forward; training-mode
    # dropout masks (pltpu.prng_*) are not implemented.


# ----------------------------------------------------------------------------
# Host wrapper: one pallas_call, grid over batch blocks, "parallel" semantics.
# ----------------------------------------------------------------------------
def conv_stack_forward(spec, kernel_params, block_b=2):
    (w1, b1v, w2e, w2o, b2v, w3e, w3o, b3v, wfct, bfcv) = kernel_params
    B, T, F = spec.shape
    assert B % block_b == 0, "block_b must divide batch"
    C1F = b1v.shape[1]
    C1F2 = b2v.shape[1]
    C2F4 = b3v.shape[1]
    O = wfct.shape[1]
    RT = block_b * (T + 2)

    full = lambda shape: pl.BlockSpec(shape, lambda b: (0,) * len(shape))

    return pl.pallas_call(
        _conv_stack_kernel,
        out_shape=jax.ShapeDtypeStruct((B, T, O), jnp.float32),
        grid=(B // block_b,),
        in_specs=[
            pl.BlockSpec((block_b, T, F), lambda b: (b, 0, 0)),   # spec tile
            full(w1.shape), full(b1v.shape),                       # layer-1 band, bias
            full(w2e.shape), full(w2o.shape), full(b2v.shape),     # layer-2 bands, bias
            full(w3e.shape), full(w3o.shape), full(b3v.shape),     # layer-3 bands, bias
            full(wfct.shape), full(bfcv.shape),                    # fc weight (bf16), bias
        ],
        out_specs=pl.BlockSpec((block_b, T, O), lambda b: (b, 0, 0)),
        scratch_shapes=[
            pltpu.VMEM((RT, F), jnp.float32),      # padded layer-1 input
            pltpu.VMEM((RT, C1F), jnp.float32),    # padded layer-2 input (C1 channels)
            pltpu.VMEM((RT, C1F2), jnp.float32),   # padded layer-3 input (pooled)
        ],
        compiler_params=pltpu.CompilerParams(
            dimension_semantics=("parallel",),
            vmem_limit_bytes=48 * 1024 * 1024),
    )(spec.astype(jnp.float32), w1, b1v, w2e, w2o, b2v, w3e, w3o, b3v, wfct, bfcv)


# ----------------------------------------------------------------------------
# Host-side weight prep: fold eval-mode BN, build block-banded MXU matrices.
# ----------------------------------------------------------------------------
def _banded_conv_mats(Wf, f_in, pool):
    """Per-time-tap banded matmul matrices for a 3x3 'same' conv on a lane-concatenated
    slab.  Returns one matrix per pool parity (1 if pool=False), each of shape
    (3, Cin*f_in, Cout*f_out) with f_out = f_in//2 (pool) or f_in.  Out-of-range freq
    taps are simply absent from the band => implicit zero freq-padding."""
    W = np.asarray(jax.device_get(Wf), dtype=np.float32)   # (Cout, Cin, 3, 3)
    c_out, c_in = W.shape[0], W.shape[1]
    f_out = f_in // 2 if pool else f_in
    g = np.arange(f_out)
    mats = []
    for parity in ((0, 1) if pool else (0,)):
        fout = 2 * g + parity if pool else g
        m = np.zeros((3, c_in * f_in, c_out * f_out), np.float32)
        for dt in range(3):
            for df in range(3):
                fin = fout + df - 1
                ok = (fin >= 0) & (fin < f_in)
                for ci in range(c_in):
                    for co in range(c_out):
                        m[dt, ci * f_in + fin[ok], co * f_out + g[ok]] = W[co, ci, dt, df]
        mats.append(jnp.asarray(m))
    return mats


def prepare_kernel_params(params, input_features):
    (W1, b1, g1, be1, m1, v1,
     W2, b2, g2, be2, m2, v2,
     W3, b3, g3, be3, m3, v3,
     Wfc, bfc) = params
    eps = 1e-5
    F = input_features
    F2, F4 = F // 2, F // 4

    def fold(W, b, g, be, m, v):
        s = g / jnp.sqrt(v + eps)
        return W * s[:, None, None, None], (b - m) * s + be

    W1f, b1f = fold(W1, b1, g1, be1, m1, v1)
    W2f, b2f = fold(W2, b2, g2, be2, m2, v2)
    W3f, b3f = fold(W3, b3, g3, be3, m3, v3)

    (w1,) = _banded_conv_mats(W1f, F, pool=False)
    w2e, w2o = _banded_conv_mats(W2f, F, pool=True)
    w3e, w3o = _banded_conv_mats(W3f, F2, pool=True)

    b1v = jnp.repeat(b1f, F).reshape(1, -1).astype(jnp.float32)    # col = co*F  + f
    b2v = jnp.repeat(b2f, F2).reshape(1, -1).astype(jnp.float32)   # col = co*F2 + f
    b3v = jnp.repeat(b3f, F4).reshape(1, -1).astype(jnp.float32)   # col = co*F4 + f

    wfct = jnp.transpose(Wfc).astype(jnp.bfloat16)                  # (C2*F4, O), pre-cast
    bfcv = bfc.reshape(1, -1).astype(jnp.float32)
    return (w1, b1v, w2e, w2o, b2v, w3e, w3o, b3v, wfct, bfcv)


# ----------------------------------------------------------------------------
# Pure-JAX reference of the torch forward (eval mode) for validation.
# ----------------------------------------------------------------------------
def reference_forward(spec, params):
    (W1, b1, g1, be1, m1, v1,
     W2, b2, g2, be2, m2, v2,
     W3, b3, g3, be3, m3, v3,
     Wfc, bfc) = params
    B, T, F = spec.shape
    h = spec.reshape(B, 1, T, F).astype(jnp.float32)

    def conv_bn_relu(h, W, b, g, be, m, v):
        y = jax.lax.conv_general_dilated(
            h, W, window_strides=(1, 1), padding=((1, 1), (1, 1)),
            dimension_numbers=("NCHW", "OIHW", "NCHW"),
            precision=jax.lax.Precision.HIGHEST)
        y = y + b[None, :, None, None]
        s = g / jnp.sqrt(v + 1e-5)
        y = s[None, :, None, None] * (y - m[None, :, None, None]) + be[None, :, None, None]
        return jnp.maximum(y, 0.0)

    def maxpool_1x2(h):
        b_, c_, t_, f_ = h.shape
        return h.reshape(b_, c_, t_, f_ // 2, 2).max(axis=-1)

    h = conv_bn_relu(h, W1, b1, g1, be1, m1, v1)
    h = maxpool_1x2(conv_bn_relu(h, W2, b2, g2, be2, m2, v2))
    h = maxpool_1x2(conv_bn_relu(h, W3, b3, g3, be3, m3, v3))
    h = jnp.transpose(h, (0, 2, 1, 3)).reshape(B, T, -1)   # transpose(1,2).flatten(-2)
    y = jnp.dot(h.astype(jnp.bfloat16), jnp.transpose(Wfc).astype(jnp.bfloat16),
                preferred_element_type=jnp.float32) + bfc[None, None, :]
    return y


if __name__ == "__main__":
    key = jax.random.PRNGKey(0)
    B, T = 4, 16
    input_features, output_features = 128, 64
    C1, C2 = output_features // 16, output_features // 8

    keys = jax.random.split(key, 21)

    def nrm(k, shape, scale):
        return scale * jax.random.normal(k, shape, dtype=jnp.float32)

    x = jax.random.uniform(keys[0], (B, T, input_features), dtype=jnp.float32)

    W1 = nrm(keys[1], (C1, 1, 3, 3), 0.2); b1 = nrm(keys[2], (C1,), 0.1)
    g1 = 1.0 + nrm(keys[3], (C1,), 0.1); be1 = nrm(keys[4], (C1,), 0.1)
    m1 = nrm(keys[5], (C1,), 0.1)
    v1 = jax.random.uniform(keys[6], (C1,), minval=0.5, maxval=1.5, dtype=jnp.float32)

    W2 = nrm(keys[7], (C1, C1, 3, 3), 0.2); b2 = nrm(keys[8], (C1,), 0.1)
    g2 = 1.0 + nrm(keys[9], (C1,), 0.1); be2 = nrm(keys[10], (C1,), 0.1)
    m2 = nrm(keys[11], (C1,), 0.1)
    v2 = jax.random.uniform(keys[12], (C1,), minval=0.5, maxval=1.5, dtype=jnp.float32)

    W3 = nrm(keys[13], (C2, C1, 3, 3), 0.2); b3 = nrm(keys[14], (C2,), 0.1)
    g3 = 1.0 + nrm(keys[15], (C2,), 0.1); be3 = nrm(keys[16], (C2,), 0.1)
    m3 = nrm(keys[17], (C2,), 0.1)
    v3 = jax.random.uniform(keys[18], (C2,), minval=0.5, maxval=1.5, dtype=jnp.float32)

    Wfc = nrm(keys[19], (output_features, C2 * (input_features // 4)), 0.1)
    bfc = nrm(keys[20], (output_features,), 0.1)

    params = (W1, b1, g1, be1, m1, v1,
              W2, b2, g2, be2, m2, v2,
              W3, b3, g3, be3, m3, v3,
              Wfc, bfc)

    kernel_params = prepare_kernel_params(params, input_features)

    out = conv_stack_forward(x, kernel_params, block_b=2)
    out = jax.block_until_ready(out)

    ref = jax.block_until_ready(reference_forward(x, params))

    assert out.shape == (B, T, output_features)
    assert bool(jnp.isfinite(out).all()), "ConvStack output has NaN/Inf"
    max_err = float(jnp.max(jnp.abs(out - ref)))
    assert max_err < 5e-2, f"Pallas ConvStack mismatch vs reference: max abs err {max_err}"

    print("KERNEL_OK")
</pallas_src>

<mosaic_0001>
module attributes {stable_mosaic.version = 11 : i64} {
  func.func @_conv_stack_kernel(%arg0: i32, %arg1: memref<2x16x128xf32, #tpu.memory_space<vmem>>, %arg2: memref<3x128x512xf32, #tpu.memory_space<vmem>>, %arg3: memref<1x512xf32, #tpu.memory_space<vmem>>, %arg4: memref<3x512x256xf32, #tpu.memory_space<vmem>>, %arg5: memref<3x512x256xf32, #tpu.memory_space<vmem>>, %arg6: memref<1x256xf32, #tpu.memory_space<vmem>>, %arg7: memref<3x256x256xf32, #tpu.memory_space<vmem>>, %arg8: memref<3x256x256xf32, #tpu.memory_space<vmem>>, %arg9: memref<1x256xf32, #tpu.memory_space<vmem>>, %arg10: memref<256x64xbf16, #tpu.memory_space<vmem>>, %arg11: memref<1x64xf32, #tpu.memory_space<vmem>>, %arg12: memref<2x16x64xf32, #tpu.memory_space<vmem>>, %arg13: memref<36x128xf32, #tpu.memory_space<vmem>>, %arg14: memref<36x512xf32, #tpu.memory_space<vmem>>, %arg15: memref<36x256xf32, #tpu.memory_space<vmem>>) attributes {dimension_semantics = [#tpu.dimension_semantics<parallel>], iteration_bounds = array<i64: 2>, scalar_prefetch = 0 : i64, scratch_operands = 3 : i64, tpu.core_type = #tpu.core_type<tc>, window_params = [{transform_indices = @transform_0, window_bounds = array<i64: 2, 16, 128>}, {pipeline_mode = #tpu.pipeline_mode<synchronous>, transform_indices = @transform_1, window_bounds = array<i64: 3, 128, 512>}, {pipeline_mode = #tpu.pipeline_mode<synchronous>, transform_indices = @transform_2, window_bounds = array<i64: 1, 512>}, {pipeline_mode = #tpu.pipeline_mode<synchronous>, transform_indices = @transform_3, window_bounds = array<i64: 3, 512, 256>}, {pipeline_mode = #tpu.pipeline_mode<synchronous>, transform_indices = @transform_4, window_bounds = array<i64: 3, 512, 256>}, {pipeline_mode = #tpu.pipeline_mode<synchronous>, transform_indices = @transform_5, window_bounds = array<i64: 1, 256>}, {pipeline_mode = #tpu.pipeline_mode<synchronous>, transform_indices = @transform_6, window_bounds = array<i64: 3, 256, 256>}, {pipeline_mode = #tpu.pipeline_mode<synchronous>, transform_indices = @transform_7, window_bounds = array<i64: 3, 256, 256>}, {pipeline_mode = #tpu.pipeline_mode<synchronous>, transform_indices = @transform_8, window_bounds = array<i64: 1, 256>}, {pipeline_mode = #tpu.pipeline_mode<synchronous>, transform_indices = @transform_9, window_bounds = array<i64: 256, 64>}, {pipeline_mode = #tpu.pipeline_mode<synchronous>, transform_indices = @transform_10, window_bounds = array<i64: 1, 64>}, {transform_indices = @transform_11, window_bounds = array<i64: 2, 16, 64>}]} {
    %c0 = arith.constant 0 : index
    %c0_0 = arith.constant 0 : index
    %c0_1 = arith.constant 0 : index
    %0 = vector.load %arg1[%c0, %c0_0, %c0_1] : memref<2x16x128xf32, #tpu.memory_space<vmem>>, vector<1x16x128xf32>
    %1 = vector.shape_cast %0 : vector<1x16x128xf32> to vector<16x128xf32>
    %c1 = arith.constant 1 : index
    %c0_2 = arith.constant 0 : index
    %2 = vector.load %arg13[%c1, %c0_2] : memref<36x128xf32, #tpu.memory_space<vmem>>, vector<16x128xf32>
    tpu.vector_store %arg13[%c1, %c0_2], %1 {strides = array<i32>} : memref<36x128xf32, #tpu.memory_space<vmem>>, vector<16x128xf32>,
    %c1_3 = arith.constant 1 : index
    %c0_4 = arith.constant 0 : index
    %c0_5 = arith.constant 0 : index
    %3 = vector.load %arg1[%c1_3, %c0_4, %c0_5] : memref<2x16x128xf32, #tpu.memory_space<vmem>>, vector<1x16x128xf32>
    %4 = vector.shape_cast %3 : vector<1x16x128xf32> to vector<16x128xf32>
    %c19 = arith.constant 19 : index
    %c0_6 = arith.constant 0 : index
    %5 = vector.load %arg13[%c19, %c0_6] : memref<36x128xf32, #tpu.memory_space<vmem>>, vector<16x128xf32>
    tpu.vector_store %arg13[%c19, %c0_6], %4 {strides = array<i32>} : memref<36x128xf32, #tpu.memory_space<vmem>>, vector<16x128xf32>,
    %cst = arith.constant 0.000000e+00 : f32
    %6 = vector.broadcast %cst : f32 to vector<1x128xf32>
    %c0_7 = arith.constant 0 : index
    %c0_8 = arith.constant 0 : index
    %7 = vector.load %arg13[%c0_7, %c0_8] : memref<36x128xf32, #tpu.memory_space<vmem>>, vector<1x128xf32>
    tpu.vector_store %arg13[%c0_7, %c0_8], %6 {strides = array<i32>} : memref<36x128xf32, #tpu.memory_space<vmem>>, vector<1x128xf32>,
    %c17 = arith.constant 17 : index
    %c0_9 = arith.constant 0 : index
    %8 = vector.load %arg13[%c17, %c0_9] : memref<36x128xf32, #tpu.memory_space<vmem>>, vector<1x128xf32>
    tpu.vector_store %arg13[%c17, %c0_9], %6 {strides = array<i32>} : memref<36x128xf32, #tpu.memory_space<vmem>>, vector<1x128xf32>,
    %c18 = arith.constant 18 : index
    %c0_10 = arith.constant 0 : index
    %9 = vector.load %arg13[%c18, %c0_10] : memref<36x128xf32, #tpu.memory_space<vmem>>, vector<1x128xf32>
    tpu.vector_store %arg13[%c18, %c0_10], %6 {strides = array<i32>} : memref<36x128xf32, #tpu.memory_space<vmem>>, vector<1x128xf32>,
    %c35 = arith.constant 35 : index
    %c0_11 = arith.constant 0 : index
    %10 = vector.load %arg13[%c35, %c0_11] : memref<36x128xf32, #tpu.memory_space<vmem>>, vector<1x128xf32>
    tpu.vector_store %arg13[%c35, %c0_11], %6 {strides = array<i32>} : memref<36x128xf32, #tpu.memory_space<vmem>>, vector<1x128xf32>,
    %c0_12 = arith.constant 0 : index
    %c0_13 = arith.constant 0 : index
    %11 = vector.load %arg13[%c0_12, %c0_13] : memref<36x128xf32, #tpu.memory_space<vmem>>, vector<34x128xf32>
    %c0_14 = arith.constant 0 : index
    %c0_15 = arith.constant 0 : index
    %c0_16 = arith.constant 0 : index
    %12 = vector.load %arg2[%c0_14, %c0_15, %c0_16] : memref<3x128x512xf32, #tpu.memory_space<vmem>>, vector<1x128x512xf32>
    %13 = vector.shape_cast %12 : vector<1x128x512xf32> to vector<128x512xf32>
    %cst_17 = arith.constant dense<0.000000e+00> : vector<34x512xf32>
    %14 = tpu.matmul %11, %13, %cst_17 {dimension_numbers = #tpu.dot_dimension_numbers<[1], [0], [0], [1], [0, 0, 1, 1], [], []>} : vector<34x128xf32>, vector<128x512xf32>, vector<34x512xf32> -> vector<34x512xf32>
    %c1_18 = arith.constant 1 : index
    %c0_19 = arith.constant 0 : index
    %15 = vector.load %arg13[%c1_18, %c0_19] : memref<36x128xf32, #tpu.memory_space<vmem>>, vector<34x128xf32>
    %c1_20 = arith.constant 1 : index
    %c0_21 = arith.constant 0 : index
    %c0_22 = arith.constant 0 : index
    %16 = vector.load %arg2[%c1_20, %c0_21, %c0_22] : memref<3x128x512xf32, #tpu.memory_space<vmem>>, vector<1x128x512xf32>
    %17 = vector.shape_cast %16 : vector<1x128x512xf32> to vector<128x512xf32>
    %cst_23 = arith.constant dense<0.000000e+00> : vector<34x512xf32>
    %18 = tpu.matmul %15, %17, %cst_23 {dimension_numbers = #tpu.dot_dimension_numbers<[1], [0], [0], [1], [0, 0, 1, 1], [], []>} : vector<34x128xf32>, vector<128x512xf32>, vector<34x512xf32> -> vector<34x512xf32>
    %19 = arith.addf %14, %18 : vector<34x512xf32>
    %c2 = arith.constant 2 : index
    %c0_24 = arith.constant 0 : index
    %20 = vector.load %arg13[%c2, %c0_24] : memref<36x128xf32, #tpu.memory_space<vmem>>, vector<34x128xf32>
    %c2_25 = arith.constant 2 : index
    %c0_26 = arith.constant 0 : index
    %c0_27 = arith.constant 0 : index
    %21 = vector.load %arg2[%c2_25, %c0_26, %c0_27] : memref<3x128x512xf32, #tpu.memory_space<vmem>>, vector<1x128x512xf32>
    %22 = vector.shape_cast %21 : vector<1x128x512xf32> to vector<128x512xf32>
    %cst_28 = arith.constant dense<0.000000e+00> : vector<34x512xf32>
    %23 = tpu.matmul %20, %22, %cst_28 {dimension_numbers = #tpu.dot_dimension_numbers<[1], [0], [0], [1], [0, 0, 1, 1], [], []>} : vector<34x128xf32>, vector<128x512xf32>, vector<34x512xf32> -> vector<34x512xf32>
    %24 = arith.addf %19, %23 : vector<34x512xf32>
    %c0_29 = arith.constant 0 : index
    %c0_30 = arith.constant 0 : index
    %25 = vector.load %arg3[%c0_29, %c0_30] : memref<1x512xf32, #tpu.memory_space<vmem>>, vector<1x512xf32>
    %26 = vector.broadcast %25 : vector<1x512xf32> to vector<34x512xf32>
    %27 = arith.addf %24, %26 : vector<34x512xf32>
    %cst_31 = arith.constant 0.000000e+00 : f32
    %28 = vector.broadcast %cst_31 : f32 to vector<34x512xf32>
    %29 = arith.maximumf %27, %28 : vector<34x512xf32>
    %c1_32 = arith.constant 1 : index
    %c0_33 = arith.constant 0 : index
    %30 = vector.load %arg14[%c1_32, %c0_33] : memref<36x512xf32, #tpu.memory_space<vmem>>, vector<34x512xf32>
    tpu.vector_store %arg14[%c1_32, %c0_33], %29 {strides = array<i32>} : memref<36x512xf32, #tpu.memory_space<vmem>>, vector<34x512xf32>,
    %cst_34 = arith.constant 0.000000e+00 : f32
    %31 = vector.broadcast %cst_34 : f32 to vector<1x512xf32>
    %c0_35 = arith.constant 0 : index
    %c0_36 = arith.constant 0 : index
    %32 = vector.load %arg14[%c0_35, %c0_36] : memref<36x512xf32, #tpu.memory_space<vmem>>, vector<1x512xf32>
    tpu.vector_store %arg14[%c0_35, %c0_36], %31 {strides = array<i32>} : memref<36x512xf32, #tpu.memory_space<vmem>>, vector<1x512xf32>,
    %c17_37 = arith.constant 17 : index
    %c0_38 = arith.constant 0 : index
    %33 = vector.load %arg14[%c17_37, %c0_38] : memref<36x512xf32, #tpu.memory_space<vmem>>, vector<1x512xf32>
    tpu.vector_store %arg14[%c17_37, %c0_38], %31 {strides = array<i32>} : memref<36x512xf32, #tpu.memory_space<vmem>>, vector<1x512xf32>,
    %c18_39 = arith.constant 18 : index
    %c0_40 = arith.constant 0 : index
    %34 = vector.load %arg14[%c18_39, %c0_40] : memref<36x512xf32, #tpu.memory_space<vmem>>, vector<1x512xf32>
    tpu.vector_store %arg14[%c18_39, %c0_40], %31 {strides = array<i32>} : memref<36x512xf32, #tpu.memory_space<vmem>>, vector<1x512xf32>,
    %c35_41 = arith.constant 35 : index
    %c0_42 = arith.constant 0 : index
    %35 = vector.load %arg14[%c35_41, %c0_42] : memref<36x512xf32, #tpu.memory_space<vmem>>, vector<1x512xf32>
    tpu.vector_store %arg14[%c35_41, %c0_42], %31 {strides = array<i32>} : memref<36x512xf32, #tpu.memory_space<vmem>>, vector<1x512xf32>,
    %c0_43 = arith.constant 0 : index
    %c0_44 = arith.constant 0 : index
    %36 = vector.load %arg14[%c0_43, %c0_44] : memref<36x512xf32, #tpu.memory_space<vmem>>, vector<34x512xf32>
    %c0_45 = arith.constant 0 : index
    %c0_46 = arith.constant 0 : index
    %c0_47 = arith.constant 0 : index
    %37 = vector.load %arg4[%c0_45, %c0_46, %c0_47] : memref<3x512x256xf32, #tpu.memory_space<vmem>>, vector<1x512x256xf32>
    %38 = vector.shape_cast %37 : vector<1x512x256xf32> to vector<512x256xf32>
    %cst_48 = arith.constant dense<0.000000e+00> : vector<34x256xf32>
    %39 = tpu.matmul %36, %38, %cst_48 {dimension_numbers = #tpu.dot_dimension_numbers<[1], [0], [0], [1], [0, 0, 1, 1], [], []>} : vector<34x512xf32>, vector<512x256xf32>, vector<34x256xf32> -> vector<34x256xf32>
    %c1_49 = arith.constant 1 : index
    %c0_50 = arith.constant 0 : index
    %40 = vector.load %arg14[%c1_49, %c0_50] : memref<36x512xf32, #tpu.memory_space<vmem>>, vector<34x512xf32>
    %c1_51 = arith.constant 1 : index
    %c0_52 = arith.constant 0 : index
    %c0_53 = arith.constant 0 : index
    %41 = vector.load %arg4[%c1_51, %c0_52, %c0_53] : memref<3x512x256xf32, #tpu.memory_space<vmem>>, vector<1x512x256xf32>
    %42 = vector.shape_cast %41 : vector<1x512x256xf32> to vector<512x256xf32>
    %cst_54 = arith.constant dense<0.000000e+00> : vector<34x256xf32>
    %43 = tpu.matmul %40, %42, %cst_54 {dimension_numbers = #tpu.dot_dimension_numbers<[1], [0], [0], [1], [0, 0, 1, 1], [], []>} : vector<34x512xf32>, vector<512x256xf32>, vector<34x256xf32> -> vector<34x256xf32>
    %44 = arith.addf %39, %43 : vector<34x256xf32>
    %c2_55 = arith.constant 2 : index
    %c0_56 = arith.constant 0 : index
    %45 = vector.load %arg14[%c2_55, %c0_56] : memref<36x512xf32, #tpu.memory_space<vmem>>, vector<34x512xf32>
    %c2_57 = arith.constant 2 : index
    %c0_58 = arith.constant 0 : index
    %c0_59 = arith.constant 0 : index
    %46 = vector.load %arg4[%c2_57, %c0_58, %c0_59] : memref<3x512x256xf32, #tpu.memory_space<vmem>>, vector<1x512x256xf32>
    %47 = vector.shape_cast %46 : vector<1x512x256xf32> to vector<512x256xf32>
    %cst_60 = arith.constant dense<0.000000e+00> : vector<34x256xf32>
    %48 = tpu.matmul %45, %47, %cst_60 {dimension_numbers = #tpu.dot_dimension_numbers<[1], [0], [0], [1], [0, 0, 1, 1], [], []>} : vector<34x512xf32>, vector<512x256xf32>, vector<34x256xf32> -> vector<34x256xf32>
    %49 = arith.addf %44, %48 : vector<34x256xf32>
    %c0_61 = arith.constant 0 : index
    %c0_62 = arith.constant 0 : index
    %50 = vector.load %arg14[%c0_61, %c0_62] : memref<36x512xf32, #tpu.memory_space<vmem>>, vector<34x512xf32>
    %c0_63 = arith.constant 0 : index
    %c0_64 = arith.constant 0 : index
    %c0_65 = arith.constant 0 : index
    %51 = vector.load %arg5[%c0_63, %c0_64, %c0_65] : memref<3x512x256xf32, #tpu.memory_space<vmem>>, vector<1x512x256xf32>
    %52 = vector.shape_cast %51 : vector<1x512x256xf32> to vector<512x256xf32>
    %cst_66 = arith.constant dense<0.000000e+00> : vector<34x256xf32>
    %53 = tpu.matmul %50, %52, %cst_66 {dimension_numbers = #tpu.dot_dimension_numbers<[1], [0], [0], [1], [0, 0, 1, 1], [], []>} : vector<34x512xf32>, vector<512x256xf32>, vector<34x256xf32> -> vector<34x256xf32>
    %c1_67 = arith.constant 1 : index
    %c0_68 = arith.constant 0 : index
    %54 = vector.load %arg14[%c1_67, %c0_68] : memref<36x512xf32, #tpu.memory_space<vmem>>, vector<34x512xf32>
    %c1_69 = arith.constant 1 : index
    %c0_70 = arith.constant 0 : index
    %c0_71 = arith.constant 0 : index
    %55 = vector.load %arg5[%c1_69, %c0_70, %c0_71] : memref<3x512x256xf32, #tpu.memory_space<vmem>>, vector<1x512x256xf32>
    %56 = vector.shape_cast %55 : vector<1x512x256xf32> to vector<512x256xf32>
    %cst_72 = arith.constant dense<0.000000e+00> : vector<34x256xf32>
    %57 = tpu.matmul %54, %56, %cst_72 {dimension_numbers = #tpu.dot_dimension_numbers<[1], [0], [0], [1], [0, 0, 1, 1], [], []>} : vector<34x512xf32>, vector<512x256xf32>, vector<34x256xf32> -> vector<34x256xf32>
    %58 = arith.addf %53, %57 : vector<34x256xf32>
    %c2_73 = arith.constant 2 : index
    %c0_74 = arith.constant 0 : index
    %59 = vector.load %arg14[%c2_73, %c0_74] : memref<36x512xf32, #tpu.memory_space<vmem>>, vector<34x512xf32>
    %c2_75 = arith.constant 2 : index
    %c0_76 = arith.constant 0 : index
    %c0_77 = arith.constant 0 : index
    %60 = vector.load %arg5[%c2_75, %c0_76, %c0_77] : memref<3x512x256xf32, #tpu.memory_space<vmem>>, vector<1x512x256xf32>
    %61 = vector.shape_cast %60 : vector<1x512x256xf32> to vector<512x256xf32>
    %cst_78 = arith.constant dense<0.000000e+00> : vector<34x256xf32>
    %62 = tpu.matmul %59, %61, %cst_78 {dimension_numbers = #tpu.dot_dimension_numbers<[1], [0], [0], [1], [0, 0, 1, 1], [], []>} : vector<34x512xf32>, vector<512x256xf32>, vector<34x256xf32> -> vector<34x256xf32>
    %63 = arith.addf %58, %62 : vector<34x256xf32>
    %64 = arith.maximumf %49, %63 : vector<34x256xf32>
    %c0_79 = arith.constant 0 : index
    %c0_80 = arith.constant 0 : index
    %65 = vector.load %arg6[%c0_79, %c0_80] : memref<1x256xf32, #tpu.memory_space<vmem>>, vector<1x256xf32>
    %66 = vector.broadcast %65 : vector<1x256xf32> to vector<34x256xf32>
    %67 = arith.addf %64, %66 : vector<34x256xf32>
    %cst_81 = arith.constant 0.000000e+00 : f32
    %68 = vector.broadcast %cst_81 : f32 to vector<34x256xf32>
    %69 = arith.maximumf %67, %68 : vector<34x256xf32>
    %c1_82 = arith.constant 1 : index
    %c0_83 = arith.constant 0 : index
    %70 = vector.load %arg15[%c1_82, %c0_83] : memref<36x256xf32, #tpu.memory_space<vmem>>, vector<34x256xf32>
    tpu.vector_store %arg15[%c1_82, %c0_83], %69 {strides = array<i32>} : memref<36x256xf32, #tpu.memory_space<vmem>>, vector<34x256xf32>,
    %cst_84 = arith.constant 0.000000e+00 : f32
    %71 = vector.broadcast %cst_84 : f32 to vector<1x256xf32>
    %c0_85 = arith.constant 0 : index
    %c0_86 = arith.constant 0 : index
    %72 = vector.load %arg15[%c0_85, %c0_86] : memref<36x256xf32, #tpu.memory_space<vmem>>, vector<1x256xf32>
    tpu.vector_store %arg15[%c0_85, %c0_86], %71 {strides = array<i32>} : memref<36x256xf32, #tpu.memory_space<vmem>>, vector<1x256xf32>,
    %c17_87 = arith.constant 17 : index
    %c0_88 = arith.constant 0 : index
    %73 = vector.load %arg15[%c17_87, %c0_88] : memref<36x256xf32, #tpu.memory_space<vmem>>, vector<1x256xf32>
    tpu.vector_store %arg15[%c17_87, %c0_88], %71 {strides = array<i32>} : memref<36x256xf32, #tpu.memory_space<vmem>>, vector<1x256xf32>,
    %c18_89 = arith.constant 18 : index
    %c0_90 = arith.constant 0 : index
    %74 = vector.load %arg15[%c18_89, %c0_90] : memref<36x256xf32, #tpu.memory_space<vmem>>, vector<1x256xf32>
    tpu.vector_store %arg15[%c18_89, %c0_90], %71 {strides = array<i32>} : memref<36x256xf32, #tpu.memory_space<vmem>>, vector<1x256xf32>,
    %c35_91 = arith.constant 35 : index
    %c0_92 = arith.constant 0 : index
    %75 = vector.load %arg15[%c35_91, %c0_92] : memref<36x256xf32, #tpu.memory_space<vmem>>, vector<1x256xf32>
    tpu.vector_store %arg15[%c35_91, %c0_92], %71 {strides = array<i32>} : memref<36x256xf32, #tpu.memory_space<vmem>>, vector<1x256xf32>,
    %c0_93 = arith.constant 0 : index
    %c0_94 = arith.constant 0 : index
    %76 = vector.load %arg15[%c0_93, %c0_94] : memref<36x256xf32, #tpu.memory_space<vmem>>, vector<34x256xf32>
    %c0_95 = arith.constant 0 : index
    %c0_96 = arith.constant 0 : index
    %c0_97 = arith.constant 0 : index
    %77 = vector.load %arg7[%c0_95, %c0_96, %c0_97] : memref<3x256x256xf32, #tpu.memory_space<vmem>>, vector<1x256x256xf32>
    %78 = vector.shape_cast %77 : vector<1x256x256xf32> to vector<256x256xf32>
    %cst_98 = arith.constant dense<0.000000e+00> : vector<34x256xf32>
    %79 = tpu.matmul %76, %78, %cst_98 {dimension_numbers = #tpu.dot_dimension_numbers<[1], [0], [0], [1], [0, 0, 1, 1], [], []>} : vector<34x256xf32>, vector<256x256xf32>, vector<34x256xf32> -> vector<34x256xf32>
    %c1_99 = arith.constant 1 : index
    %c0_100 = arith.constant 0 : index
    %80 = vector.load %arg15[%c1_99, %c0_100] : memref<36x256xf32, #tpu.memory_space<vmem>>, vector<34x256xf32>
    %c1_101 = arith.constant 1 : index
    %c0_102 = arith.constant 0 : index
    %c0_103 = arith.constant 0 : index
    %81 = vector.load %arg7[%c1_101, %c0_102, %c0_103] : memref<3x256x256xf32, #tpu.memory_space<vmem>>, vector<1x256x256xf32>
    %82 = vector.shape_cast %81 : vector<1x256x256xf32> to vector<256x256xf32>
    %cst_104 = arith.constant dense<0.000000e+00> : vector<34x256xf32>
    %83 = tpu.matmul %80, %82, %cst_104 {dimension_numbers = #tpu.dot_dimension_numbers<[1], [0], [0], [1], [0, 0, 1, 1], [], []>} : vector<34x256xf32>, vector<256x256xf32>, vector<34x256xf32> -> vector<34x256xf32>
    %84 = arith.addf %79, %83 : vector<34x256xf32>
    %c2_105 = arith.constant 2 : index
    %c0_106 = arith.constant 0 : index
    %85 = vector.load %arg15[%c2_105, %c0_106] : memref<36x256xf32, #tpu.memory_space<vmem>>, vector<34x256xf32>
    %c2_107 = arith.constant 2 : index
    %c0_108 = arith.constant 0 : index
    %c0_109 = arith.constant 0 : index
    %86 = vector.load %arg7[%c2_107, %c0_108, %c0_109] : memref<3x256x256xf32, #tpu.memory_space<vmem>>, vector<1x256x256xf32>
    %87 = vector.shape_cast %86 : vector<1x256x256xf32> to vector<256x256xf32>
    %cst_110 = arith.constant dense<0.000000e+00> : vector<34x256xf32>
    %88 = tpu.matmul %85, %87, %cst_110 {dimension_numbers = #tpu.dot_dimension_numbers<[1], [0], [0], [1], [0, 0, 1, 1], [], []>} : vector<34x256xf32>, vector<256x256xf32>, vector<34x256xf32> -> vector<34x256xf32>
    %89 = arith.addf %84, %88 : vector<34x256xf32>
    %c0_111 = arith.constant 0 : index
    %c0_112 = arith.constant 0 : index
    %90 = vector.load %arg15[%c0_111, %c0_112] : memref<36x256xf32, #tpu.memory_space<vmem>>, vector<34x256xf32>
    %c0_113 = arith.constant 0 : index
    %c0_114 = arith.constant 0 : index
    %c0_115 = arith.constant 0 : index
    %91 = vector.load %arg8[%c0_113, %c0_114, %c0_115] : memref<3x256x256xf32, #tpu.memory_space<vmem>>, vector<1x256x256xf32>
    %92 = vector.shape_cast %91 : vector<1x256x256xf32> to vector<256x256xf32>
    %cst_116 = arith.constant dense<0.000000e+00> : vector<34x256xf32>
    %93 = tpu.matmul %90, %92, %cst_116 {dimension_numbers = #tpu.dot_dimension_numbers<[1], [0], [0], [1], [0, 0, 1, 1], [], []>} : vector<34x256xf32>, vector<256x256xf32>, vector<34x256xf32> -> vector<34x256xf32>
    %c1_117 = arith.constant 1 : index
    %c0_118 = arith.constant 0 : index
    %94 = vector.load %arg15[%c1_117, %c0_118] : memref<36x256xf32, #tpu.memory_space<vmem>>, vector<34x256xf32>
    %c1_119 = arith.constant 1 : index
    %c0_120 = arith.constant 0 : index
    %c0_121 = arith.constant 0 : index
    %95 = vector.load %arg8[%c1_119, %c0_120, %c0_121] : memref<3x256x256xf32, #tpu.memory_space<vmem>>, vector<1x256x256xf32>
    %96 = vector.shape_cast %95 : vector<1x256x256xf32> to vector<256x256xf32>
    %cst_122 = arith.constant dense<0.000000e+00> : vector<34x256xf32>
    %97 = tpu.matmul %94, %96, %cst_122 {dimension_numbers = #tpu.dot_dimension_numbers<[1], [0], [0], [1], [0, 0, 1, 1], [], []>} : vector<34x256xf32>, vector<256x256xf32>, vector<34x256xf32> -> vector<34x256xf32>
    %98 = arith.addf %93, %97 : vector<34x256xf32>
    %c2_123 = arith.constant 2 : index
    %c0_124 = arith.constant 0 : index
    %99 = vector.load %arg15[%c2_123, %c0_124] : memref<36x256xf32, #tpu.memory_space<vmem>>, vector<34x256xf32>
    %c2_125 = arith.constant 2 : index
    %c0_126 = arith.constant 0 : index
    %c0_127 = arith.constant 0 : index
    %100 = vector.load %arg8[%c2_125, %c0_126, %c0_127] : memref<3x256x256xf32, #tpu.memory_space<vmem>>, vector<1x256x256xf32>
    %101 = vector.shape_cast %100 : vector<1x256x256xf32> to vector<256x256xf32>
    %cst_128 = arith.constant dense<0.000000e+00> : vector<34x256xf32>
    %102 = tpu.matmul %99, %101, %cst_128 {dimension_numbers = #tpu.dot_dimension_numbers<[1], [0], [0], [1], [0, 0, 1, 1], [], []>} : vector<34x256xf32>, vector<256x256xf32>, vector<34x256xf32> -> vector<34x256xf32>
    %103 = arith.addf %98, %102 : vector<34x256xf32>
    %104 = arith.maximumf %89, %103 : vector<34x256xf32>
    %c0_129 = arith.constant 0 : index
    %c0_130 = arith.constant 0 : index
    %105 = vector.load %arg9[%c0_129, %c0_130] : memref<1x256xf32, #tpu.memory_space<vmem>>, vector<1x256xf32>
    %106 = vector.broadcast %105 : vector<1x256xf32> to vector<34x256xf32>
    %107 = arith.addf %104, %106 : vector<34x256xf32>
    %cst_131 = arith.constant 0.000000e+00 : f32
    %108 = vector.broadcast %cst_131 : f32 to vector<34x256xf32>
    %109 = arith.maximumf %107, %108 : vector<34x256xf32>
    %110 = arith.truncf %109 : vector<34x256xf32> to vector<34x256xbf16>
    %c0_132 = arith.constant 0 : index
    %c0_133 = arith.constant 0 : index
    %111 = vector.load %arg10[%c0_132, %c0_133] : memref<256x64xbf16, #tpu.memory_space<vmem>>, vector<256x64xbf16>
    %cst_134 = arith.constant dense<0.000000e+00> : vector<34x64xf32>
    %112 = tpu.matmul %110, %111, %cst_134 {dimension_numbers = #tpu.dot_dimension_numbers<[1], [0], [0], [1], [0, 0, 1, 1], [], []>} : vector<34x256xbf16>, vector<256x64xbf16>, vector<34x64xf32> -> vector<34x64xf32>
    %c0_135 = arith.constant 0 : index
    %c0_136 = arith.constant 0 : index
    %113 = vector.load %arg11[%c0_135, %c0_136] : memref<1x64xf32, #tpu.memory_space<vmem>>, vector<1x64xf32>
    %114 = vector.broadcast %113 : vector<1x64xf32> to vector<34x64xf32>
    %115 = arith.addf %112, %114 : vector<34x64xf32>
    %116 = vector.extract_strided_slice %115 {offsets = [0, 0], sizes = [16, 64], strides = [1, 1]} : vector<34x64xf32> to vector<16x64xf32>
    %c0_137 = arith.constant 0 : index
    %c0_138 = arith.constant 0 : index
    %c0_139 = arith.constant 0 : index
    %117 = vector.load %arg12[%c0_137, %c0_138, %c0_139] : memref<2x16x64xf32, #tpu.memory_space<vmem>>, vector<1x16x64xf32>
    %118 = vector.shape_cast %117 : vector<1x16x64xf32> to vector<16x64xf32>
    %119 = vector.shape_cast %116 : vector<16x64xf32> to vector<1x16x64xf32>
    tpu.vector_store %arg12[%c0_137, %c0_138, %c0_139], %119 {strides = array<i32>} : memref<2x16x64xf32, #tpu.memory_space<vmem>>, vector<1x16x64xf32>,
    %120 = vector.extract_strided_slice %115 {offsets = [18, 0], sizes = [16, 64], strides = [1, 1]} : vector<34x64xf32> to vector<16x64xf32>
    %c1_140 = arith.constant 1 : index
    %c0_141 = arith.constant 0 : index
    %c0_142 = arith.constant 0 : index
    %121 = vector.load %arg12[%c1_140, %c0_141, %c0_142] : memref<2x16x64xf32, #tpu.memory_space<vmem>>, vector<1x16x64xf32>
    %122 = vector.shape_cast %121 : vector<1x16x64xf32> to vector<16x64xf32>
    %123 = vector.shape_cast %120 : vector<16x64xf32> to vector<1x16x64xf32>
    tpu.vector_store %arg12[%c1_140, %c0_141, %c0_142], %123 {strides = array<i32>} : memref<2x16x64xf32, #tpu.memory_space<vmem>>, vector<1x16x64xf32>,
    return
  }
  func.func @transform_0(%arg0: i32) -> (i32, i32, i32) {
    %c0_i32 = arith.constant 0 : i32
    %c0_i32_0 = arith.constant 0 : i32
    %c0_i32_1 = arith.constant 0 : i32
    return %arg0, %c0_i32, %c0_i32_0 : i32, i32, i32
  }
  func.func @transform_1(%arg0: i32) -> (i32, i32, i32) {
    %c0_i32 = arith.constant 0 : i32
    %c0_i32_0 = arith.constant 0 : i32
    %c0_i32_1 = arith.constant 0 : i32
    %c0_i32_2 = arith.constant 0 : i32
    return %c0_i32, %c0_i32_0, %c0_i32_1 : i32, i32, i32
  }
  func.func @transform_2(%arg0: i32) -> (i32, i32) {
    %c0_i32 = arith.constant 0 : i32
    %c0_i32_0 = arith.constant 0 : i32
    %c0_i32_1 = arith.constant 0 : i32
    return %c0_i32, %c0_i32_0 : i32, i32
  }
  func.func @transform_3(%arg0: i32) -> (i32, i32, i32) {
    %c0_i32 = arith.constant 0 : i32
    %c0_i32_0 = arith.constant 0 : i32
    %c0_i32_1 = arith.constant 0 : i32
    %c0_i32_2 = arith.constant 0 : i32
    return %c0_i32, %c0_i32_0, %c0_i32_1 : i32, i32, i32
  }
  func.func @transform_4(%arg0: i32) -> (i32, i32, i32) {
    %c0_i32 = arith.constant 0 : i32
    %c0_i32_0 = arith.constant 0 : i32
    %c0_i32_1 = arith.constant 0 : i32
    %c0_i32_2 = arith.constant 0 : i32
    return %c0_i32, %c0_i32_0, %c0_i32_1 : i32, i32, i32
  }
  func.func @transform_5(%arg0: i32) -> (i32, i32) {
    %c0_i32 = arith.constant 0 : i32
    %c0_i32_0 = arith.constant 0 : i32
    %c0_i32_1 = arith.constant 0 : i32
    return %c0_i32, %c0_i32_0 : i32, i32
  }
  func.func @transform_6(%arg0: i32) -> (i32, i32, i32) {
    %c0_i32 = arith.constant 0 : i32
    %c0_i32_0 = arith.constant 0 : i32
    %c0_i32_1 = arith.constant 0 : i32
    %c0_i32_2 = arith.constant 0 : i32
    return %c0_i32, %c0_i32_0, %c0_i32_1 : i32, i32, i32
  }
  func.func @transform_7(%arg0: i32) -> (i32, i32, i32) {
    %c0_i32 = arith.constant 0 : i32
    %c0_i32_0 = arith.constant 0 : i32
    %c0_i32_1 = arith.constant 0 : i32
    %c0_i32_2 = arith.constant 0 : i32
    return %c0_i32, %c0_i32_0, %c0_i32_1 : i32, i32, i32
  }
  func.func @transform_8(%arg0: i32) -> (i32, i32) {
    %c0_i32 = arith.constant 0 : i32
    %c0_i32_0 = arith.constant 0 : i32
    %c0_i32_1 = arith.constant 0 : i32
    return %c0_i32, %c0_i32_0 : i32, i32
  }
  func.func @transform_9(%arg0: i32) -> (i32, i32) {
    %c0_i32 = arith.constant 0 : i32
    %c0_i32_0 = arith.constant 0 : i32
    %c0_i32_1 = arith.constant 0 : i32
    return %c0_i32, %c0_i32_0 : i32, i32
  }
  func.func @transform_10(%arg0: i32) -> (i32, i32) {
    %c0_i32 = arith.constant 0 : i32
    %c0_i32_0 = arith.constant 0 : i32
    %c0_i32_1 = arith.constant 0 : i32
    return %c0_i32, %c0_i32_0 : i32, i32
  }
  func.func @transform_11(%arg0: i32) -> (i32, i32, i32) {
    %c0_i32 = arith.constant 0 : i32
    %c0_i32_0 = arith.constant 0 : i32
    %c0_i32_1 = arith.constant 0 : i32
    return %arg0, %c0_i32, %c0_i32_0 : i32, i32, i32
  }
}

</mosaic_0001>

<llo_original>
// kernel: tpu_custom_call.1
$region0: #{tpu_custom_call.1}
  #allocation0 [shape = 'u32[]', space=smem, size = 0x4, offset = 0x4, fixed_abs, tag = 'smem constant byte address 0x4 - core index']
  #allocation1 [shape = 'u32[144,128]{1,0:T(1,128)}', space=vmem, size = 0x12000, scoped, tag = 'internal scratch']
  #allocation2 [shape = 'f32[36,128]{1,0:T(8,128)}', space=vmem, size = 0x5000, scoped, tag = 'scratch operand']
  #allocation3 [shape = 'f32[36,512]{1,0:T(8,128)}', space=vmem, size = 0x14000, scoped, tag = 'scratch operand']
  #allocation4 [shape = 'f32[36,256]{1,0:T(8,128)}', space=vmem, size = 0xa000, scoped, tag = 'scratch operand']
  %s0 = inlined_call_operand.hbm [shape: f32[4,16,128], index: 0, kind: input, shape index: {}]
  %s1 = inlined_call_operand.hbm [shape: f32[3,128,512], index: 1, kind: input, shape index: {}]
  %s2 = inlined_call_operand.hbm [shape: f32[1,512], index: 2, kind: input, shape index: {}]
  %s3 = inlined_call_operand.hbm [shape: f32[3,512,256], index: 3, kind: input, shape index: {}]
  %s4 = inlined_call_operand.hbm [shape: f32[3,512,256], index: 4, kind: input, shape index: {}]
  %s5 = inlined_call_operand.hbm [shape: f32[1,256], index: 5, kind: input, shape index: {}]
  %s6 = inlined_call_operand.hbm [shape: f32[3,256,256], index: 6, kind: input, shape index: {}]
  %s7 = inlined_call_operand.hbm [shape: f32[3,256,256], index: 7, kind: input, shape index: {}]
  %s8 = inlined_call_operand.hbm [shape: f32[1,256], index: 8, kind: input, shape index: {}]
  %s9 = inlined_call_operand.vmem [shape: bf16[256,64], index: 9, kind: input, shape index: {}]
  %s10 = inlined_call_operand.hbm [shape: f32[1,64], index: 10, kind: input, shape index: {}]
  %s11 = inlined_call_operand.hbm [shape: f32[4,16,64], index: 11, kind: output, shape index: {}]
  %s12 = sld [smem:[#allocation0]]
  $region117: #{tpu_custom_call.1} parent=0
    _
  %s14 = ssub.s32 1, %s12
  %s15 = scalar_select 0, %s14, %s12
  $region1: #{tpu_custom_call.1} parent=0
    #allocation5 [shape = 'u8[32768]{0}', space=vmem, size = 0x8000, scoped, tag = 'input window, operand 0']
    #allocation6 [shape = 's32[2]{0}', space=sflag, size = 0x8, scoped, tag = 'scoped memory for tpu_custom_call.1']
    #allocation7 [shape = 's32[2]{0}', space=sflag, size = 0x8, scoped, tag = 'scoped memory for tpu_custom_call.1']
    #allocation8 [shape = 'u8[786432]{0}', space=vmem, size = 0xc0000, scoped, tag = 'input window, operand 1, single buffered']
    #allocation9 [shape = 's32[1]{0}', space=sflag, size = 0x4, scoped, tag = 'scoped memory for tpu_custom_call.1']
    #allocation10 [shape = 'u8[2048]{0}', space=vmem, size = 0x800, scoped, tag = 'input window, operand 2, single buffered']
    #allocation11 [shape = 'u8[1572864]{0}', space=vmem, size = 0x180000, scoped, tag = 'input window, operand 3, single buffered']
    #allocation12 [shape = 's32[1]{0}', space=sflag, size = 0x4, scoped, tag = 'scoped memory for tpu_custom_call.1']
    #allocation13 [shape = 'u8[1572864]{0}', space=vmem, size = 0x180000, scoped, tag = 'input window, operand 4, single buffered']
    #allocation14 [shape = 'u8[1024]{0}', space=vmem, size = 0x400, scoped, tag = 'input window, operand 5, single buffered']
    #allocation15 [shape = 's32[1]{0}', space=sflag, size = 0x4, scoped, tag = 'scoped memory for tpu_custom_call.1']
    #allocation16 [shape = 'u8[786432]{0}', space=vmem, size = 0xc0000, scoped, tag = 'input window, operand 6, single buffered']
    #allocation17 [shape = 'u8[786432]{0}', space=vmem, size = 0xc0000, scoped, tag = 'input window, operand 7, single buffered']
    #allocation18 [shape = 's32[1]{0}', space=sflag, size = 0x4, scoped, tag = 'scoped memory for tpu_custom_call.1']
    #allocation19 [shape = 'u8[1024]{0}', space=vmem, size = 0x400, scoped, tag = 'input window, operand 8, single buffered']
    #allocation20 [shape = 'u8[512]{0}', space=vmem, size = 0x400, scoped, tag = 'input window, operand 10, single buffered']
    #allocation21 [shape = 's32[1]{0}', space=sflag, size = 0x4, scoped, tag = 'scoped memory for tpu_custom_call.1']
    #allocation22 [shape = 'u8[32768]{0}', space=vmem, size = 0x8000, scoped, tag = 'output window, operand 0']
    %16 = vsyncpa [#allocation6], 0
    %s17 = scalar_lea.sflag [#allocation6], 1
    %18 = vsyncpa %s17, 0
    %19 = vsyncpa [#allocation9], 0
    %20 = vsyncpa [#allocation12], 0
    %21 = vsyncpa [#allocation15], 0
    %22 = vsyncpa [#allocation18], 0
    %23 = vsyncpa [#allocation21], 0
    %24 = vsyncpa [#allocation7], 0
    %s25 = scalar_lea.sflag [#allocation7], 1
    %26 = vsyncpa %s25, 0
    loop: start=0, step=1, limit=4
    $region2: #{tpu_custom_call.1} parent=1 // loop_pre_header
      _
    $region3: #{tpu_custom_call.1} parent=1 // loop_header
      %s28 = sphi 0, %s32
      %p29 = scmp.ge.s32.totalorder %s28, 4
      %s38 = sphi 0, %s40
      %s41 = sphi 0, %s38
      %s42 = sphi 0, %s41
      %s58 = sphi 0, %s42
      %s62 = sphi 0, %s62
      %s64 = sphi 0, %s62
      %s65 = sphi 0, %s64
      %s79 = sphi 0, %s65
      %s83 = sphi 0, %s83
      %s85 = sphi 0, %s83
      %s86 = sphi 0, %s85
      %s100 = sphi 0, %s86
      %s104 = sphi 0, %s104
      %s106 = sphi 0, %s104
      %s107 = sphi 0, %s106
      %s121 = sphi 0, %s107
      %s125 = sphi 0, %s125
      %s127 = sphi 0, %s125
      %s128 = sphi 0, %s127
      %s142 = sphi 0, %s128
      %s146 = sphi 0, %s146
      %s148 = sphi 0, %s146
      %s149 = sphi 0, %s148
      %s163 = sphi 0, %s149
      %s167 = sphi 0, %s167
      %s169 = sphi 0, %s167
      %s170 = sphi 0, %s169
      %s184 = sphi 0, %s170
      %s188 = sphi 0, %s188
      %s190 = sphi 0, %s188
      %s191 = sphi 0, %s190
      %s205 = sphi 0, %s191
      %s209 = sphi 0, %s209
      %s211 = sphi 0, %s209
      %s212 = sphi 0, %s211
      %s226 = sphi 0, %s212
      %s230 = sphi 0, %s230
      %s232 = sphi 0, %s230
      %s233 = sphi 0, %s232
      %s247 = sphi 0, %s233
      %s251 = sphi 0, %s251
      %s253 = sphi 0, %s251
      %s254 = sphi 0, %s253
      %s268 = sphi 0, %s254
      %s274 = sphi 0, %s276
      %s277 = sphi 0, %s274
      %s278 = sphi 0, %s277
      %s294 = sphi 0, %s278
    $region4: #{tpu_custom_call.1} parent=1 // loop_header_branch
      %31 = sbr.rel (%p29) target = $region8
    $region5: #{tpu_custom_call.1} parent=1 // loop_body
      %s33 = ssub.s32 %s28, 1
      %s34 = ssub.s32 %s28, 2
      %s35 = sadd.s32 %s28, 1
      %s36 = ssub.s32 %s28, %s35
      %p37 = scmp.eq.s32.totalorder %s36, 0
      %s39 = sadd.s32 %s38, 1
      %s40 = scalar_select %p37, %s38, %s39
      %p43 = pneg %p37
      %p44 = scmp.eq.s32.totalorder %s28, 1
      %p45 = por %p43, %p44
      %p46 = scmp.ne.s32.totalorder %s38, %s41
      %p47 = scmp.eq.s32.totalorder %s28, 0
      %p48 = por %p46, %p47
      %p49 = scmp.ne.s32.totalorder %s38, %s41
      %p50 = scmp.eq.s32.totalorder %s33, 1
      %p51 = por %p49, %p50
      %p52 = scmp.ne.s32.totalorder %s41, %s42
      %p53 = scmp.eq.s32.totalorder %s33, 0
      %p54 = por %p52, %p53
      %p55 = scmp.ne.s32.totalorder %s41, %s42
      %p56 = scmp.eq.s32.totalorder %s34, 1
      %p57 = por %p55, %p56
      %p59 = scmp.ne.s32.totalorder %s42, %s58
      %p60 = scmp.eq.s32.totalorder %s34, 0
      %p61 = por %p59, %p60
      %s63 = sadd.s32 %s62, 1
      %p66 = scmp.eq.s32.totalorder %s28, 1
      %p67 = scmp.ne.s32.totalorder %s62, %s64
      %p68 = scmp.eq.s32.totalorder %s28, 0
      %p69 = por %p67, %p68
      %p70 = scmp.ne.s32.totalorder %s62, %s64
      %p71 = scmp.eq.s32.totalorder %s33, 1
      %p72 = por %p70, %p71
      %p73 = scmp.ne.s32.totalorder %s64, %s65
      %p74 = scmp.eq.s32.totalorder %s33, 0
      %p75 = por %p73, %p74
      %p76 = scmp.ne.s32.totalorder %s64, %s65
      %p77 = scmp.eq.s32.totalorder %s34, 1
      %p78 = por %p76, %p77
      %p80 = scmp.ne.s32.totalorder %s65, %s79
      %p81 = scmp.eq.s32.totalorder %s34, 0
      %p82 = por %p80, %p81
      %s84 = sadd.s32 %s83, 1
      %p87 = scmp.eq.s32.totalorder %s28, 1
      %p88 = scmp.ne.s32.totalorder %s83, %s85
      %p89 = scmp.eq.s32.totalorder %s28, 0
      %p90 = por %p88, %p89
      %p91 = scmp.ne.s32.totalorder %s83, %s85
      %p92 = scmp.eq.s32.totalorder %s33, 1
      %p93 = por %p91, %p92
      %p94 = scmp.ne.s32.totalorder %s85, %s86
      %p95 = scmp.eq.s32.totalorder %s33, 0
      %p96 = por %p94, %p95
      %p97 = scmp.ne.s32.totalorder %s85, %s86
      %p98 = scmp.eq.s32.totalorder %s34, 1
      %p99 = por %p97, %p98
      %p101 = scmp.ne.s32.totalorder %s86, %s100
      %p102 = scmp.eq.s32.totalorder %s34, 0
      %p103 = por %p101, %p102
      %s105 = sadd.s32 %s104, 1
      %p108 = scmp.eq.s32.totalorder %s28, 1
      %p109 = scmp.ne.s32.totalorder %s104, %s106
      %p110 = scmp.eq.s32.totalorder %s28, 0
      %p111 = por %p109, %p110
      %p112 = scmp.ne.s32.totalorder %s104, %s106
      %p113 = scmp.eq.s32.totalorder %s33, 1
      %p114 = por %p112, %p113
      %p115 = scmp.ne.s32.totalorder %s106, %s107
      %p116 = scmp.eq.s32.totalorder %s33, 0
      %p117 = por %p115, %p116
      %p118 = scmp.ne.s32.totalorder %s106, %s107
      %p119 = scmp.eq.s32.totalorder %s34, 1
      %p120 = por %p118, %p119
      %p122 = scmp.ne.s32.totalorder %s107, %s121
      %p123 = scmp.eq.s32.totalorder %s34, 0
      %p124 = por %p122, %p123
      %s126 = sadd.s32 %s125, 1
      %p129 = scmp.eq.s32.totalorder %s28, 1
      %p130 = scmp.ne.s32.totalorder %s125, %s127
      %p131 = scmp.eq.s32.totalorder %s28, 0
      %p132 = por %p130, %p131
      %p133 = scmp.ne.s32.totalorder %s125, %s127
      %p134 = scmp.eq.s32.totalorder %s33, 1
      %p135 = por %p133, %p134
      %p136 = scmp.ne.s32.totalorder %s127, %s128
      %p137 = scmp.eq.s32.totalorder %s33, 0
      %p138 = por %p136, %p137
      %p139 = scmp.ne.s32.totalorder %s127, %s128
      %p140 = scmp.eq.s32.totalorder %s34, 1
      %p141 = por %p139, %p140
      %p143 = scmp.ne.s32.totalorder %s128, %s142
      %p144 = scmp.eq.s32.totalorder %s34, 0
      %p145 = por %p143, %p144
      %s147 = sadd.s32 %s146, 1
      %p150 = scmp.eq.s32.totalorder %s28, 1
      %p151 = scmp.ne.s32.totalorder %s146, %s148
      %p152 = scmp.eq.s32.totalorder %s28, 0
      %p153 = por %p151, %p152
      %p154 = scmp.ne.s32.totalorder %s146, %s148
      %p155 = scmp.eq.s32.totalorder %s33, 1
      %p156 = por %p154, %p155
      %p157 = scmp.ne.s32.totalorder %s148, %s149
      %p158 = scmp.eq.s32.totalorder %s33, 0
      %p159 = por %p157, %p158
      %p160 = scmp.ne.s32.totalorder %s148, %s149
      %p161 = scmp.eq.s32.totalorder %s34, 1
      %p162 = por %p160, %p161
      %p164 = scmp.ne.s32.totalorder %s149, %s163
      %p165 = scmp.eq.s32.totalorder %s34, 0
      %p166 = por %p164, %p165
      %s168 = sadd.s32 %s167, 1
      %p171 = scmp.eq.s32.totalorder %s28, 1
      %p172 = scmp.ne.s32.totalorder %s167, %s169
      %p173 = scmp.eq.s32.totalorder %s28, 0
      %p174 = por %p172, %p173
      %p175 = scmp.ne.s32.totalorder %s167, %s169
      %p176 = scmp.eq.s32.totalorder %s33, 1
      %p177 = por %p175, %p176
      %p178 = scmp.ne.s32.totalorder %s169, %s170
      %p179 = scmp.eq.s32.totalorder %s33, 0
      %p180 = por %p178, %p179
      %p181 = scmp.ne.s32.totalorder %s169, %s170
      %p182 = scmp.eq.s32.totalorder %s34, 1
      %p183 = por %p181, %p182
      %p185 = scmp.ne.s32.totalorder %s170, %s184
      %p186 = scmp.eq.s32.totalorder %s34, 0
      %p187 = por %p185, %p186
      %s189 = sadd.s32 %s188, 1
      %p192 = scmp.eq.s32.totalorder %s28, 1
      %p193 = scmp.ne.s32.totalorder %s188, %s190
      %p194 = scmp.eq.s32.totalorder %s28, 0
      %p195 = por %p193, %p194
      %p196 = scmp.ne.s32.totalorder %s188, %s190
      %p197 = scmp.eq.s32.totalorder %s33, 1
      %p198 = por %p196, %p197
      %p199 = scmp.ne.s32.totalorder %s190, %s191
      %p200 = scmp.eq.s32.totalorder %s33, 0
      %p201 = por %p199, %p200
      %p202 = scmp.ne.s32.totalorder %s190, %s191
      %p203 = scmp.eq.s32.totalorder %s34, 1
      %p204 = por %p202, %p203
      %p206 = scmp.ne.s32.totalorder %s191, %s205
      %p207 = scmp.eq.s32.totalorder %s34, 0
      %p208 = por %p206, %p207
      %s210 = sadd.s32 %s209, 1
      %p213 = scmp.eq.s32.totalorder %s28, 1
      %p214 = scmp.ne.s32.totalorder %s209, %s211
      %p215 = scmp.eq.s32.totalorder %s28, 0
      %p216 = por %p214, %p215
      %p217 = scmp.ne.s32.totalorder %s209, %s211
      %p218 = scmp.eq.s32.totalorder %s33, 1
      %p219 = por %p217, %p218
      %p220 = scmp.ne.s32.totalorder %s211, %s212
      %p221 = scmp.eq.s32.totalorder %s33, 0
      %p222 = por %p220, %p221
      %p223 = scmp.ne.s32.totalorder %s211, %s212
      %p224 = scmp.eq.s32.totalorder %s34, 1
      %p225 = por %p223, %p224
      %p227 = scmp.ne.s32.totalorder %s212, %s226
      %p228 = scmp.eq.s32.totalorder %s34, 0
      %p229 = por %p227, %p228
      %s231 = sadd.s32 %s230, 1
      %p234 = scmp.eq.s32.totalorder %s28, 1
      %p235 = scmp.ne.s32.totalorder %s230, %s232
      %p236 = scmp.eq.s32.totalorder %s28, 0
      %p237 = por %p235, %p236
      %p238 = scmp.ne.s32.totalorder %s230, %s232
      %p239 = scmp.eq.s32.totalorder %s33, 1
      %p240 = por %p238, %p239
      %p241 = scmp.ne.s32.totalorder %s232, %s233
      %p242 = scmp.eq.s32.totalorder %s33, 0
      %p243 = por %p241, %p242
      %p244 = scmp.ne.s32.totalorder %s232, %s233
      %p245 = scmp.eq.s32.totalorder %s34, 1
      %p246 = por %p244, %p245
      %p248 = scmp.ne.s32.totalorder %s233, %s247
      %p249 = scmp.eq.s32.totalorder %s34, 0
      %p250 = por %p248, %p249
      %s252 = sadd.s32 %s251, 1
      %p255 = scmp.eq.s32.totalorder %s28, 1
      %p256 = scmp.ne.s32.totalorder %s251, %s253
      %p257 = scmp.eq.s32.totalorder %s28, 0
      %p258 = por %p256, %p257
      %p259 = scmp.ne.s32.totalorder %s251, %s253
      %p260 = scmp.eq.s32.totalorder %s33, 1
      %p261 = por %p259, %p260
      %p262 = scmp.ne.s32.totalorder %s253, %s254
      %p263 = scmp.eq.s32.totalorder %s33, 0
      %p264 = por %p262, %p263
      %p265 = scmp.ne.s32.totalorder %s253, %s254
      %p266 = scmp.eq.s32.totalorder %s34, 1
      %p267 = por %p265, %p266
      %p269 = scmp.ne.s32.totalorder %s254, %s268
      %p270 = scmp.eq.s32.totalorder %s34, 0
      %p271 = por %p269, %p270
      %s272 = ssub.s32 %s28, %s35
      %p273 = scmp.eq.s32.totalorder %s272, 0
      %s275 = sadd.s32 %s274, 1
      %s276 = scalar_select %p273, %s274, %s275
      %p279 = pneg %p273
      %p280 = scmp.eq.s32.totalorder %s28, 1
      %p281 = por %p279, %p280
      %p282 = scmp.ne.s32.totalorder %s274, %s277
      %p283 = scmp.eq.s32.totalorder %s28, 0
      %p284 = por %p282, %p283
      %p285 = scmp.ne.s32.totalorder %s274, %s277
      %p286 = scmp.eq.s32.totalorder %s33, 1
      %p287 = por %p285, %p286
      %p288 = scmp.ne.s32.totalorder %s277, %s278
      %p289 = scmp.eq.s32.totalorder %s33, 0
      %p290 = por %p288, %p289
      %p291 = scmp.ne.s32.totalorder %s277, %s278
      %p292 = scmp.eq.s32.totalorder %s34, 1
      %p293 = por %p291, %p292
      %p295 = scmp.ne.s32.totalorder %s278, %s294
      %p296 = scmp.eq.s32.totalorder %s34, 0
      %p297 = por %p295, %p296
      %p298 = scmp.le.s32.totalorder 1, %s28
      %p299 = scmp.lt.s32.totalorder %s28, 3
      %p300 = pnand %p298, %p299
      %p301 = pneg %p300
      // Predicated region
      $region9: #{tpu_custom_call.1} parent=5 // pred_check
        _
      $region10: #{tpu_custom_call.1} parent=5 // pred_check_branch
        %303 = sbr.rel (%p300) target = $region12
      $region11: #{tpu_custom_call.1} parent=5 // pred_region
        %s304 = ssub.s32 %s28, 1
        // Predicated region
        $region13: #{tpu_custom_call.1} parent=11 // pred_check
          %p305 = pneg %p75
        $region14: #{tpu_custom_call.1} parent=11 // pred_check_branch
          %307 = sbr.rel (%p305) target = $region16
        $region15: #{tpu_custom_call.1} parent=11 // pred_region
          %s309 = ssub.s32 24576, 24576
          %310 = vsyncadd [#allocation9], %s309
          %s311 = sshll.u32 [#allocation8], 4
          %s312 = int_to_ptr.vmem [resolvable:$true] %s311
          %317 = dma.hbm_to_vmem [thread:$0]  %s1, 24576, %s312, [#allocation9], 512, 512, 32
        $region16: #{tpu_custom_call.1} parent=11 // pred_fallthru
          _
        // Predicated region
        $region17: #{tpu_custom_call.1} parent=11 // pred_check
          %p318 = pneg %p96
        $region18: #{tpu_custom_call.1} parent=11 // pred_check_branch
          %320 = sbr.rel (%p318) target = $region20
        $region19: #{tpu_custom_call.1} parent=11 // pred_region
          %s322 = ssub.s32 64, 64
          %323 = vsyncadd [#allocation9], %s322
          %s325 = sshll.u32 [#allocation10], 4
          %s326 = int_to_ptr.vmem [resolvable:$true] %s325
          %328 = dma.hbm_to_vmem [thread:$0]  %s2, 64, %s326, [#allocation9]
        $region20: #{tpu_custom_call.1} parent=11 // pred_fallthru
          _
        // Predicated region
        $region21: #{tpu_custom_call.1} parent=11 // pred_check
          %p329 = pneg %p117
        $region22: #{tpu_custom_call.1} parent=11 // pred_check_branch
          %331 = sbr.rel (%p329) target = $region24
        $region23: #{tpu_custom_call.1} parent=11 // pred_region
          %s333 = ssub.s32 49152, 49152
          %334 = vsyncadd [#allocation12], %s333
          %s335 = sshll.u32 [#allocation11], 4
          %s336 = int_to_ptr.vmem [resolvable:$true] %s335
          %341 = dma.hbm_to_vmem [thread:$0]  %s3, 49152, %s336, [#allocation12], 256, 256, 16
        $region24: #{tpu_custom_call.1} parent=11 // pred_fallthru
          _
        // Predicated region
        $region25: #{tpu_custom_call.1} parent=11 // pred_check
          %p342 = pneg %p138
        $region26: #{tpu_custom_call.1} parent=11 // pred_check_branch
          %344 = sbr.rel (%p342) target = $region28
        $region27: #{tpu_custom_call.1} parent=11 // pred_region
          %s346 = ssub.s32 49152, 49152
          %347 = vsyncadd [#allocation12], %s346
          %s348 = sshll.u32 [#allocation13], 4
          %s349 = int_to_ptr.vmem [resolvable:$true] %s348
          %354 = dma.hbm_to_vmem [thread:$0]  %s4, 49152, %s349, [#allocation12], 256, 256, 16
        $region28: #{tpu_custom_call.1} parent=11 // pred_fallthru
          _
        // Predicated region
        $region29: #{tpu_custom_call.1} parent=11 // pred_check
          %p355 = pneg %p159
        $region30: #{tpu_custom_call.1} parent=11 // pred_check_branch
          %357 = sbr.rel (%p355) target = $region32
        $region31: #{tpu_custom_call.1} parent=11 // pred_region
          %s359 = ssub.s32 32, 32
          %360 = vsyncadd [#allocation15], %s359
          %s362 = sshll.u32 [#allocation14], 4
          %s363 = int_to_ptr.vmem [resolvable:$true] %s362
          %365 = dma.hbm_to_vmem [thread:$0]  %s5, 32, %s363, [#allocation15]
        $region32: #{tpu_custom_call.1} parent=11 // pred_fallthru
          _
        // Predicated region
        $region33: #{tpu_custom_call.1} parent=11 // pred_check
          %p366 = pneg %p180
        $region34: #{tpu_custom_call.1} parent=11 // pred_check_branch
          %368 = sbr.rel (%p366) target = $region36
        $region35: #{tpu_custom_call.1} parent=11 // pred_region
          %s370 = ssub.s32 24576, 24576
          %371 = vsyncadd [#allocation15], %s370
          %s372 = sshll.u32 [#allocation16], 4
          %s373 = int_to_ptr.vmem [resolvable:$true] %s372
          %378 = dma.hbm_to_vmem [thread:$0]  %s6, 24576, %s373, [#allocation15], 256, 256, 16
        $region36: #{tpu_custom_call.1} parent=11 // pred_fallthru
          _
        // Predicated region
        $region37: #{tpu_custom_call.1} parent=11 // pred_check
          %p379 = pneg %p201
        $region38: #{tpu_custom_call.1} parent=11 // pred_check_branch
          %381 = sbr.rel (%p379) target = $region40
        $region39: #{tpu_custom_call.1} parent=11 // pred_region
          %s383 = ssub.s32 24576, 24576
          %384 = vsyncadd [#allocation18], %s383
          %s385 = sshll.u32 [#allocation17], 4
          %s386 = int_to_ptr.vmem [resolvable:$true] %s385
          %391 = dma.hbm_to_vmem [thread:$0]  %s7, 24576, %s386, [#allocation18], 256, 256, 16
        $region40: #{tpu_custom_call.1} parent=11 // pred_fallthru
          _
        // Predicated region
        $region41: #{tpu_custom_call.1} parent=11 // pred_check
          %p392 = pneg %p222
        $region42: #{tpu_custom_call.1} parent=11 // pred_check_branch
          %394 = sbr.rel (%p392) target = $region44
        $region43: #{tpu_custom_call.1} parent=11 // pred_region
          %s396 = ssub.s32 32, 32
          %397 = vsyncadd [#allocation18], %s396
          %s399 = sshll.u32 [#allocation19], 4
          %s400 = int_to_ptr.vmem [resolvable:$true] %s399
          %402 = dma.hbm_to_vmem [thread:$0]  %s8, 32, %s400, [#allocation18]
        $region44: #{tpu_custom_call.1} parent=11 // pred_fallthru
          _
        // Predicated region
        $region45: #{tpu_custom_call.1} parent=11 // pred_check
          %p403 = pneg %p243
        $region46: #{tpu_custom_call.1} parent=11 // pred_check_branch
          %405 = sbr.rel (%p403) target = $region48
        $region47: #{tpu_custom_call.1} parent=11 // pred_region
          _
        $region48: #{tpu_custom_call.1} parent=11 // pred_fallthru
          _
        // Predicated region
        $region49: #{tpu_custom_call.1} parent=11 // pred_check
          %p406 = pneg %p264
        $region50: #{tpu_custom_call.1} parent=11 // pred_check_branch
          %408 = sbr.rel (%p406) target = $region52
        $region51: #{tpu_custom_call.1} parent=11 // pred_region
          %s410 = ssub.s32 16, 16
          %411 = vsyncadd [#allocation21], %s410
          %s413 = sshll.u32 [#allocation20], 4
          %s414 = int_to_ptr.vmem [resolvable:$true] %s413
          %416 = dma.hbm_to_vmem [thread:$0]  %s10, 16, %s414, [#allocation21]
        $region52: #{tpu_custom_call.1} parent=11 // pred_fallthru
          _
      $region12: #{tpu_custom_call.1} parent=5 // pred_fallthru
        _
      %p417 = scmp.lt.s32.totalorder %s28, 2
      // Predicated region
      $region53: #{tpu_custom_call.1} parent=5 // pred_check
        %p418 = pneg %p417
      $region54: #{tpu_custom_call.1} parent=5 // pred_check_branch
        %420 = sbr.rel (%p418) target = $region56
      $region55: #{tpu_custom_call.1} parent=5 // pred_region
        // Predicated region
        $region57: #{tpu_custom_call.1} parent=55 // pred_check
          %p421 = pneg %p48
        $region58: #{tpu_custom_call.1} parent=55 // pred_check_branch
          %423 = sbr.rel (%p421) target = $region60
        $region59: #{tpu_custom_call.1} parent=55 // pred_region
          %s424 = sand.u32 %s38, 1
          %s425 = scalar_lea.sflag [#allocation6], %s424
          %s426 = sand.u32 %s38, 1
          %s427 = smul.addr %s426, 32
          %s428 = scalar_lea.vmem [#allocation5], %s427
          %s429 = smul.u32 2, %s28
          %s431 = ssub.s32 512, 512
          %432 = vsyncadd %s425, %s431
          %s433 = smul.addr %s429, 2
          %s434 = smul.addr %s433, 128
          %s435 = scalar_lea.hbm %s0, %s434
          %s436 = sshll.u32 %s428, 4
          %s437 = int_to_ptr.vmem [resolvable:$true] %s436
          %442 = dma.hbm_to_vmem [thread:$0]  %s435, 512, %s437, %s425, 128, 128, 8
        $region60: #{tpu_custom_call.1} parent=55 // pred_fallthru
          _
      $region56: #{tpu_custom_call.1} parent=5 // pred_fallthru
        _
      %p443 = scmp.le.s32.totalorder 1, %s28
      %p444 = scmp.lt.s32.totalorder %s28, 3
      %p445 = pnand %p443, %p444
      %p446 = pneg %p445
      // Predicated region
      $region61: #{tpu_custom_call.1} parent=5 // pred_check
        _
      $region62: #{tpu_custom_call.1} parent=5 // pred_check_branch
        %448 = sbr.rel (%p445) target = $region64
      $region63: #{tpu_custom_call.1} parent=5 // pred_region
        %s449 = ssub.s32 %s28, 1
        %s450 = sand.u32 %s41, 1
        %s451 = scalar_lea.sflag [#allocation6], %s450
        %s452 = sand.u32 %s41, 1
        %s453 = smul.addr %s452, 32
        %s454 = scalar_lea.vmem [#allocation5], %s453
        // Predicated region
        $region65: #{tpu_custom_call.1} parent=63 // pred_check
          %p455 = pneg %p54
        $region66: #{tpu_custom_call.1} parent=63 // pred_check_branch
          %457 = sbr.rel (%p455) target = $region68
        $region67: #{tpu_custom_call.1} parent=63 // pred_region
          %458 = dma.done %s451, 512
        $region68: #{tpu_custom_call.1} parent=63 // pred_fallthru
          _
        // Predicated region
        $region69: #{tpu_custom_call.1} parent=63 // pred_check
          %p459 = pneg %p75
        $region70: #{tpu_custom_call.1} parent=63 // pred_check_branch
          %461 = sbr.rel (%p459) target = $region72
        $region71: #{tpu_custom_call.1} parent=63 // pred_region
          %462 = dma.done [#allocation9], 24576
        $region72: #{tpu_custom_call.1} parent=63 // pred_fallthru
          _
        // Predicated region
        $region73: #{tpu_custom_call.1} parent=63 // pred_check
          %p463 = pneg %p96
        $region74: #{tpu_custom_call.1} parent=63 // pred_check_branch
          %465 = sbr.rel (%p463) target = $region76
        $region75: #{tpu_custom_call.1} parent=63 // pred_region
          %466 = dma.done [#allocation9], 64
        $region76: #{tpu_custom_call.1} parent=63 // pred_fallthru
          _
        // Predicated region
        $region77: #{tpu_custom_call.1} parent=63 // pred_check
          %p467 = pneg %p117
        $region78: #{tpu_custom_call.1} parent=63 // pred_check_branch
          %469 = sbr.rel (%p467) target = $region80
        $region79: #{tpu_custom_call.1} parent=63 // pred_region
          %470 = dma.done [#allocation12], 49152
        $region80: #{tpu_custom_call.1} parent=63 // pred_fallthru
          _
        // Predicated region
        $region81: #{tpu_custom_call.1} parent=63 // pred_check
          %p471 = pneg %p138
        $region82: #{tpu_custom_call.1} parent=63 // pred_check_branch
          %473 = sbr.rel (%p471) target = $region84
        $region83: #{tpu_custom_call.1} parent=63 // pred_region
          %474 = dma.done [#allocation12], 49152
        $region84: #{tpu_custom_call.1} parent=63 // pred_fallthru
          _
        // Predicated region
        $region85: #{tpu_custom_call.1} parent=63 // pred_check
          %p475 = pneg %p159
        $region86: #{tpu_custom_call.1} parent=63 // pred_check_branch
          %477 = sbr.rel (%p475) target = $region88
        $region87: #{tpu_custom_call.1} parent=63 // pred_region
          %478 = dma.done [#allocation15], 32
        $region88: #{tpu_custom_call.1} parent=63 // pred_fallthru
          _
        // Predicated region
        $region89: #{tpu_custom_call.1} parent=63 // pred_check
          %p479 = pneg %p180
        $region90: #{tpu_custom_call.1} parent=63 // pred_check_branch
          %481 = sbr.rel (%p479) target = $region92
        $region91: #{tpu_custom_call.1} parent=63 // pred_region
          %482 = dma.done [#allocation15], 24576
        $region92: #{tpu_custom_call.1} parent=63 // pred_fallthru
          _
        // Predicated region
        $region93: #{tpu_custom_call.1} parent=63 // pred_check
          %p483 = pneg %p201
        $region94: #{tpu_custom_call.1} parent=63 // pred_check_branch
          %485 = sbr.rel (%p483) target = $region96
        $region95: #{tpu_custom_call.1} parent=63 // pred_region
          %486 = dma.done [#allocation18], 24576
        $region96: #{tpu_custom_call.1} parent=63 // pred_fallthru
          _
        // Predicated region
        $region97: #{tpu_custom_call.1} parent=63 // pred_check
          %p487 = pneg %p222
        $region98: #{tpu_custom_call.1} parent=63 // pred_check_branch
          %489 = sbr.rel (%p487) target = $region100
        $region99: #{tpu_custom_call.1} parent=63 // pred_region
          %490 = dma.done [#allocation18], 32
        $region100: #{tpu_custom_call.1} parent=63 // pred_fallthru
          _
        // Predicated region
        $region101: #{tpu_custom_call.1} parent=63 // pred_check
          %p491 = pneg %p264
        $region102: #{tpu_custom_call.1} parent=63 // pred_check_branch
          %493 = sbr.rel (%p491) target = $region104
        $region103: #{tpu_custom_call.1} parent=63 // pred_region
          %494 = dma.done [#allocation21], 16
        $region104: #{tpu_custom_call.1} parent=63 // pred_fallthru
          _
        %s495 = sand.u32 %s41, 1
        %s496 = scalar_lea.sflag [#allocation6], %s495
        %s497 = sand.u32 %s41, 1
        %s498 = smul.addr %s497, 32
        %s499 = scalar_lea.vmem [#allocation5], %s498
        %p500 = pneg %p54
        %p501 = pneg %p51
        %p502 = pneg %p75
        %p503 = pneg %p72
        %p504 = pneg %p96
        %p505 = pneg %p93
        %p506 = pneg %p117
        %p507 = pneg %p114
        %p508 = pneg %p138
        %p509 = pneg %p135
        %p510 = pneg %p159
        %p511 = pneg %p156
        %p512 = pneg %p180
        %p513 = pneg %p177
        %p514 = pneg %p201
        %p515 = pneg %p198
        %p516 = pneg %p222
        %p517 = pneg %p219
        %p518 = pneg %p243
        %p519 = pneg %p240
        %p520 = pneg %p264
        %p521 = pneg %p261
        %p522 = pneg %p290
        %p523 = pneg %p287
        %s524 = sand.u32 %s277, 1
        %s525 = scalar_lea.sflag [#allocation7], %s524
        %s526 = sand.u32 %s277, 1
        %s527 = smul.addr %s526, 32
        %s528 = scalar_lea.vmem [#allocation22], %s527
        %s529 = smul.u32 2, %s33
        %s530 = smul.u32 2, %s33
        %v532 = vld [vmem:[%s454] sm:$0xff]
        %v533 = vld [vmem:[%s454 + $0x8] sm:$0xff]
        %534 = vst [vmem:[#allocation2 + $0x1] sm:$0xff] %v532
        %535 = vst [vmem:[#allocation2 + $0x9] sm:$0xff] %v533
        %s536 = scalar_lea.vmem %s454, 16 [#allocation5]
        %v537 = vld [vmem:[%s536] sm:$0xff]
        %v538 = vld [vmem:[%s536 + $0x8] sm:$0xff]
        %539 = vst [vmem:[#allocation2 + $0x13] sm:$0xff] %v537
        %540 = vst [vmem:[#allocation2 + $0x1b] sm:$0xff] %v538
        %541 = vst [vmem:[#allocation2] sm:$0x1] 0.0
        %542 = vst [vmem:[#allocation2 + $0x11] sm:$0x1] 0.0
        %543 = vst [vmem:[#allocation2 + $0x12] sm:$0x1] 0.0
        %544 = vst [vmem:[#allocation2 + $0x23] sm:$0x1] 0.0
        %v545 = vld [vmem:[#allocation2] sm:$0xff]
        %v546 = vld [vmem:[#allocation2 + $0x8] sm:$0xff]
        %v547 = vld [vmem:[#allocation2 + $0x10] sm:$0xff]
        %v548 = vld [vmem:[#allocation2 + $0x18] sm:$0xff]
        %v549 = vld [vmem:[#allocation2 + $0x20] sm:$0x3]
        %v550 = vld [vmem:[#allocation8] sm:$0xff]
        %v551 = vld [vmem:[#allocation8 + $0x8] sm:$0xff]
        %v552 = vld [vmem:[#allocation8 + $0x10] sm:$0xff]
        %v553 = vld [vmem:[#allocation8 + $0x18] sm:$0xff]
        %v554 = vld [vmem:[#allocation8 + $0x20] sm:$0xff]
        %v555 = vld [vmem:[#allocation8 + $0x28] sm:$0xff]
        %v556 = vld [vmem:[#allocation8 + $0x30] sm:$0xff]
        %v557 = vld [vmem:[#allocation8 + $0x38] sm:$0xff]
        %v558 = vld [vmem:[#allocation8 + $0x40] sm:$0xff]
        %v559 = vld [vmem:[#allocation8 + $0x48] sm:$0xff]
        %v560 = vld [vmem:[#allocation8 + $0x50] sm:$0xff]
        %v561 = vld [vmem:[#allocation8 + $0x58] sm:$0xff]
        %v562 = vld [vmem:[#allocation8 + $0x60] sm:$0xff]
        %v563 = vld [vmem:[#allocation8 + $0x68] sm:$0xff]
        %v564 = vld [vmem:[#allocation8 + $0x70] sm:$0xff]
        %v565 = vld [vmem:[#allocation8 + $0x78] sm:$0xff]
        %v566 = vld [vmem:[#allocation8 + $0x80] sm:$0xff]
        %v567 = vld [vmem:[#allocation8 + $0x88] sm:$0xff]
        %v568 = vld [vmem:[#allocation8 + $0x90] sm:$0xff]
        %v569 = vld [vmem:[#allocation8 + $0x98] sm:$0xff]
        %v570 = vld [vmem:[#allocation8 + $0xa0] sm:$0xff]
        %v571 = vld [vmem:[#allocation8 + $0xa8] sm:$0xff]
        %v572 = vld [vmem:[#allocation8 + $0xb0] sm:$0xff]
        %v573 = vld [vmem:[#allocation8 + $0xb8] sm:$0xff]
        %v574 = vld [vmem:[#allocation8 + $0xc0] sm:$0xff]
        %v575 = vld [vmem:[#allocation8 + $0xc8] sm:$0xff]
        %v576 = vld [vmem:[#allocation8 + $0xd0] sm:$0xff]
        %v577 = vld [vmem:[#allocation8 + $0xd8] sm:$0xff]
        %v578 = vld [vmem:[#allocation8 + $0xe0] sm:$0xff]
        %v579 = vld [vmem:[#allocation8 + $0xe8] sm:$0xff]
        %v580 = vld [vmem:[#allocation8 + $0xf0] sm:$0xff]
        %v581 = vld [vmem:[#allocation8 + $0xf8] sm:$0xff]
        %v582 = vld [vmem:[#allocation8 + $0x100] sm:$0xff]
        %v583 = vld [vmem:[#allocation8 + $0x108] sm:$0xff]
        %v584 = vld [vmem:[#allocation8 + $0x110] sm:$0xff]
        %v585 = vld [vmem:[#allocation8 + $0x118] sm:$0xff]
        %v586 = vld [vmem:[#allocation8 + $0x120] sm:$0xff]
        %v587 = vld [vmem:[#allocation8 + $0x128] sm:$0xff]
        %v588 = vld [vmem:[#allocation8 + $0x130] sm:$0xff]
        %v589 = vld [vmem:[#allocation8 + $0x138] sm:$0xff]
        %v590 = vld [vmem:[#allocation8 + $0x140] sm:$0xff]
        %v591 = vld [vmem:[#allocation8 + $0x148] sm:$0xff]
        %v592 = vld [vmem:[#allocation8 + $0x150] sm:$0xff]
        %v593 = vld [vmem:[#allocation8 + $0x158] sm:$0xff]
        %v594 = vld [vmem:[#allocation8 + $0x160] sm:$0xff]
        %v595 = vld [vmem:[#allocation8 + $0x168] sm:$0xff]
        %v596 = vld [vmem:[#allocation8 + $0x170] sm:$0xff]
        %v597 = vld [vmem:[#allocation8 + $0x178] sm:$0xff]
        %v598 = vld [vmem:[#allocation8 + $0x180] sm:$0xff]
        %v599 = vld [vmem:[#allocation8 + $0x188] sm:$0xff]
        %v600 = vld [vmem:[#allocation8 + $0x190] sm:$0xff]
        %v601 = vld [vmem:[#allocation8 + $0x198] sm:$0xff]
        %v602 = vld [vmem:[#allocation8 + $0x1a0] sm:$0xff]
        %v603 = vld [vmem:[#allocation8 + $0x1a8] sm:$0xff]
        %v604 = vld [vmem:[#allocation8 + $0x1b0] sm:$0xff]
        %v605 = vld [vmem:[#allocation8 + $0x1b8] sm:$0xff]
        %v606 = vld [vmem:[#allocation8 + $0x1c0] sm:$0xff]
        %v607 = vld [vmem:[#allocation8 + $0x1c8] sm:$0xff]
        %v608 = vld [vmem:[#allocation8 + $0x1d0] sm:$0xff]
        %v609 = vld [vmem:[#allocation8 + $0x1d8] sm:$0xff]
        %v610 = vld [vmem:[#allocation8 + $0x1e0] sm:$0xff]
        %v611 = vld [vmem:[#allocation8 + $0x1e8] sm:$0xff]
        %v612 = vld [vmem:[#allocation8 + $0x1f0] sm:$0xff]
        %v613 = vld [vmem:[#allocation8 + $0x1f8] sm:$0xff]
        %v614 = vld [vmem:[#allocation2 + $0x1] sm:$0xff]
        %v615 = vld [vmem:[#allocation2 + $0x9] sm:$0xff]
        %v616 = vld [vmem:[#allocation2 + $0x11] sm:$0xff]
        %v617 = vld [vmem:[#allocation2 + $0x19] sm:$0xff]
        %v618 = vld [vmem:[#allocation2 + $0x21] sm:$0x3]
        %s619 = scalar_lea.vmem [#allocation8], 512
        %v620 = vld [vmem:[%s619] sm:$0xff]
        %v621 = vld [vmem:[%s619 + $0x8] sm:$0xff]
        %v622 = vld [vmem:[%s619 + $0x10] sm:$0xff]
        %v623 = vld [vmem:[%s619 + $0x18] sm:$0xff]
        %v624 = vld [vmem:[%s619 + $0x20] sm:$0xff]
        %v625 = vld [vmem:[%s619 + $0x28] sm:$0xff]
        %v626 = vld [vmem:[%s619 + $0x30] sm:$0xff]
        %v627 = vld [vmem:[%s619 + $0x38] sm:$0xff]
        %v628 = vld [vmem:[%s619 + $0x40] sm:$0xff]
        %v629 = vld [vmem:[%s619 + $0x48] sm:$0xff]
        %v630 = vld [vmem:[%s619 + $0x50] sm:$0xff]
        %v631 = vld [vmem:[%s619 + $0x58] sm:$0xff]
        %v632 = vld [vmem:[%s619 + $0x60] sm:$0xff]
        %v633 = vld [vmem:[%s619 + $0x68] sm:$0xff]
        %v634 = vld [vmem:[%s619 + $0x70] sm:$0xff]
        %v635 = vld [vmem:[%s619 + $0x78] sm:$0xff]
        %v636 = vld [vmem:[%s619 + $0x80] sm:$0xff]
        %v637 = vld [vmem:[%s619 + $0x88] sm:$0xff]
        %v638 = vld [vmem:[%s619 + $0x90] sm:$0xff]
        %v639 = vld [vmem:[%s619 + $0x98] sm:$0xff]
        %v640 = vld [vmem:[%s619 + $0xa0] sm:$0xff]
        %v641 = vld [vmem:[%s619 + $0xa8] sm:$0xff]
        %v642 = vld [vmem:[%s619 + $0xb0] sm:$0xff]
        %v643 = vld [vmem:[%s619 + $0xb8] sm:$0xff]
        %v644 = vld [vmem:[%s619 + $0xc0] sm:$0xff]
        %v645 = vld [vmem:[%s619 + $0xc8] sm:$0xff]
        %v646 = vld [vmem:[%s619 + $0xd0] sm:$0xff]
        %v647 = vld [vmem:[%s619 + $0xd8] sm:$0xff]
        %v648 = vld [vmem:[%s619 + $0xe0] sm:$0xff]
        %v649 = vld [vmem:[%s619 + $0xe8] sm:$0xff]
        %v650 = vld [vmem:[%s619 + $0xf0] sm:$0xff]
        %v651 = vld [vmem:[%s619 + $0xf8] sm:$0xff]
        %v652 = vld [vmem:[%s619 + $0x100] sm:$0xff]
        %v653 = vld [vmem:[%s619 + $0x108] sm:$0xff]
        %v654 = vld [vmem:[%s619 + $0x110] sm:$0xff]
        %v655 = vld [vmem:[%s619 + $0x118] sm:$0xff]
        %v656 = vld [vmem:[%s619 + $0x120] sm:$0xff]
        %v657 = vld [vmem:[%s619 + $0x128] sm:$0xff]
        %v658 = vld [vmem:[%s619 + $0x130] sm:$0xff]
        %v659 = vld [vmem:[%s619 + $0x138] sm:$0xff]
        %v660 = vld [vmem:[%s619 + $0x140] sm:$0xff]
        %v661 = vld [vmem:[%s619 + $0x148] sm:$0xff]
        %v662 = vld [vmem:[%s619 + $0x150] sm:$0xff]
        %v663 = vld [vmem:[%s619 + $0x158] sm:$0xff]
        %v664 = vld [vmem:[%s619 + $0x160] sm:$0xff]
        %v665 = vld [vmem:[%s619 + $0x168] sm:$0xff]
        %v666 = vld [vmem:[%s619 + $0x170] sm:$0xff]
        %v667 = vld [vmem:[%s619 + $0x178] sm:$0xff]
        %v668 = vld [vmem:[%s619 + $0x180] sm:$0xff]
        %v669 = vld [vmem:[%s619 + $0x188] sm:$0xff]
        %v670 = vld [vmem:[%s619 + $0x190] sm:$0xff]
        %v671 = vld [vmem:[%s619 + $0x198] sm:$0xff]
        %v672 = vld [vmem:[%s619 + $0x1a0] sm:$0xff]
        %v673 = vld [vmem:[%s619 + $0x1a8] sm:$0xff]
        %v674 = vld [vmem:[%s619 + $0x1b0] sm:$0xff]
        %v675 = vld [vmem:[%s619 + $0x1b8] sm:$0xff]
        %v676 = vld [vmem:[%s619 + $0x1c0] sm:$0xff]
        %v677 = vld [vmem:[%s619 + $0x1c8] sm:$0xff]
        %v678 = vld [vmem:[%s619 + $0x1d0] sm:$0xff]
        %v679 = vld [vmem:[%s619 + $0x1d8] sm:$0xff]
        %v680 = vld [vmem:[%s619 + $0x1e0] sm:$0xff]
        %v681 = vld [vmem:[%s619 + $0x1e8] sm:$0xff]
        %v682 = vld [vmem:[%s619 + $0x1f0] sm:$0xff]
        %v683 = vld [vmem:[%s619 + $0x1f8] sm:$0xff]
        %684 = vmatprep.subr.mxu0 %v621
        %685 = vmatpush1.msra.mxu0 %v620
        %686 = vmatprep.subr.mxu0 %v625
        %687 = vmatpush1.msra.mxu0 %v624
        %688 = vmatprep.subr.mxu0 %v629
        %689 = vmatpush1.msra.mxu0 %v628
        %690 = vmatprep.subr.mxu0 %v633
        %691 = vmatpush1.msra.mxu0 %v632
        %692 = vmatprep.subr.mxu0 %v637
        %693 = vmatpush1.msra.mxu0 %v636
        %694 = vmatprep.subr.mxu0 %v641
        %695 = vmatpush1.msra.mxu0 %v640
        %696 = vmatprep.subr.mxu0 %v645
        %697 = vmatpush1.msra.mxu0 %v644
        %698 = vmatprep.subr.mxu0 %v649
        %699 = vmatpush1.msra.mxu0 %v648
        %700 = vmatprep.subr.mxu0 %v653
        %701 = vmatpush1.msra.mxu0 %v652
        %702 = vmatprep.subr.mxu0 %v657
        %703 = vmatpush1.msra.mxu0 %v656
        %704 = vmatprep.subr.mxu0 %v661
        %705 = vmatpush1.msra.mxu0 %v660
        %706 = vmatprep.subr.mxu0 %v665
        %707 = vmatpush1.msra.mxu0 %v664
        %708 = vmatprep.subr.mxu0 %v669
        %709 = vmatpush1.msra.mxu0 %v668
        %710 = vmatprep.subr.mxu0 %v673
        %711 = vmatpush1.msra.mxu0 %v672
        %712 = vmatprep.subr.mxu0 %v677
        %713 = vmatpush1.msra.mxu0 %v676
        %714 = vmatprep.subr.mxu0 %v681
        %715 = vmatpush1.msra.mxu0 %v680
        %716 = vmatprep.subr.mxu0 0.0
        %717 = vmatpush1.msra.mxu0 0.0
        %718 = vmatprep.subr.mxu0 0.0
        %719 = vmatpush1.msra.mxu0 0.0
        %720 = vmatprep.subr.mxu0 0.0
        %721 = vmatpush1.msra.mxu0 0.0
        %722 = vmatprep.subr.mxu0 0.0
        %723 = vmatpush1.msra.mxu0 0.0
        %724 = vmatprep.subr.mxu0 0.0
        %725 = vmatpush1.msra.mxu0 0.0
        %726 = vmatprep.subr.mxu0 0.0
        %727 = vmatpush1.msra.mxu0 0.0
        %728 = vmatprep.subr.mxu0 0.0
        %729 = vmatpush1.msra.mxu0 0.0
        %730 = vmatprep.subr.mxu0 0.0
        %731 = vmatpush1.msra.mxu0 0.0
        %732 = vmatprep.subr.mxu0 0.0
        %733 = vmatpush1.msra.mxu0 0.0
        %734 = vmatprep.subr.mxu0 0.0
        %735 = vmatpush1.msra.mxu0 0.0
        %736 = vmatprep.subr.mxu0 0.0
        %737 = vmatpush1.msra.mxu0 0.0
        %738 = vmatprep.subr.mxu0 0.0
        %739 = vmatpush1.msra.mxu0 0.0
        %740 = vmatprep.subr.mxu0 0.0
        %741 = vmatpush1.msra.mxu0 0.0
        %742 = vmatprep.subr.mxu0 0.0
        %743 = vmatpush1.msra.mxu0 0.0
        %744 = vmatprep.subr.mxu0 0.0
        %745 = vmatpush1.msra.mxu0 0.0
        %746 = vmatprep.subr.mxu0 0.0
        %747 = vmatpush1.msra.mxu0 0.0
        %748 = vmatprep.mubr.f32.mxu0 0.0
        %749 = vmatmul.mubr.f32.gmra.mrb[0].mxu0 %v614
        %v750 = vpop.f32.mrb[0].mxu0
        %v751 = vadd.f32 0.0, %v750
        %v752 = vpop.f32.mrb[0].mxu0
        %v753 = vadd.f32 0.0, %v752
        %754 = vmatprep.mubr.f32.mxu0 0.0
        %755 = vmatmul.mubr.f32.gmra.mrb[0].mxu0 %v615
        %v756 = vpop.f32.mrb[0].mxu0
        %v757 = vadd.f32 0.0, %v756
        %v758 = vpop.f32.mrb[0].mxu0
        %v759 = vadd.f32 0.0, %v758
        %760 = vmatprep.mubr.f32.mxu0 0.0
        %761 = vmatmul.mubr.f32.gmra.mrb[0].mxu0 %v616
        %v762 = vpop.f32.mrb[0].mxu0
        %v763 = vadd.f32 0.0, %v762
        %v764 = vpop.f32.mrb[0].mxu0
        %v765 = vadd.f32 0.0, %v764
        %766 = vmatprep.mubr.f32.mxu0 0.0
        %767 = vmatmul.mubr.f32.gmra.mrb[0].mxu0 %v617
        %v768 = vpop.f32.mrb[0].mxu0
        %v769 = vadd.f32 0.0, %v768
        %v770 = vpop.f32.mrb[0].mxu0
        %v771 = vadd.f32 0.0, %v770
        %772 = vmatprep.mubr.f32.mxu0 0.0
        %773 = vmatmul.mubr.f32.gmra.mrb[0].mxu0 %v618
        %v774 = vpop.f32.mrb[0].mxu0
        %v775 = vadd.f32 0.0, %v774
        %v776 = vpop.f32.mrb[0].mxu0
        %v777 = vadd.f32 0.0, %v776
        %778 = vdwg.mxu0
        %779 = vmatprep.subr.mxu0 %v623
        %780 = vmatpush1.msra.mxu0 %v622
        %781 = vmatprep.subr.mxu0 %v627
        %782 = vmatpush1.msra.mxu0 %v626
        %783 = vmatprep.subr.mxu0 %v631
        %784 = vmatpush1.msra.mxu0 %v630
        %785 = vmatprep.subr.mxu0 %v635
        %786 = vmatpush1.msra.mxu0 %v634
        %787 = vmatprep.subr.mxu0 %v639
        %788 = vmatpush1.msra.mxu0 %v638
        %789 = vmatprep.subr.mxu0 %v643
        %790 = vmatpush1.msra.mxu0 %v642
        %791 = vmatprep.subr.mxu0 %v647
        %792 = vmatpush1.msra.mxu0 %v646
        %793 = vmatprep.subr.mxu0 %v651
        %794 = vmatpush1.msra.mxu0 %v650
        %795 = vmatprep.subr.mxu0 %v655
        %796 = vmatpush1.msra.mxu0 %v654
        %797 = vmatprep.subr.mxu0 %v659
        %798 = vmatpush1.msra.mxu0 %v658
        %799 = vmatprep.subr.mxu0 %v663
        %800 = vmatpush1.msra.mxu0 %v662
        %801 = vmatprep.subr.mxu0 %v667
        %802 = vmatpush1.msra.mxu0 %v666
        %803 = vmatprep.subr.mxu0 %v671
        %804 = vmatpush1.msra.mxu0 %v670
        %805 = vmatprep.subr.mxu0 %v675
        %806 = vmatpush1.msra.mxu0 %v674
        %807 = vmatprep.subr.mxu0 %v679
        %808 = vmatpush1.msra.mxu0 %v678
        %809 = vmatprep.subr.mxu0 %v683
        %810 = vmatpush1.msra.mxu0 %v682
        %811 = vmatprep.subr.mxu0 0.0
        %812 = vmatpush1.msra.mxu0 0.0
        %813 = vmatprep.subr.mxu0 0.0
        %814 = vmatpush1.msra.mxu0 0.0
        %815 = vmatprep.subr.mxu0 0.0
        %816 = vmatpush1.msra.mxu0 0.0
        %817 = vmatprep.subr.mxu0 0.0
        %818 = vmatpush1.msra.mxu0 0.0
        %819 = vmatprep.subr.mxu0 0.0
        %820 = vmatpush1.msra.mxu0 0.0
        %821 = vmatprep.subr.mxu0 0.0
        %822 = vmatpush1.msra.mxu0 0.0
        %823 = vmatprep.subr.mxu0 0.0
        %824 = vmatpush1.msra.mxu0 0.0
        %825 = vmatprep.subr.mxu0 0.0
        %826 = vmatpush1.msra.mxu0 0.0
        %827 = vmatprep.subr.mxu0 0.0
        %828 = vmatpush1.msra.mxu0 0.0
        %829 = vmatprep.subr.mxu0 0.0
        %830 = vmatpush1.msra.mxu0 0.0
        %831 = vmatprep.subr.mxu0 0.0
        %832 = vmatpush1.msra.mxu0 0.0
        %833 = vmatprep.subr.mxu0 0.0
        %834 = vmatpush1.msra.mxu0 0.0
        %835 = vmatprep.subr.mxu0 0.0
        %836 = vmatpush1.msra.mxu0 0.0
        %837 = vmatprep.subr.mxu0 0.0
        %838 = vmatpush1.msra.mxu0 0.0
        %839 = vmatprep.subr.mxu0 0.0
        %840 = vmatpush1.msra.mxu0 0.0
        %841 = vmatprep.subr.mxu0 0.0
        %842 = vmatpush1.msra.mxu0 0.0
        %843 = vmatprep.mubr.f32.mxu0 0.0
        %844 = vmatmul.mubr.f32.gmra.mrb[0].mxu0 %v614
        %v845 = vpop.f32.mrb[0].mxu0
        %v846 = vadd.f32 0.0, %v845
        %v847 = vpop.f32.mrb[0].mxu0
        %v848 = vadd.f32 0.0, %v847
        %849 = vmatprep.mubr.f32.mxu0 0.0
        %850 = vmatmul.mubr.f32.gmra.mrb[0].mxu0 %v615
        %v851 = vpop.f32.mrb[0].mxu0
        %v852 = vadd.f32 0.0, %v851
        %v853 = vpop.f32.mrb[0].mxu0
        %v854 = vadd.f32 0.0, %v853
        %855 = vmatprep.mubr.f32.mxu0 0.0
        %856 = vmatmul.mubr.f32.gmra.mrb[0].mxu0 %v616
        %v857 = vpop.f32.mrb[0].mxu0
        %v858 = vadd.f32 0.0, %v857
        %v859 = vpop.f32.mrb[0].mxu0
        %v860 = vadd.f32 0.0, %v859
        %861 = vmatprep.mubr.f32.mxu0 0.0
        %862 = vmatmul.mubr.f32.gmra.mrb[0].mxu0 %v617
        %v863 = vpop.f32.mrb[0].mxu0
        %v864 = vadd.f32 0.0, %v863
        %v865 = vpop.f32.mrb[0].mxu0
        %v866 = vadd.f32 0.0, %v865
        %867 = vmatprep.mubr.f32.mxu0 0.0
        %868 = vmatmul.mubr.f32.gmra.mrb[0].mxu0 %v618
        %v869 = vpop.f32.mrb[0].mxu0
        %v870 = vadd.f32 0.0, %v869
        %v871 = vpop.f32.mrb[0].mxu0
        %v872 = vadd.f32 0.0, %v871
        %873 = vdwg.mxu0
        %874 = vmatprep.subr.mxu0 %v551
        %875 = vmatpush1.msra.mxu0 %v550
        %876 = vmatprep.subr.mxu0 %v555
        %877 = vmatpush1.msra.mxu0 %v554
        %878 = vmatprep.subr.mxu0 %v559
        %879 = vmatpush1.msra.mxu0 %v558
        %880 = vmatprep.subr.mxu0 %v563
        %881 = vmatpush1.msra.mxu0 %v562
        %882 = vmatprep.subr.mxu0 %v567
        %883 = vmatpush1.msra.mxu0 %v566
        %884 = vmatprep.subr.mxu0 %v571
        %885 = vmatpush1.msra.mxu0 %v570
        %886 = vmatprep.subr.mxu0 %v575
        %887 = vmatpush1.msra.mxu0 %v574
        %888 = vmatprep.subr.mxu0 %v579
        %889 = vmatpush1.msra.mxu0 %v578
        %890 = vmatprep.subr.mxu0 %v583
        %891 = vmatpush1.msra.mxu0 %v582
        %892 = vmatprep.subr.mxu0 %v587
        %893 = vmatpush1.msra.mxu0 %v586
        %894 = vmatprep.subr.mxu0 %v591
        %895 = vmatpush1.msra.mxu0 %v590
        %896 = vmatprep.subr.mxu0 %v595
        %897 = vmatpush1.msra.mxu0 %v594
        %898 = vmatprep.subr.mxu0 %v599
        %899 = vmatpush1.msra.mxu0 %v598
        %900 = vmatprep.subr.mxu0 %v603
        %901 = vmatpush1.msra.mxu0 %v602
        %902 = vmatprep.subr.mxu0 %v607
        %903 = vmatpush1.msra.mxu0 %v606
        %904 = vmatprep.subr.mxu0 %v611
        %905 = vmatpush1.msra.mxu0 %v610
        %906 = vmatprep.subr.mxu0 0.0
        %907 = vmatpush1.msra.mxu0 0.0
        %908 = vmatprep.subr.mxu0 0.0
        %909 = vmatpush1.msra.mxu0 0.0
        %910 = vmatprep.subr.mxu0 0.0
        %911 = vmatpush1.msra.mxu0 0.0
        %912 = vmatprep.subr.mxu0 0.0
        %913 = vmatpush1.msra.mxu0 0.0
        %914 = vmatprep.subr.mxu0 0.0
        %915 = vmatpush1.msra.mxu0 0.0
        %916 = vmatprep.subr.mxu0 0.0
        %917 = vmatpush1.msra.mxu0 0.0
        %918 = vmatprep.subr.mxu0 0.0
        %919 = vmatpush1.msra.mxu0 0.0
        %920 = vmatprep.subr.mxu0 0.0
        %921 = vmatpush1.msra.mxu0 0.0
        %922 = vmatprep.subr.mxu0 0.0
        %923 = vmatpush1.msra.mxu0 0.0
        %924 = vmatprep.subr.mxu0 0.0
        %925 = vmatpush1.msra.mxu0 0.0
        %926 = vmatprep.subr.mxu0 0.0
        %927 = vmatpush1.msra.mxu0 0.0
        %928 = vmatprep.subr.mxu0 0.0
        %929 = vmatpush1.msra.mxu0 0.0
        %930 = vmatprep.subr.mxu0 0.0
        %931 = vmatpush1.msra.mxu0 0.0
        %932 = vmatprep.subr.mxu0 0.0
        %933 = vmatpush1.msra.mxu0 0.0
        %934 = vmatprep.subr.mxu0 0.0
        %935 = vmatpush1.msra.mxu0 0.0
        %936 = vmatprep.subr.mxu0 0.0
        %937 = vmatpush1.msra.mxu0 0.0
        %938 = vmatprep.mubr.f32.mxu0 0.0
        %939 = vmatmul.mubr.f32.gmra.mrb[0].mxu0 %v545
        %v940 = vpop.f32.mrb[0].mxu0
        %v941 = vadd.f32 %v751, %v940
        %v942 = vpop.f32.mrb[0].mxu0
        %v943 = vadd.f32 %v753, %v942
        %944 = vmatprep.mubr.f32.mxu0 0.0
        %945 = vmatmul.mubr.f32.gmra.mrb[0].mxu0 %v546
        %v946 = vpop.f32.mrb[0].mxu0
        %v947 = vadd.f32 %v757, %v946
        %v948 = vpop.f32.mrb[0].mxu0
        %v949 = vadd.f32 %v759, %v948
        %950 = vmatprep.mubr.f32.mxu0 0.0
        %951 = vmatmul.mubr.f32.gmra.mrb[0].mxu0 %v547
        %v952 = vpop.f32.mrb[0].mxu0
        %v953 = vadd.f32 %v763, %v952
        %v954 = vpop.f32.mrb[0].mxu0
        %v955 = vadd.f32 %v765, %v954
        %956 = vmatprep.mubr.f32.mxu0 0.0
        %957 = vmatmul.mubr.f32.gmra.mrb[0].mxu0 %v548
        %v958 = vpop.f32.mrb[0].mxu0
        %v959 = vadd.f32 %v769, %v958
        %v960 = vpop.f32.mrb[0].mxu0
        %v961 = vadd.f32 %v771, %v960
        %962 = vmatprep.mubr.f32.mxu0 0.0
        %963 = vmatmul.mubr.f32.gmra.mrb[0].mxu0 %v549
        %v964 = vpop.f32.mrb[0].mxu0
        %v965 = vadd.f32 %v775, %v964
        %v966 = vpop.f32.mrb[0].mxu0
        %v967 = vadd.f32 %v777, %v966
        %968 = vdwg.mxu0
        %969 = vmatprep.subr.mxu0 %v553
        %970 = vmatpush1.msra.mxu0 %v552
        %971 = vmatprep.subr.mxu0 %v557
        %972 = vmatpush1.msra.mxu0 %v556
        %973 = vmatprep.subr.mxu0 %v561
        %974 = vmatpush1.msra.mxu0 %v560
        %975 = vmatprep.subr.mxu0 %v565
        %976 = vmatpush1.msra.mxu0 %v564
        %977 = vmatprep.subr.mxu0 %v569
        %978 = vmatpush1.msra.mxu0 %v568
        %979 = vmatprep.subr.mxu0 %v573
        %980 = vmatpush1.msra.mxu0 %v572
        %981 = vmatprep.subr.mxu0 %v577
        %982 = vmatpush1.msra.mxu0 %v576
        %983 = vmatprep.subr.mxu0 %v581
        %984 = vmatpush1.msra.mxu0 %v580
        %985 = vmatprep.subr.mxu0 %v585
        %986 = vmatpush1.msra.mxu0 %v584
        %987 = vmatprep.subr.mxu0 %v589
        %988 = vmatpush1.msra.mxu0 %v588
        %989 = vmatprep.subr.mxu0 %v593
        %990 = vmatpush1.msra.mxu0 %v592
        %991 = vmatprep.subr.mxu0 %v597
        %992 = vmatpush1.msra.mxu0 %v596
        %993 = vmatprep.subr.mxu0 %v601
        %994 = vmatpush1.msra.mxu0 %v600
        %995 = vmatprep.subr.mxu0 %v605
        %996 = vmatpush1.msra.mxu0 %v604
        %997 = vmatprep.subr.mxu0 %v609
        %998 = vmatpush1.msra.mxu0 %v608
        %999 = vmatprep.subr.mxu0 %v613
        %1000 = vmatpush1.msra.mxu0 %v612
        %1001 = vmatprep.subr.mxu0 0.0
        %1002 = vmatpush1.msra.mxu0 0.0
        %1003 = vmatprep.subr.mxu0 0.0
        %1004 = vmatpush1.msra.mxu0 0.0
        %1005 = vmatprep.subr.mxu0 0.0
        %1006 = vmatpush1.msra.mxu0 0.0
        %1007 = vmatprep.subr.mxu0 0.0
        %1008 = vmatpush1.msra.mxu0 0.0
        %1009 = vmatprep.subr.mxu0 0.0
        %1010 = vmatpush1.msra.mxu0 0.0
        %1011 = vmatprep.subr.mxu0 0.0
        %1012 = vmatpush1.msra.mxu0 0.0
        %1013 = vmatprep.subr.mxu0 0.0
        %1014 = vmatpush1.msra.mxu0 0.0
        %1015 = vmatprep.subr.mxu0 0.0
        %1016 = vmatpush1.msra.mxu0 0.0
        %1017 = vmatprep.subr.mxu0 0.0
        %1018 = vmatpush1.msra.mxu0 0.0
        %1019 = vmatprep.subr.mxu0 0.0
        %1020 = vmatpush1.msra.mxu0 0.0
        %1021 = vmatprep.subr.mxu0 0.0
        %1022 = vmatpush1.msra.mxu0 0.0
        %1023 = vmatprep.subr.mxu0 0.0
        %1024 = vmatpush1.msra.mxu0 0.0
        %1025 = vmatprep.subr.mxu0 0.0
        %1026 = vmatpush1.msra.mxu0 0.0
        %1027 = vmatprep.subr.mxu0 0.0
        %1028 = vmatpush1.msra.mxu0 0.0
        %1029 = vmatprep.subr.mxu0 0.0
        %1030 = vmatpush1.msra.mxu0 0.0
        %1031 = vmatprep.subr.mxu0 0.0
        %1032 = vmatpush1.msra.mxu0 0.0
        %1033 = vmatprep.mubr.f32.mxu0 0.0
        %1034 = vmatmul.mubr.f32.gmra.mrb[0].mxu0 %v545
        %v1035 = vpop.f32.mrb[0].mxu0
        %v1036 = vadd.f32 %v846, %v1035
        %v1037 = vpop.f32.mrb[0].mxu0
        %v1038 = vadd.f32 %v848, %v1037
        %1039 = vmatprep.mubr.f32.mxu0 0.0
        %1040 = vmatmul.mubr.f32.gmra.mrb[0].mxu0 %v546
        %v1041 = vpop.f32.mrb[0].mxu0
        %v1042 = vadd.f32 %v852, %v1041
        %v1043 = vpop.f32.mrb[0].mxu0
        %v1044 = vadd.f32 %v854, %v1043
        %1045 = vmatprep.mubr.f32.mxu0 0.0
        %1046 = vmatmul.mubr.f32.gmra.mrb[0].mxu0 %v547
        %v1047 = vpop.f32.mrb[0].mxu0
        %v1048 = vadd.f32 %v858, %v1047
        %v1049 = vpop.f32.mrb[0].mxu0
        %v1050 = vadd.f32 %v860, %v1049
        %1051 = vmatprep.mubr.f32.mxu0 0.0
        %1052 = vmatmul.mubr.f32.gmra.mrb[0].mxu0 %v548
        %v1053 = vpop.f32.mrb[0].mxu0
        %v1054 = vadd.f32 %v864, %v1053
        %v1055 = vpop.f32.mrb[0].mxu0
        %v1056 = vadd.f32 %v866, %v1055
        %1057 = vmatprep.mubr.f32.mxu0 0.0
        %1058 = vmatmul.mubr.f32.gmra.mrb[0].mxu0 %v549
        %v1059 = vpop.f32.mrb[0].mxu0
        %v1060 = vadd.f32 %v870, %v1059
        %v1061 = vpop.f32.mrb[0].mxu0
        %v1062 = vadd.f32 %v872, %v1061
        %1063 = vdwg.mxu0
        %v1064 = vld [vmem:[#allocation2 + $0x2] sm:$0xff]
        %v1065 = vld [vmem:[#allocation2 + $0xa] sm:$0xff]
        %v1066 = vld [vmem:[#allocation2 + $0x12] sm:$0xff]
        %v1067 = vld [vmem:[#allocation2 + $0x1a] sm:$0xff]
        %v1068 = vld [vmem:[#allocation2 + $0x22] sm:$0x3]
        %s1069 = scalar_lea.vmem [#allocation8], 1024
        %v1070 = vld [vmem:[%s1069] sm:$0xff]
        %v1071 = vld [vmem:[%s1069 + $0x8] sm:$0xff]
        %v1072 = vld [vmem:[%s1069 + $0x10] sm:$0xff]
        %v1073 = vld [vmem:[%s1069 + $0x18] sm:$0xff]
        %v1074 = vld [vmem:[%s1069 + $0x20] sm:$0xff]
        %v1075 = vld [vmem:[%s1069 + $0x28] sm:$0xff]
        %v1076 = vld [vmem:[%s1069 + $0x30] sm:$0xff]
        %v1077 = vld [vmem:[%s1069 + $0x38] sm:$0xff]
        %v1078 = vld [vmem:[%s1069 + $0x40] sm:$0xff]
        %v1079 = vld [vmem:[%s1069 + $0x48] sm:$0xff]
        %v1080 = vld [vmem:[%s1069 + $0x50] sm:$0xff]
        %v1081 = vld [vmem:[%s1069 + $0x58] sm:$0xff]
        %v1082 = vld [vmem:[%s1069 + $0x60] sm:$0xff]
        %v1083 = vld [vmem:[%s1069 + $0x68] sm:$0xff]
        %v1084 = vld [vmem:[%s1069 + $0x70] sm:$0xff]
        %v1085 = vld [vmem:[%s1069 + $0x78] sm:$0xff]
        %v1086 = vld [vmem:[%s1069 + $0x80] sm:$0xff]
        %v1087 = vld [vmem:[%s1069 + $0x88] sm:$0xff]
        %v1088 = vld [vmem:[%s1069 + $0x90] sm:$0xff]
        %v1089 = vld [vmem:[%s1069 + $0x98] sm:$0xff]
        %v1090 = vld [vmem:[%s1069 + $0xa0] sm:$0xff]
        %v1091 = vld [vmem:[%s1069 + $0xa8] sm:$0xff]
        %v1092 = vld [vmem:[%s1069 + $0xb0] sm:$0xff]
        %v1093 = vld [vmem:[%s1069 + $0xb8] sm:$0xff]
        %v1094 = vld [vmem:[%s1069 + $0xc0] sm:$0xff]
        %v1095 = vld [vmem:[%s1069 + $0xc8] sm:$0xff]
        %v1096 = vld [vmem:[%s1069 + $0xd0] sm:$0xff]
        %v1097 = vld [vmem:[%s1069 + $0xd8] sm:$0xff]
        %v1098 = vld [vmem:[%s1069 + $0xe0] sm:$0xff]
        %v1099 = vld [vmem:[%s1069 + $0xe8] sm:$0xff]
        %v1100 = vld [vmem:[%s1069 + $0xf0] sm:$0xff]
        %v1101 = vld [vmem:[%s1069 + $0xf8] sm:$0xff]
        %v1102 = vld [vmem:[%s1069 + $0x100] sm:$0xff]
        %v1103 = vld [vmem:[%s1069 + $0x108] sm:$0xff]
        %v1104 = vld [vmem:[%s1069 + $0x110] sm:$0xff]
        %v1105 = vld [vmem:[%s1069 + $0x118] sm:$0xff]
        %v1106 = vld [vmem:[%s1069 + $0x120] sm:$0xff]
        %v1107 = vld [vmem:[%s1069 + $0x128] sm:$0xff]
        %v1108 = vld [vmem:[%s1069 + $0x130] sm:$0xff]
        %v1109 = vld [vmem:[%s1069 + $0x138] sm:$0xff]
        %v1110 = vld [vmem:[%s1069 + $0x140] sm:$0xff]
        %v1111 = vld [vmem:[%s1069 + $0x148] sm:$0xff]
        %v1112 = vld [vmem:[%s1069 + $0x150] sm:$0xff]
        %v1113 = vld [vmem:[%s1069 + $0x158] sm:$0xff]
        %v1114 = vld [vmem:[%s1069 + $0x160] sm:$0xff]
        %v1115 = vld [vmem:[%s1069 + $0x168] sm:$0xff]
        %v1116 = vld [vmem:[%s1069 + $0x170] sm:$0xff]
        %v1117 = vld [vmem:[%s1069 + $0x178] sm:$0xff]
        %v1118 = vld [vmem:[%s1069 + $0x180] sm:$0xff]
        %v1119 = vld [vmem:[%s1069 + $0x188] sm:$0xff]
        %v1120 = vld [vmem:[%s1069 + $0x190] sm:$0xff]
        %v1121 = vld [vmem:[%s1069 + $0x198] sm:$0xff]
        %v1122 = vld [vmem:[%s1069 + $0x1a0] sm:$0xff]
        %v1123 = vld [vmem:[%s1069 + $0x1a8] sm:$0xff]
        %v1124 = vld [vmem:[%s1069 + $0x1b0] sm:$0xff]
        %v1125 = vld [vmem:[%s1069 + $0x1b8] sm:$0xff]
        %v1126 = vld [vmem:[%s1069 + $0x1c0] sm:$0xff]
        %v1127 = vld [vmem:[%s1069 + $0x1c8] sm:$0xff]
        %v1128 = vld [vmem:[%s1069 + $0x1d0] sm:$0xff]
        %v1129 = vld [vmem:[%s1069 + $0x1d8] sm:$0xff]
        %v1130 = vld [vmem:[%s1069 + $0x1e0] sm:$0xff]
        %v1131 = vld [vmem:[%s1069 + $0x1e8] sm:$0xff]
        %v1132 = vld [vmem:[%s1069 + $0x1f0] sm:$0xff]
        %v1133 = vld [vmem:[%s1069 + $0x1f8] sm:$0xff]
        %1134 = vmatprep.subr.mxu0 %v1071
        %1135 = vmatpush1.msra.mxu0 %v1070
        %1136 = vmatprep.subr.mxu0 %v1075
        %1137 = vmatpush1.msra.mxu0 %v1074
        %1138 = vmatprep.subr.mxu0 %v1079
        %1139 = vmatpush1.msra.mxu0 %v1078
        %1140 = vmatprep.subr.mxu0 %v1083
        %1141 = vmatpush1.msra.mxu0 %v1082
        %1142 = vmatprep.subr.mxu0 %v1087
        %1143 = vmatpush1.msra.mxu0 %v1086
        %1144 = vmatprep.subr.mxu0 %v1091
        %1145 = vmatpush1.msra.mxu0 %v1090
        %1146 = vmatprep.subr.mxu0 %v1095
        %1147 = vmatpush1.msra.mxu0 %v1094
        %1148 = vmatprep.subr.mxu0 %v1099
        %1149 = vmatpush1.msra.mxu0 %v1098
        %1150 = vmatprep.subr.mxu0 %v1103
        %1151 = vmatpush1.msra.mxu0 %v1102
        %1152 = vmatprep.subr.mxu0 %v1107
        %1153 = vmatpush1.msra.mxu0 %v1106
        %1154 = vmatprep.subr.mxu0 %v1111
        %1155 = vmatpush1.msra.mxu0 %v1110
        %1156 = vmatprep.subr.mxu0 %v1115
        %1157 = vmatpush1.msra.mxu0 %v1114
        %1158 = vmatprep.subr.mxu0 %v1119
        %1159 = vmatpush1.msra.mxu0 %v1118
        %1160 = vmatprep.subr.mxu0 %v1123
        %1161 = vmatpush1.msra.mxu0 %v1122
        %1162 = vmatprep.subr.mxu0 %v1127
        %1163 = vmatpush1.msra.mxu0 %v1126
        %1164 = vmatprep.subr.mxu0 %v1131
        %1165 = vmatpush1.msra.mxu0 %v1130
        %1166 = vmatprep.subr.mxu0 0.0
        %1167 = vmatpush1.msra.mxu0 0.0
        %1168 = vmatprep.subr.mxu0 0.0
        %1169 = vmatpush1.msra.mxu0 0.0
        %1170 = vmatprep.subr.mxu0 0.0
        %1171 = vmatpush1.msra.mxu0 0.0
        %1172 = vmatprep.subr.mxu0 0.0
        %1173 = vmatpush1.msra.mxu0 0.0
        %1174 = vmatprep.subr.mxu0 0.0
        %1175 = vmatpush1.msra.mxu0 0.0
        %1176 = vmatprep.subr.mxu0 0.0
        %1177 = vmatpush1.msra.mxu0 0.0
        %1178 = vmatprep.subr.mxu0 0.0
        %1179 = vmatpush1.msra.mxu0 0.0
        %1180 = vmatprep.subr.mxu0 0.0
        %1181 = vmatpush1.msra.mxu0 0.0
        %1182 = vmatprep.subr.mxu0 0.0
        %1183 = vmatpush1.msra.mxu0 0.0
        %1184 = vmatprep.subr.mxu0 0.0
        %1185 = vmatpush1.msra.mxu0 0.0
        %1186 = vmatprep.subr.mxu0 0.0
        %1187 = vmatpush1.msra.mxu0 0.0
        %1188 = vmatprep.subr.mxu0 0.0
        %1189 = vmatpush1.msra.mxu0 0.0
        %1190 = vmatprep.subr.mxu0 0.0
        %1191 = vmatpush1.msra.mxu0 0.0
        %1192 = vmatprep.subr.mxu0 0.0
        %1193 = vmatpush1.msra.mxu0 0.0
        %1194 = vmatprep.subr.mxu0 0.0
        %1195 = vmatpush1.msra.mxu0 0.0
        %1196 = vmatprep.subr.mxu0 0.0
        %1197 = vmatpush1.msra.mxu0 0.0
        %1198 = vmatprep.mubr.f32.mxu0 0.0
        %1199 = vmatmul.mubr.f32.gmra.mrb[0].mxu0 %v1064
        %v1200 = vpop.f32.mrb[0].mxu0
        %v1201 = vadd.f32 0.0, %v1200
        %v1202 = vpop.f32.mrb[0].mxu0
        %v1203 = vadd.f32 0.0, %v1202
        %1204 = vmatprep.mubr.f32.mxu0 0.0
        %1205 = vmatmul.mubr.f32.gmra.mrb[0].mxu0 %v1065
        %v1206 = vpop.f32.mrb[0].mxu0
        %v1207 = vadd.f32 0.0, %v1206
        %v1208 = vpop.f32.mrb[0].mxu0
        %v1209 = vadd.f32 0.0, %v1208
        %1210 = vmatprep.mubr.f32.mxu0 0.0
        %1211 = vmatmul.mubr.f32.gmra.mrb[0].mxu0 %v1066
        %v1212 = vpop.f32.mrb[0].mxu0
        %v1213 = vadd.f32 0.0, %v1212
        %v1214 = vpop.f32.mrb[0].mxu0
        %v1215 = vadd.f32 0.0, %v1214
        %1216 = vmatprep.mubr.f32.mxu0 0.0
        %1217 = vmatmul.mubr.f32.gmra.mrb[0].mxu0 %v1067
        %v1218 = vpop.f32.mrb[0].mxu0
        %v1219 = vadd.f32 0.0, %v1218
        %v1220 = vpop.f32.mrb[0].mxu0
        %v1221 = vadd.f32 0.0, %v1220
        %1222 = vmatprep.mubr.f32.mxu0 0.0
        %1223 = vmatmul.mubr.f32.gmra.mrb[0].mxu0 %v1068
        %v1224 = vpop.f32.mrb[0].mxu0
        %v1225 = vadd.f32 0.0, %v1224
        %v1226 = vpop.f32.mrb[0].mxu0
        %v1227 = vadd.f32 0.0, %v1226
        %1228 = vdwg.mxu0
        %1229 = vmatprep.subr.mxu0 %v1073
        %1230 = vmatpush1.msra.mxu0 %v1072
        %1231 = vmatprep.subr.mxu0 %v1077
        %1232 = vmatpush1.msra.mxu0 %v1076
        %1233 = vmatprep.subr.mxu0 %v1081
        %1234 = vmatpush1.msra.mxu0 %v1080
        %1235 = vmatprep.subr.mxu0 %v1085
        %1236 = vmatpush1.msra.mxu0 %v1084
        %1237 = vmatprep.subr.mxu0 %v1089
        %1238 = vmatpush1.msra.mxu0 %v1088
        %1239 = vmatprep.subr.mxu0 %v1093
        %1240 = vmatpush1.msra.mxu0 %v1092
        %1241 = vmatprep.subr.mxu0 %v1097
        %1242 = vmatpush1.msra.mxu0 %v1096
        %1243 = vmatprep.subr.mxu0 %v1101
        %1244 = vmatpush1.msra.mxu0 %v1100
        %1245 = vmatprep.subr.mxu0 %v1105
        %1246 = vmatpush1.msra.mxu0 %v1104
        %1247 = vmatprep.subr.mxu0 %v1109
        %1248 = vmatpush1.msra.mxu0 %v1108
        %1249 = vmatprep.subr.mxu0 %v1113
        %1250 = vmatpush1.msra.mxu0 %v1112
        %1251 = vmatprep.subr.mxu0 %v1117
        %1252 = vmatpush1.msra.mxu0 %v1116
        %1253 = vmatprep.subr.mxu0 %v1121
        %1254 = vmatpush1.msra.mxu0 %v1120
        %1255 = vmatprep.subr.mxu0 %v1125
        %1256 = vmatpush1.msra.mxu0 %v1124
        %1257 = vmatprep.subr.mxu0 %v1129
        %1258 = vmatpush1.msra.mxu0 %v1128
        %1259 = vmatprep.subr.mxu0 %v1133
        %1260 = vmatpush1.msra.mxu0 %v1132
        %1261 = vmatprep.subr.mxu0 0.0
        %1262 = vmatpush1.msra.mxu0 0.0
        %1263 = vmatprep.subr.mxu0 0.0
        %1264 = vmatpush1.msra.mxu0 0.0
        %1265 = vmatprep.subr.mxu0 0.0
        %1266 = vmatpush1.msra.mxu0 0.0
        %1267 = vmatprep.subr.mxu0 0.0
        %1268 = vmatpush1.msra.mxu0 0.0
        %1269 = vmatprep.subr.mxu0 0.0
        %1270 = vmatpush1.msra.mxu0 0.0
        %1271 = vmatprep.subr.mxu0 0.0
        %1272 = vmatpush1.msra.mxu0 0.0
        %1273 = vmatprep.subr.mxu0 0.0
        %1274 = vmatpush1.msra.mxu0 0.0
        %1275 = vmatprep.subr.mxu0 0.0
        %1276 = vmatpush1.msra.mxu0 0.0
        %1277 = vmatprep.subr.mxu0 0.0
        %1278 = vmatpush1.msra.mxu0 0.0
        %1279 = vmatprep.subr.mxu0 0.0
        %1280 = vmatpush1.msra.mxu0 0.0
        %1281 = vmatprep.subr.mxu0 0.0
        %1282 = vmatpush1.msra.mxu0 0.0
        %1283 = vmatprep.subr.mxu0 0.0
        %1284 = vmatpush1.msra.mxu0 0.0
        %1285 = vmatprep.subr.mxu0 0.0
        %1286 = vmatpush1.msra.mxu0 0.0
        %1287 = vmatprep.subr.mxu0 0.0
        %1288 = vmatpush1.msra.mxu0 0.0
        %1289 = vmatprep.subr.mxu0 0.0
        %1290 = vmatpush1.msra.mxu0 0.0
        %1291 = vmatprep.subr.mxu0 0.0
        %1292 = vmatpush1.msra.mxu0 0.0
        %1293 = vmatprep.mubr.f32.mxu0 0.0
        %1294 = vmatmul.mubr.f32.gmra.mrb[0].mxu0 %v1064
        %v1295 = vpop.f32.mrb[0].mxu0
        %v1296 = vadd.f32 0.0, %v1295
        %v1297 = vpop.f32.mrb[0].mxu0
        %v1298 = vadd.f32 0.0, %v1297
        %1299 = vmatprep.mubr.f32.mxu0 0.0
        %1300 = vmatmul.mubr.f32.gmra.mrb[0].mxu0 %v1065
        %v1301 = vpop.f32.mrb[0].mxu0
        %v1302 = vadd.f32 0.0, %v1301
        %v1303 = vpop.f32.mrb[0].mxu0
        %v1304 = vadd.f32 0.0, %v1303
        %1305 = vmatprep.mubr.f32.mxu0 0.0
        %1306 = vmatmul.mubr.f32.gmra.mrb[0].mxu0 %v1066
        %v1307 = vpop.f32.mrb[0].mxu0
        %v1308 = vadd.f32 0.0, %v1307
        %v1309 = vpop.f32.mrb[0].mxu0
        %v1310 = vadd.f32 0.0, %v1309
        %1311 = vmatprep.mubr.f32.mxu0 0.0
        %1312 = vmatmul.mubr.f32.gmra.mrb[0].mxu0 %v1067
        %v1313 = vpop.f32.mrb[0].mxu0
        %v1314 = vadd.f32 0.0, %v1313
        %v1315 = vpop.f32.mrb[0].mxu0
        %v1316 = vadd.f32 0.0, %v1315
        %1317 = vmatprep.mubr.f32.mxu0 0.0
        %1318 = vmatmul.mubr.f32.gmra.mrb[0].mxu0 %v1068
        %v1319 = vpop.f32.mrb[0].mxu0
        %v1320 = vadd.f32 0.0, %v1319
        %v1321 = vpop.f32.mrb[0].mxu0
        %v1322 = vadd.f32 0.0, %v1321
        %1323 = vdwg.mxu0
        %v1324 = vadd.f32 %v941, %v1201
        %v1325 = vadd.f32 %v943, %v1203
        %v1326 = vadd.f32 %v1036, %v1296
        %v1327 = vadd.f32 %v1038, %v1298
        %v1328 = vadd.f32 %v947, %v1207
        %v1329 = vadd.f32 %v949, %v1209
        %v1330 = vadd.f32 %v1042, %v1302
        %v1331 = vadd.f32 %v1044, %v1304
        %v1332 = vadd.f32 %v953, %v1213
        %v1333 = vadd.f32 %v955, %v1215
        %v1334 = vadd.f32 %v1048, %v1308
        %v1335 = vadd.f32 %v1050, %v1310
        %v1336 = vadd.f32 %v959, %v1219
        %v1337 = vadd.f32 %v961, %v1221
        %v1338 = vadd.f32 %v1054, %v1314
        %v1339 = vadd.f32 %v1056, %v1316
        %v1340 = vadd.f32 %v965, %v1225
        %v1341 = vadd.f32 %v967, %v1227
        %v1342 = vadd.f32 %v1060, %v1320
        %v1343 = vadd.f32 %v1062, %v1322
        %v1344 = vld [vmem:[#allocation10] sm:$0xf]
        %v1346 = vlaneseq
        %v1347 = vshrl.u32 %v1346, 7
        %v1348 = vsub.s32 0, %v1347
        %v1349 = vrot.slane %v1344, %v1348
        %v1350 = vlaneseq
        %v1351 = vshrl.u32 %v1350, 7
        %v1352 = vsub.s32 1, %v1351
        %v1353 = vrot.slane %v1344, %v1352
        %v1354 = vlaneseq
        %v1355 = vshrl.u32 %v1354, 7
        %v1356 = vsub.s32 2, %v1355
        %v1357 = vrot.slane %v1344, %v1356
        %v1358 = vlaneseq
        %v1359 = vshrl.u32 %v1358, 7
        %v1360 = vsub.s32 3, %v1359
        %v1361 = vrot.slane %v1344, %v1360
        %v1366 = vadd.f32 %v1324, %v1349
        %v1367 = vadd.f32 %v1325, %v1353
        %v1368 = vadd.f32 %v1326, %v1357
        %v1369 = vadd.f32 %v1327, %v1361
        %v1370 = vadd.f32 %v1328, %v1349
        %v1371 = vadd.f32 %v1329, %v1353
        %v1372 = vadd.f32 %v1330, %v1357
        %v1373 = vadd.f32 %v1331, %v1361
        %v1374 = vadd.f32 %v1332, %v1349
        %v1375 = vadd.f32 %v1333, %v1353
        %v1376 = vadd.f32 %v1334, %v1357
        %v1377 = vadd.f32 %v1335, %v1361
        %v1378 = vadd.f32 %v1336, %v1349
        %v1379 = vadd.f32 %v1337, %v1353
        %v1380 = vadd.f32 %v1338, %v1357
        %v1381 = vadd.f32 %v1339, %v1361
        %v1382 = vadd.f32 %v1340, %v1349
        %v1383 = vadd.f32 %v1341, %v1353
        %v1384 = vadd.f32 %v1342, %v1357
        %v1385 = vadd.f32 %v1343, %v1361
        %v1386 = vmax.f32 %v1366, 0.0
        %v1387 = vmax.f32 %v1367, 0.0
        %v1388 = vmax.f32 %v1368, 0.0
        %v1389 = vmax.f32 %v1369, 0.0
        %v1390 = vmax.f32 %v1370, 0.0
        %v1391 = vmax.f32 %v1371, 0.0
        %v1392 = vmax.f32 %v1372, 0.0
        %v1393 = vmax.f32 %v1373, 0.0
        %v1394 = vmax.f32 %v1374, 0.0
        %v1395 = vmax.f32 %v1375, 0.0
        %v1396 = vmax.f32 %v1376, 0.0
        %v1397 = vmax.f32 %v1377, 0.0
        %v1398 = vmax.f32 %v1378, 0.0
        %v1399 = vmax.f32 %v1379, 0.0
        %v1400 = vmax.f32 %v1380, 0.0
        %v1401 = vmax.f32 %v1381, 0.0
        %v1402 = vmax.f32 %v1382, 0.0
        %v1403 = vmax.f32 %v1383, 0.0
        %v1404 = vmax.f32 %v1384, 0.0
        %v1405 = vmax.f32 %v1385, 0.0
        %vm1426 = vcmask 1040384
        %v1427 = vrot.slane %v1386, 7
        %v1428 = vrot.slane %v1387, 7
        %v1429 = vrot.slane %v1388, 7
        %v1430 = vrot.slane %v1389, 7
        %v1431 = vrot.slane %v1390, 7
        %v1432 = vsel %vm1426, %v1427, %v1431
        %v1433 = vrot.slane %v1391, 7
        %v1434 = vsel %vm1426, %v1428, %v1433
        %v1435 = vrot.slane %v1392, 7
        %v1436 = vsel %vm1426, %v1429, %v1435
        %v1437 = vrot.slane %v1393, 7
        %v1438 = vsel %vm1426, %v1430, %v1437
        %v1439 = vrot.slane %v1394, 7
        %v1440 = vsel %vm1426, %v1431, %v1439
        %v1441 = vrot.slane %v1395, 7
        %v1442 = vsel %vm1426, %v1433, %v1441
        %v1443 = vrot.slane %v1396, 7
        %v1444 = vsel %vm1426, %v1435, %v1443
        %v1445 = vrot.slane %v1397, 7
        %v1446 = vsel %vm1426, %v1437, %v1445
        %v1447 = vrot.slane %v1398, 7
        %v1448 = vsel %vm1426, %v1439, %v1447
        %v1449 = vrot.slane %v1399, 7
        %v1450 = vsel %vm1426, %v1441, %v1449
        %v1451 = vrot.slane %v1400, 7
        %v1452 = vsel %vm1426, %v1443, %v1451
        %v1453 = vrot.slane %v1401, 7
        %v1454 = vsel %vm1426, %v1445, %v1453
        %v1455 = vrot.slane %v1402, 7
        %v1456 = vsel %vm1426, %v1447, %v1455
        %v1457 = vrot.slane %v1403, 7
        %v1458 = vsel %vm1426, %v1449, %v1457
        %v1459 = vrot.slane %v1404, 7
        %v1460 = vsel %vm1426, %v1451, %v1459
        %v1461 = vrot.slane %v1405, 7
        %v1462 = vsel %vm1426, %v1453, %v1461
        %1483 = vst [vmem:[#allocation3] sm:$0xfe] %v1427
        %1484 = vst [vmem:[#allocation3 + $0x8] sm:$0xfe] %v1428
        %1485 = vst [vmem:[#allocation3 + $0x10] sm:$0xfe] %v1429
        %1486 = vst [vmem:[#allocation3 + $0x18] sm:$0xfe] %v1430
        %1487 = vst [vmem:[#allocation3 + $0x20] sm:$0xff] %v1432
        %1488 = vst [vmem:[#allocation3 + $0x28] sm:$0xff] %v1434
        %1489 = vst [vmem:[#allocation3 + $0x30] sm:$0xff] %v1436
        %1490 = vst [vmem:[#allocation3 + $0x38] sm:$0xff] %v1438
        %1491 = vst [vmem:[#allocation3 + $0x40] sm:$0xff] %v1440
        %1492 = vst [vmem:[#allocation3 + $0x48] sm:$0xff] %v1442
        %1493 = vst [vmem:[#allocation3 + $0x50] sm:$0xff] %v1444
        %1494 = vst [vmem:[#allocation3 + $0x58] sm:$0xff] %v1446
        %1495 = vst [vmem:[#allocation3 + $0x60] sm:$0xff] %v1448
        %1496 = vst [vmem:[#allocation3 + $0x68] sm:$0xff] %v1450
        %1497 = vst [vmem:[#allocation3 + $0x70] sm:$0xff] %v1452
        %1498 = vst [vmem:[#allocation3 + $0x78] sm:$0xff] %v1454
        %1499 = vst [vmem:[#allocation3 + $0x80] sm:$0x7] %v1456
        %1500 = vst [vmem:[#allocation3 + $0x88] sm:$0x7] %v1458
        %1501 = vst [vmem:[#allocation3 + $0x90] sm:$0x7] %v1460
        %1502 = vst [vmem:[#allocation3 + $0x98] sm:$0x7] %v1462
        %v1503 = vlaneseq
        %vm1504 = vcmp.ge.s32.totalorder %v1503, 0
        %vm1505 = vcmp.lt.s32.totalorder %v1503, 512
        %vm1506 = vmand %vm1504, %vm1505
        %1507 = vst.msk [vmem:[#allocation3] ss:$8 sm:$0xf] %vm1506, 0.0
        %1508 = vst.msk [vmem:[#allocation3] ss:$8 sm:$0x0] %vm1506, 0.0
        %s1509 = scalar_lea.vmem [#allocation3], 65
        %1510 = vst.msk [vmem:[%s1509] ss:$8 sm:$0xf] %vm1506, 0.0
        %1511 = vst.msk [vmem:[%s1509] ss:$8 sm:$0x0] %vm1506, 0.0
        %s1512 = scalar_lea.vmem [#allocation3], 66
        %1513 = vst.msk [vmem:[%s1512] ss:$8 sm:$0xf] %vm1506, 0.0
        %1514 = vst.msk [vmem:[%s1512] ss:$8 sm:$0x0] %vm1506, 0.0
        %s1515 = scalar_lea.vmem [#allocation3], 131
        %1516 = vst.msk [vmem:[%s1515] ss:$8 sm:$0xf] %vm1506, 0.0
        %1517 = vst.msk [vmem:[%s1515] ss:$8 sm:$0x0] %vm1506, 0.0
        %v1518 = vld [vmem:[#allocation3] sm:$0xff]
        %v1519 = vld [vmem:[#allocation3 + $0x8] sm:$0xff]
        %v1520 = vld [vmem:[#allocation3 + $0x10] sm:$0xff]
        %v1521 = vld [vmem:[#allocation3 + $0x18] sm:$0xff]
        %v1522 = vld [vmem:[#allocation3 + $0x20] sm:$0xff]
        %v1523 = vld [vmem:[#allocation3 + $0x28] sm:$0xff]
        %v1524 = vld [vmem:[#allocation3 + $0x30] sm:$0xff]
        %v1525 = vld [vmem:[#allocation3 + $0x38] sm:$0xff]
        %v1526 = vld [vmem:[#allocation3 + $0x40] sm:$0xff]
        %v1527 = vld [vmem:[#allocation3 + $0x48] sm:$0xff]
        %v1528 = vld [vmem:[#allocation3 + $0x50] sm:$0xff]
        %v1529 = vld [vmem:[#allocation3 + $0x58] sm:$0xff]
        %v1530 = vld [vmem:[#allocation3 + $0x60] sm:$0xff]
        %v1531 = vld [vmem:[#allocation3 + $0x68] sm:$0xff]
        %v1532 = vld [vmem:[#allocation3 + $0x70] sm:$0xff]
        %v1533 = vld [vmem:[#allocation3 + $0x78] sm:$0xff]
        %v1534 = vld [vmem:[#allocation3 + $0x80] sm:$0x3]
        %v1535 = vld [vmem:[#allocation3 + $0x88] sm:$0x3]
        %v1536 = vld [vmem:[#allocation3 + $0x90] sm:$0x3]
        %v1537 = vld [vmem:[#allocation3 + $0x98] sm:$0x3]
        %v1538 = vld [vmem:[#allocation11] sm:$0xff]
        %v1539 = vld [vmem:[#allocation11 + $0x8] sm:$0xff]
        %v1540 = vld [vmem:[#allocation11 + $0x10] sm:$0xff]
        %v1541 = vld [vmem:[#allocation11 + $0x18] sm:$0xff]
        %v1542 = vld [vmem:[#allocation11 + $0x20] sm:$0xff]
        %v1543 = vld [vmem:[#allocation11 + $0x28] sm:$0xff]
        %v1544 = vld [vmem:[#allocation11 + $0x30] sm:$0xff]
        %v1545 = vld [vmem:[#allocation11 + $0x38] sm:$0xff]
        %v1546 = vld [vmem:[#allocation11 + $0x40] sm:$0xff]
        %v1547 = vld [vmem:[#allocation11 + $0x48] sm:$0xff]
        %v1548 = vld [vmem:[#allocation11 + $0x50] sm:$0xff]
        %v1549 = vld [vmem:[#allocation11 + $0x58] sm:$0xff]
        %v1550 = vld [vmem:[#allocation11 + $0x60] sm:$0xff]
        %v1551 = vld [vmem:[#allocation11 + $0x68] sm:$0xff]
        %v1552 = vld [vmem:[#allocation11 + $0x70] sm:$0xff]
        %v1553 = vld [vmem:[#allocation11 + $0x78] sm:$0xff]
        %v1554 = vld [vmem:[#allocation11 + $0x80] sm:$0xff]
        %v1555 = vld [vmem:[#allocation11 + $0x88] sm:$0xff]
        %v1556 = vld [vmem:[#allocation11 + $0x90] sm:$0xff]
        %v1557 = vld [vmem:[#allocation11 + $0x98] sm:$0xff]
        %v1558 = vld [vmem:[#allocation11 + $0xa0] sm:$0xff]
        %v1559 = vld [vmem:[#allocation11 + $0xa8] sm:$0xff]
        %v1560 = vld [vmem:[#allocation11 + $0xb0] sm:$0xff]
        %v1561 = vld [vmem:[#allocation11 + $0xb8] sm:$0xff]
        %v1562 = vld [vmem:[#allocation11 + $0xc0] sm:$0xff]
        %v1563 = vld [vmem:[#allocation11 + $0xc8] sm:$0xff]
        %v1564 = vld [vmem:[#allocation11 + $0xd0] sm:$0xff]
        %v1565 = vld [vmem:[#allocation11 + $0xd8] sm:$0xff]
        %v1566 = vld [vmem:[#allocation11 + $0xe0] sm:$0xff]
        %v1567 = vld [vmem:[#allocation11 + $0xe8] sm:$0xff]
        %v1568 = vld [vmem:[#allocation11 + $0xf0] sm:$0xff]
        %v1569 = vld [vmem:[#allocation11 + $0xf8] sm:$0xff]
        %v1570 = vld [vmem:[#allocation11 + $0x100] sm:$0xff]
        %v1571 = vld [vmem:[#allocation11 + $0x108] sm:$0xff]
        %v1572 = vld [vmem:[#allocation11 + $0x110] sm:$0xff]
        %v1573 = vld [vmem:[#allocation11 + $0x118] sm:$0xff]
        %v1574 = vld [vmem:[#allocation11 + $0x120] sm:$0xff]
        %v1575 = vld [vmem:[#allocation11 + $0x128] sm:$0xff]
        %v1576 = vld [vmem:[#allocation11 + $0x130] sm:$0xff]
        %v1577 = vld [vmem:[#allocation11 + $0x138] sm:$0xff]
        %v1578 = vld [vmem:[#allocation11 + $0x140] sm:$0xff]
        %v1579 = vld [vmem:[#allocation11 + $0x148] sm:$0xff]
        %v1580 = vld [vmem:[#allocation11 + $0x150] sm:$0xff]
        %v1581 = vld [vmem:[#allocation11 + $0x158] sm:$0xff]
        %v1582 = vld [vmem:[#allocation11 + $0x160] sm:$0xff]
        %v1583 = vld [vmem:[#allocation11 + $0x168] sm:$0xff]
        %v1584 = vld [vmem:[#allocation11 + $0x170] sm:$0xff]
        %v1585 = vld [vmem:[#allocation11 + $0x178] sm:$0xff]
        %v1586 = vld [vmem:[#allocation11 + $0x180] sm:$0xff]
        %v1587 = vld [vmem:[#allocation11 + $0x188] sm:$0xff]
        %v1588 = vld [vmem:[#allocation11 + $0x190] sm:$0xff]
        %v1589 = vld [vmem:[#allocation11 + $0x198] sm:$0xff]
        %v1590 = vld [vmem:[#allocation11 + $0x1a0] sm:$0xff]
        %v1591 = vld [vmem:[#allocation11 + $0x1a8] sm:$0xff]
        %v1592 = vld [vmem:[#allocation11 + $0x1b0] sm:$0xff]
        %v1593 = vld [vmem:[#allocation11 + $0x1b8] sm:$0xff]
        %v1594 = vld [vmem:[#allocation11 + $0x1c0] sm:$0xff]
        %v1595 = vld [vmem:[#allocation11 + $0x1c8] sm:$0xff]
        %v1596 = vld [vmem:[#allocation11 + $0x1d0] sm:$0xff]
        %v1597 = vld [vmem:[#allocation11 + $0x1d8] sm:$0xff]
        %v1598 = vld [vmem:[#allocation11 + $0x1e0] sm:$0xff]
        %v1599 = vld [vmem:[#allocation11 + $0x1e8] sm:$0xff]
        %v1600 = vld [vmem:[#allocation11 + $0x1f0] sm:$0xff]
        %v1601 = vld [vmem:[#allocation11 + $0x1f8] sm:$0xff]
        %v1602 = vld [vmem:[#allocation11 + $0x200] sm:$0xff]
        %v1603 = vld [vmem:[#allocation11 + $0x208] sm:$0xff]
        %v1604 = vld [vmem:[#allocation11 + $0x210] sm:$0xff]
        %v1605 = vld [vmem:[#allocation11 + $0x218] sm:$0xff]
        %v1606 = vld [vmem:[#allocation11 + $0x220] sm:$0xff]
        %v1607 = vld [vmem:[#allocation11 + $0x228] sm:$0xff]
        %v1608 = vld [vmem:[#allocation11 + $0x230] sm:$0xff]
        %v1609 = vld [vmem:[#allocation11 + $0x238] sm:$0xff]
        %v1610 = vld [vmem:[#allocation11 + $0x240] sm:$0xff]
        %v1611 = vld [vmem:[#allocation11 + $0x248] sm:$0xff]
        %v1612 = vld [vmem:[#allocation11 + $0x250] sm:$0xff]
        %v1613 = vld [vmem:[#allocation11 + $0x258] sm:$0xff]
        %v1614 = vld [vmem:[#allocation11 + $0x260] sm:$0xff]
        %v1615 = vld [vmem:[#allocation11 + $0x268] sm:$0xff]
        %v1616 = vld [vmem:[#allocation11 + $0x270] sm:$0xff]
        %v1617 = vld [vmem:[#allocation11 + $0x278] sm:$0xff]
        %v1618 = vld [vmem:[#allocation11 + $0x280] sm:$0xff]
        %v1619 = vld [vmem:[#allocation11 + $0x288] sm:$0xff]
        %v1620 = vld [vmem:[#allocation11 + $0x290] sm:$0xff]
        %v1621 = vld [vmem:[#allocation11 + $0x298] sm:$0xff]
        %v1622 = vld [vmem:[#allocation11 + $0x2a0] sm:$0xff]
        %v1623 = vld [vmem:[#allocation11 + $0x2a8] sm:$0xff]
        %v1624 = vld [vmem:[#allocation11 + $0x2b0] sm:$0xff]
        %v1625 = vld [vmem:[#allocation11 + $0x2b8] sm:$0xff]
        %v1626 = vld [vmem:[#allocation11 + $0x2c0] sm:$0xff]
        %v1627 = vld [vmem:[#allocation11 + $0x2c8] sm:$0xff]
        %v1628 = vld [vmem:[#allocation11 + $0x2d0] sm:$0xff]
        %v1629 = vld [vmem:[#allocation11 + $0x2d8] sm:$0xff]
        %v1630 = vld [vmem:[#allocation11 + $0x2e0] sm:$0xff]
        %v1631 = vld [vmem:[#allocation11 + $0x2e8] sm:$0xff]
        %v1632 = vld [vmem:[#allocation11 + $0x2f0] sm:$0xff]
        %v1633 = vld [vmem:[#allocation11 + $0x2f8] sm:$0xff]
        %v1634 = vld [vmem:[#allocation11 + $0x300] sm:$0xff]
        %v1635 = vld [vmem:[#allocation11 + $0x308] sm:$0xff]
        %v1636 = vld [vmem:[#allocation11 + $0x310] sm:$0xff]
        %v1637 = vld [vmem:[#allocation11 + $0x318] sm:$0xff]
        %v1638 = vld [vmem:[#allocation11 + $0x320] sm:$0xff]
        %v1639 = vld [vmem:[#allocation11 + $0x328] sm:$0xff]
        %v1640 = vld [vmem:[#allocation11 + $0x330] sm:$0xff]
        %v1641 = vld [vmem:[#allocation11 + $0x338] sm:$0xff]
        %v1642 = vld [vmem:[#allocation11 + $0x340] sm:$0xff]
        %v1643 = vld [vmem:[#allocation11 + $0x348] sm:$0xff]
        %v1644 = vld [vmem:[#allocation11 + $0x350] sm:$0xff]
        %v1645 = vld [vmem:[#allocation11 + $0x358] sm:$0xff]
        %v1646 = vld [vmem:[#allocation11 + $0x360] sm:$0xff]
        %v1647 = vld [vmem:[#allocation11 + $0x368] sm:$0xff]
        %v1648 = vld [vmem:[#allocation11 + $0x370] sm:$0xff]
        %v1649 = vld [vmem:[#allocation11 + $0x378] sm:$0xff]
        %v1650 = vld [vmem:[#allocation11 + $0x380] sm:$0xff]
        %v1651 = vld [vmem:[#allocation11 + $0x388] sm:$0xff]
        %v1652 = vld [vmem:[#allocation11 + $0x390] sm:$0xff]
        %v1653 = vld [vmem:[#allocation11 + $0x398] sm:$0xff]
        %v1654 = vld [vmem:[#allocation11 + $0x3a0] sm:$0xff]
        %v1655 = vld [vmem:[#allocation11 + $0x3a8] sm:$0xff]
        %v1656 = vld [vmem:[#allocation11 + $0x3b0] sm:$0xff]
        %v1657 = vld [vmem:[#allocation11 + $0x3b8] sm:$0xff]
        %v1658 = vld [vmem:[#allocation11 + $0x3c0] sm:$0xff]
        %v1659 = vld [vmem:[#allocation11 + $0x3c8] sm:$0xff]
        %v1660 = vld [vmem:[#allocation11 + $0x3d0] sm:$0xff]
        %v1661 = vld [vmem:[#allocation11 + $0x3d8] sm:$0xff]
        %v1662 = vld [vmem:[#allocation11 + $0x3e0] sm:$0xff]
        %v1663 = vld [vmem:[#allocation11 + $0x3e8] sm:$0xff]
        %v1664 = vld [vmem:[#allocation11 + $0x3f0] sm:$0xff]
        %v1665 = vld [vmem:[#allocation11 + $0x3f8] sm:$0xff]
        %v1666 = vld [vmem:[#allocation3] sm:$0xfe]
        %v1667 = vld [vmem:[#allocation3 + $0x8] sm:$0xfe]
        %v1668 = vld [vmem:[#allocation3 + $0x10] sm:$0xfe]
        %v1669 = vld [vmem:[#allocation3 + $0x18] sm:$0xfe]
        %v1670 = vld [vmem:[#allocation3 + $0x80] sm:$0x7]
        %v1671 = vld [vmem:[#allocation3 + $0x88] sm:$0x7]
        %v1672 = vld [vmem:[#allocation3 + $0x90] sm:$0x7]
        %v1673 = vld [vmem:[#allocation3 + $0x98] sm:$0x7]
        %s1674 = scalar_lea.vmem [#allocation11], 1024
        %v1675 = vld [vmem:[%s1674] sm:$0xff]
        %v1676 = vld [vmem:[%s1674 + $0x8] sm:$0xff]
        %v1677 = vld [vmem:[%s1674 + $0x10] sm:$0xff]
        %v1678 = vld [vmem:[%s1674 + $0x18] sm:$0xff]
        %v1679 = vld [vmem:[%s1674 + $0x20] sm:$0xff]
        %v1680 = vld [vmem:[%s1674 + $0x28] sm:$0xff]
        %v1681 = vld [vmem:[%s1674 + $0x30] sm:$0xff]
        %v1682 = vld [vmem:[%s1674 + $0x38] sm:$0xff]
        %v1683 = vld [vmem:[%s1674 + $0x40] sm:$0xff]
        %v1684 = vld [vmem:[%s1674 + $0x48] sm:$0xff]
        %v1685 = vld [vmem:[%s1674 + $0x50] sm:$0xff]
        %v1686 = vld [vmem:[%s1674 + $0x58] sm:$0xff]
        %v1687 = vld [vmem:[%s1674 + $0x60] sm:$0xff]
        %v1688 = vld [vmem:[%s1674 + $0x68] sm:$0xff]
        %v1689 = vld [vmem:[%s1674 + $0x70] sm:$0xff]
        %v1690 = vld [vmem:[%s1674 + $0x78] sm:$0xff]
        %v1691 = vld [vmem:[%s1674 + $0x80] sm:$0xff]
        %v1692 = vld [vmem:[%s1674 + $0x88] sm:$0xff]
        %v1693 = vld [vmem:[%s1674 + $0x90] sm:$0xff]
        %v1694 = vld [vmem:[%s1674 + $0x98] sm:$0xff]
        %v1695 = vld [vmem:[%s1674 + $0xa0] sm:$0xff]
        %v1696 = vld [vmem:[%s1674 + $0xa8] sm:$0xff]
        %v1697 = vld [vmem:[%s1674 + $0xb0] sm:$0xff]
        %v1698 = vld [vmem:[%s1674 + $0xb8] sm:$0xff]
        %v1699 = vld [vmem:[%s1674 + $0xc0] sm:$0xff]
        %v1700 = vld [vmem:[%s1674 + $0xc8] sm:$0xff]
        %v1701 = vld [vmem:[%s1674 + $0xd0] sm:$0xff]
        %v1702 = vld [vmem:[%s1674 + $0xd8] sm:$0xff]
        %v1703 = vld [vmem:[%s1674 + $0xe0] sm:$0xff]
        %v1704 = vld [vmem:[%s1674 + $0xe8] sm:$0xff]
        %v1705 = vld [vmem:[%s1674 + $0xf0] sm:$0xff]
        %v1706 = vld [vmem:[%s1674 + $0xf8] sm:$0xff]
        %v1707 = vld [vmem:[%s1674 + $0x100] sm:$0xff]
        %v1708 = vld [vmem:[%s1674 + $0x108] sm:$0xff]
        %v1709 = vld [vmem:[%s1674 + $0x110] sm:$0xff]
        %v1710 = vld [vmem:[%s1674 + $0x118] sm:$0xff]
        %v1711 = vld [vmem:[%s1674 + $0x120] sm:$0xff]
        %v1712 = vld [vmem:[%s1674 + $0x128] sm:$0xff]
        %v1713 = vld [vmem:[%s1674 + $0x130] sm:$0xff]
        %v1714 = vld [vmem:[%s1674 + $0x138] sm:$0xff]
        %v1715 = vld [vmem:[%s1674 + $0x140] sm:$0xff]
        %v1716 = vld [vmem:[%s1674 + $0x148] sm:$0xff]
        %v1717 = vld [vmem:[%s1674 + $0x150] sm:$0xff]
        %v1718 = vld [vmem:[%s1674 + $0x158] sm:$0xff]
        %v1719 = vld [vmem:[%s1674 + $0x160] sm:$0xff]
        %v1720 = vld [vmem:[%s1674 + $0x168] sm:$0xff]
        %v1721 = vld [vmem:[%s1674 + $0x170] sm:$0xff]
        %v1722 = vld [vmem:[%s1674 + $0x178] sm:$0xff]
        %v1723 = vld [vmem:[%s1674 + $0x180] sm:$0xff]
        %v1724 = vld [vmem:[%s1674 + $0x188] sm:$0xff]
        %v1725 = vld [vmem:[%s1674 + $0x190] sm:$0xff]
        %v1726 = vld [vmem:[%s1674 + $0x198] sm:$0xff]
        %v1727 = vld [vmem:[%s1674 + $0x1a0] sm:$0xff]
        %v1728 = vld [vmem:[%s1674 + $0x1a8] sm:$0xff]
        %v1729 = vld [vmem:[%s1674 + $0x1b0] sm:$0xff]
        %v1730 = vld [vmem:[%s1674 + $0x1b8] sm:$0xff]
        %v1731 = vld [vmem:[%s1674 + $0x1c0] sm:$0xff]
        %v1732 = vld [vmem:[%s1674 + $0x1c8] sm:$0xff]
        %v1733 = vld [vmem:[%s1674 + $0x1d0] sm:$0xff]
        %v1734 = vld [vmem:[%s1674 + $0x1d8] sm:$0xff]
        %v1735 = vld [vmem:[%s1674 + $0x1e0] sm:$0xff]
        %v1736 = vld [vmem:[%s1674 + $0x1e8] sm:$0xff]
        %v1737 = vld [vmem:[%s1674 + $0x1f0] sm:$0xff]
        %v1738 = vld [vmem:[%s1674 + $0x1f8] sm:$0xff]
        %v1739 = vld [vmem:[%s1674 + $0x200] sm:$0xff]
        %v1740 = vld [vmem:[%s1674 + $0x208] sm:$0xff]
        %v1741 = vld [vmem:[%s1674 + $0x210] sm:$0xff]
        %v1742 = vld [vmem:[%s1674 + $0x218] sm:$0xff]
        %v1743 = vld [vmem:[%s1674 + $0x220] sm:$0xff]
        %v1744 = vld [vmem:[%s1674 + $0x228] sm:$0xff]
        %v1745 = vld [vmem:[%s1674 + $0x230] sm:$0xff]
        %v1746 = vld [vmem:[%s1674 + $0x238] sm:$0xff]
        %v1747 = vld [vmem:[%s1674 + $0x240] sm:$0xff]
        %v1748 = vld [vmem:[%s1674 + $0x248] sm:$0xff]
        %v1749 = vld [vmem:[%s1674 + $0x250] sm:$0xff]
        %v1750 = vld [vmem:[%s1674 + $0x258] sm:$0xff]
        %v1751 = vld [vmem:[%s1674 + $0x260] sm:$0xff]
        %v1752 = vld [vmem:[%s1674 + $0x268] sm:$0xff]
        %v1753 = vld [vmem:[%s1674 + $0x270] sm:$0xff]
        %v1754 = vld [vmem:[%s1674 + $0x278] sm:$0xff]
        %v1755 = vld [vmem:[%s1674 + $0x280] sm:$0xff]
        %v1756 = vld [vmem:[%s1674 + $0x288] sm:$0xff]
        %v1757 = vld [vmem:[%s1674 + $0x290] sm:$0xff]
        %v1758 = vld [vmem:[%s1674 + $0x298] sm:$0xff]
        %v1759 = vld [vmem:[%s1674 + $0x2a0] sm:$0xff]
        %v1760 = vld [vmem:[%s1674 + $0x2a8] sm:$0xff]
        %v1761 = vld [vmem:[%s1674 + $0x2b0] sm:$0xff]
        %v1762 = vld [vmem:[%s1674 + $0x2b8] sm:$0xff]
        %v1763 = vld [vmem:[%s1674 + $0x2c0] sm:$0xff]
        %v1764 = vld [vmem:[%s1674 + $0x2c8] sm:$0xff]
        %v1765 = vld [vmem:[%s1674 + $0x2d0] sm:$0xff]
        %v1766 = vld [vmem:[%s1674 + $0x2d8] sm:$0xff]
        %v1767 = vld [vmem:[%s1674 + $0x2e0] sm:$0xff]
        %v1768 = vld [vmem:[%s1674 + $0x2e8] sm:$0xff]
        %v1769 = vld [vmem:[%s1674 + $0x2f0] sm:$0xff]
        %v1770 = vld [vmem:[%s1674 + $0x2f8] sm:$0xff]
        %v1771 = vld [vmem:[%s1674 + $0x300] sm:$0xff]
        %v1772 = vld [vmem:[%s1674 + $0x308] sm:$0xff]
        %v1773 = vld [vmem:[%s1674 + $0x310] sm:$0xff]
        %v1774 = vld [vmem:[%s1674 + $0x318] sm:$0xff]
        %v1775 = vld [vmem:[%s1674 + $0x320] sm:$0xff]
        %v1776 = vld [vmem:[%s1674 + $0x328] sm:$0xff]
        %v1777 = vld [vmem:[%s1674 + $0x330] sm:$0xff]
        %v1778 = vld [vmem:[%s1674 + $0x338] sm:$0xff]
        %v1779 = vld [vmem:[%s1674 + $0x340] sm:$0xff]
        %v1780 = vld [vmem:[%s1674 + $0x348] sm:$0xff]
        %v1781 = vld [vmem:[%s1674 + $0x350] sm:$0xff]
        %v1782 = vld [vmem:[%s1674 + $0x358] sm:$0xff]
        %v1783 = vld [vmem:[%s1674 + $0x360] sm:$0xff]
        %v1784 = vld [vmem:[%s1674 + $0x368] sm:$0xff]
        %v1785 = vld [vmem:[%s1674 + $0x370] sm:$0xff]
        %v1786 = vld [vmem:[%s1674 + $0x378] sm:$0xff]
        %v1787 = vld [vmem:[%s1674 + $0x380] sm:$0xff]
        %v1788 = vld [vmem:[%s1674 + $0x388] sm:$0xff]
        %v1789 = vld [vmem:[%s1674 + $0x390] sm:$0xff]
        %v1790 = vld [vmem:[%s1674 + $0x398] sm:$0xff]
        %v1791 = vld [vmem:[%s1674 + $0x3a0] sm:$0xff]
        %v1792 = vld [vmem:[%s1674 + $0x3a8] sm:$0xff]
        %v1793 = vld [vmem:[%s1674 + $0x3b0] sm:$0xff]
        %v1794 = vld [vmem:[%s1674 + $0x3b8] sm:$0xff]
        %v1795 = vld [vmem:[%s1674 + $0x3c0] sm:$0xff]
        %v1796 = vld [vmem:[%s1674 + $0x3c8] sm:$0xff]
        %v1797 = vld [vmem:[%s1674 + $0x3d0] sm:$0xff]
        %v1798 = vld [vmem:[%s1674 + $0x3d8] sm:$0xff]
        %v1799 = vld [vmem:[%s1674 + $0x3e0] sm:$0xff]
        %v1800 = vld [vmem:[%s1674 + $0x3e8] sm:$0xff]
        %v1801 = vld [vmem:[%s1674 + $0x3f0] sm:$0xff]
        %v1802 = vld [vmem:[%s1674 + $0x3f8] sm:$0xff]
        %vm1823 = vcmask 1046528
        %v1824 = vrot.slane %v1666, 1
        %v1825 = vrot.slane %v1522, 1
        %v1826 = vsel %vm1823, %v1824, %v1825
        %v1827 = vrot.slane %v1667, 1
        %v1828 = vrot.slane %v1523, 1
        %v1829 = vsel %vm1823, %v1827, %v1828
        %v1830 = vrot.slane %v1668, 1
        %v1831 = vrot.slane %v1524, 1
        %v1832 = vsel %vm1823, %v1830, %v1831
        %v1833 = vrot.slane %v1669, 1
        %v1834 = vrot.slane %v1525, 1
        %v1835 = vsel %vm1823, %v1833, %v1834
        %v1836 = vrot.slane %v1526, 1
        %v1837 = vsel %vm1823, %v1825, %v1836
        %v1838 = vrot.slane %v1527, 1
        %v1839 = vsel %vm1823, %v1828, %v1838
        %v1840 = vrot.slane %v1528, 1
        %v1841 = vsel %vm1823, %v1831, %v1840
        %v1842 = vrot.slane %v1529, 1
        %v1843 = vsel %vm1823, %v1834, %v1842
        %v1844 = vrot.slane %v1530, 1
        %v1845 = vsel %vm1823, %v1836, %v1844
        %v1846 = vrot.slane %v1531, 1
        %v1847 = vsel %vm1823, %v1838, %v1846
        %v1848 = vrot.slane %v1532, 1
        %v1849 = vsel %vm1823, %v1840, %v1848
        %v1850 = vrot.slane %v1533, 1
        %v1851 = vsel %vm1823, %v1842, %v1850
        %v1852 = vrot.slane %v1670, 1
        %v1853 = vsel %vm1823, %v1844, %v1852
        %v1854 = vrot.slane %v1671, 1
        %v1855 = vsel %vm1823, %v1846, %v1854
        %v1856 = vrot.slane %v1672, 1
        %v1857 = vsel %vm1823, %v1848, %v1856
        %v1858 = vrot.slane %v1673, 1
        %v1859 = vsel %vm1823, %v1850, %v1858
        %1880 = vmatprep.subr.mxu0 %v1676
        %1881 = vmatpush1.msra.mxu0 %v1675
        %1882 = vmatprep.subr.mxu0 %v1678
        %1883 = vmatpush1.msra.mxu0 %v1677
        %1884 = vmatprep.subr.mxu0 %v1680
        %1885 = vmatpush1.msra.mxu0 %v1679
        %1886 = vmatprep.subr.mxu0 %v1682
        %1887 = vmatpush1.msra.mxu0 %v1681
        %1888 = vmatprep.subr.mxu0 %v1684
        %1889 = vmatpush1.msra.mxu0 %v1683
        %1890 = vmatprep.subr.mxu0 %v1686
        %1891 = vmatpush1.msra.mxu0 %v1685
        %1892 = vmatprep.subr.mxu0 %v1688
        %1893 = vmatpush1.msra.mxu0 %v1687
        %1894 = vmatprep.subr.mxu0 %v1690
        %1895 = vmatpush1.msra.mxu0 %v1689
        %1896 = vmatprep.subr.mxu0 %v1692
        %1897 = vmatpush1.msra.mxu0 %v1691
        %1898 = vmatprep.subr.mxu0 %v1694
        %1899 = vmatpush1.msra.mxu0 %v1693
        %1900 = vmatprep.subr.mxu0 %v1696
        %1901 = vmatpush1.msra.mxu0 %v1695
        %1902 = vmatprep.subr.mxu0 %v1698
        %1903 = vmatpush1.msra.mxu0 %v1697
        %1904 = vmatprep.subr.mxu0 %v1700
        %1905 = vmatpush1.msra.mxu0 %v1699
        %1906 = vmatprep.subr.mxu0 %v1702
        %1907 = vmatpush1.msra.mxu0 %v1701
        %1908 = vmatprep.subr.mxu0 %v1704
        %1909 = vmatpush1.msra.mxu0 %v1703
        %1910 = vmatprep.subr.mxu0 %v1706
        %1911 = vmatpush1.msra.mxu0 %v1705
        %1912 = vmatprep.subr.mxu0 %v1708
        %1913 = vmatpush1.msra.mxu0 %v1707
        %1914 = vmatprep.subr.mxu0 %v1710
        %1915 = vmatpush1.msra.mxu0 %v1709
        %1916 = vmatprep.subr.mxu0 %v1712
        %1917 = vmatpush1.msra.mxu0 %v1711
        %1918 = vmatprep.subr.mxu0 %v1714
        %1919 = vmatpush1.msra.mxu0 %v1713
        %1920 = vmatprep.subr.mxu0 %v1716
        %1921 = vmatpush1.msra.mxu0 %v1715
        %1922 = vmatprep.subr.mxu0 %v1718
        %1923 = vmatpush1.msra.mxu0 %v1717
        %1924 = vmatprep.subr.mxu0 %v1720
        %1925 = vmatpush1.msra.mxu0 %v1719
        %1926 = vmatprep.subr.mxu0 %v1722
        %1927 = vmatpush1.msra.mxu0 %v1721
        %1928 = vmatprep.subr.mxu0 %v1724
        %1929 = vmatpush1.msra.mxu0 %v1723
        %1930 = vmatprep.subr.mxu0 %v1726
        %1931 = vmatpush1.msra.mxu0 %v1725
        %1932 = vmatprep.subr.mxu0 %v1728
        %1933 = vmatpush1.msra.mxu0 %v1727
        %1934 = vmatprep.subr.mxu0 %v1730
        %1935 = vmatpush1.msra.mxu0 %v1729
        %1936 = vmatprep.subr.mxu0 %v1732
        %1937 = vmatpush1.msra.mxu0 %v1731
        %1938 = vmatprep.subr.mxu0 %v1734
        %1939 = vmatpush1.msra.mxu0 %v1733
        %1940 = vmatprep.subr.mxu0 %v1736
        %1941 = vmatpush1.msra.mxu0 %v1735
        %1942 = vmatprep.subr.mxu0 %v1738
        %1943 = vmatpush1.msra.mxu0 %v1737
        %1944 = vmatprep.mubr.f32.mxu0 %v1829
        %1945 = vmatmul.mubr.f32.gmra.mrb[0].mxu0 %v1826
        %v1946 = vpop.f32.mrb[0].mxu0
        %v1947 = vadd.f32 0.0, %v1946
        %v1948 = vpop.f32.mrb[0].mxu0
        %v1949 = vadd.f32 0.0, %v1948
        %1950 = vmatprep.mubr.f32.mxu0 %v1839
        %1951 = vmatmul.mubr.f32.gmra.mrb[0].mxu0 %v1837
        %v1952 = vpop.f32.mrb[0].mxu0
        %v1953 = vadd.f32 0.0, %v1952
        %v1954 = vpop.f32.mrb[0].mxu0
        %v1955 = vadd.f32 0.0, %v1954
        %1956 = vmatprep.mubr.f32.mxu0 %v1847
        %1957 = vmatmul.mubr.f32.gmra.mrb[0].mxu0 %v1845
        %v1958 = vpop.f32.mrb[0].mxu0
        %v1959 = vadd.f32 0.0, %v1958
        %v1960 = vpop.f32.mrb[0].mxu0
        %v1961 = vadd.f32 0.0, %v1960
        %1962 = vmatprep.mubr.f32.mxu0 %v1855
        %1963 = vmatmul.mubr.f32.gmra.mrb[0].mxu0 %v1853
        %v1964 = vpop.f32.mrb[0].mxu0
        %v1965 = vadd.f32 0.0, %v1964
        %v1966 = vpop.f32.mrb[0].mxu0
        %v1967 = vadd.f32 0.0, %v1966
        %1968 = vmatprep.mubr.f32.mxu0 %v1854
        %1969 = vmatmul.mubr.f32.gmra.mrb[0].mxu0 %v1852
        %v1970 = vpop.f32.mrb[0].mxu0
        %v1971 = vadd.f32 0.0, %v1970
        %v1972 = vpop.f32.mrb[0].mxu0
        %v1973 = vadd.f32 0.0, %v1972
        %1974 = vdwg.mxu0
        %1975 = vmatprep.subr.mxu0 %v1740
        %1976 = vmatpush1.msra.mxu0 %v1739
        %1977 = vmatprep.subr.mxu0 %v1742
        %1978 = vmatpush1.msra.mxu0 %v1741
        %1979 = vmatprep.subr.mxu0 %v1744
        %1980 = vmatpush1.msra.mxu0 %v1743
        %1981 = vmatprep.subr.mxu0 %v1746
        %1982 = vmatpush1.msra.mxu0 %v1745
        %1983 = vmatprep.subr.mxu0 %v1748
        %1984 = vmatpush1.msra.mxu0 %v1747
        %1985 = vmatprep.subr.mxu0 %v1750
        %1986 = vmatpush1.msra.mxu0 %v1749
        %1987 = vmatprep.subr.mxu0 %v1752
        %1988 = vmatpush1.msra.mxu0 %v1751
        %1989 = vmatprep.subr.mxu0 %v1754
        %1990 = vmatpush1.msra.mxu0 %v1753
        %1991 = vmatprep.subr.mxu0 %v1756
        %1992 = vmatpush1.msra.mxu0 %v1755
        %1993 = vmatprep.subr.mxu0 %v1758
        %1994 = vmatpush1.msra.mxu0 %v1757
        %1995 = vmatprep.subr.mxu0 %v1760
        %1996 = vmatpush1.msra.mxu0 %v1759
        %1997 = vmatprep.subr.mxu0 %v1762
        %1998 = vmatpush1.msra.mxu0 %v1761
        %1999 = vmatprep.subr.mxu0 %v1764
        %2000 = vmatpush1.msra.mxu0 %v1763
        %2001 = vmatprep.subr.mxu0 %v1766
        %2002 = vmatpush1.msra.mxu0 %v1765
        %2003 = vmatprep.subr.mxu0 %v1768
        %2004 = vmatpush1.msra.mxu0 %v1767
        %2005 = vmatprep.subr.mxu0 %v1770
        %2006 = vmatpush1.msra.mxu0 %v1769
        %2007 = vmatprep.subr.mxu0 %v1772
        %2008 = vmatpush1.msra.mxu0 %v1771
        %2009 = vmatprep.subr.mxu0 %v1774
        %2010 = vmatpush1.msra.mxu0 %v1773
        %2011 = vmatprep.subr.mxu0 %v1776
        %2012 = vmatpush1.msra.mxu0 %v1775
        %2013 = vmatprep.subr.mxu0 %v1778
        %2014 = vmatpush1.msra.mxu0 %v1777
        %2015 = vmatprep.subr.mxu0 %v1780
        %2016 = vmatpush1.msra.mxu0 %v1779
        %2017 = vmatprep.subr.mxu0 %v1782
        %2018 = vmatpush1.msra.mxu0 %v1781
        %2019 = vmatprep.subr.mxu0 %v1784
        %2020 = vmatpush1.msra.mxu0 %v1783
        %2021 = vmatprep.subr.mxu0 %v1786
        %2022 = vmatpush1.msra.mxu0 %v1785
        %2023 = vmatprep.subr.mxu0 %v1788
        %2024 = vmatpush1.msra.mxu0 %v1787
        %2025 = vmatprep.subr.mxu0 %v1790
        %2026 = vmatpush1.msra.mxu0 %v1789
        %2027 = vmatprep.subr.mxu0 %v1792
        %2028 = vmatpush1.msra.mxu0 %v1791
        %2029 = vmatprep.subr.mxu0 %v1794
        %2030 = vmatpush1.msra.mxu0 %v1793
        %2031 = vmatprep.subr.mxu0 %v1796
        %2032 = vmatpush1.msra.mxu0 %v1795
        %2033 = vmatprep.subr.mxu0 %v1798
        %2034 = vmatpush1.msra.mxu0 %v1797
        %2035 = vmatprep.subr.mxu0 %v1800
        %2036 = vmatpush1.msra.mxu0 %v1799
        %2037 = vmatprep.subr.mxu0 %v1802
        %2038 = vmatpush1.msra.mxu0 %v1801
        %2039 = vmatprep.mubr.f32.mxu0 %v1835
        %2040 = vmatmul.mubr.f32.gmra.mrb[0].mxu0 %v1832
        %v2041 = vpop.f32.mrb[0].mxu0
        %v2042 = vadd.f32 %v1947, %v2041
        %v2043 = vpop.f32.mrb[0].mxu0
        %v2044 = vadd.f32 %v1949, %v2043
        %2045 = vmatprep.mubr.f32.mxu0 %v1843
        %2046 = vmatmul.mubr.f32.gmra.mrb[0].mxu0 %v1841
        %v2047 = vpop.f32.mrb[0].mxu0
        %v2048 = vadd.f32 %v1953, %v2047
        %v2049 = vpop.f32.mrb[0].mxu0
        %v2050 = vadd.f32 %v1955, %v2049
        %2051 = vmatprep.mubr.f32.mxu0 %v1851
        %2052 = vmatmul.mubr.f32.gmra.mrb[0].mxu0 %v1849
        %v2053 = vpop.f32.mrb[0].mxu0
        %v2054 = vadd.f32 %v1959, %v2053
        %v2055 = vpop.f32.mrb[0].mxu0
        %v2056 = vadd.f32 %v1961, %v2055
        %2057 = vmatprep.mubr.f32.mxu0 %v1859
        %2058 = vmatmul.mubr.f32.gmra.mrb[0].mxu0 %v1857
        %v2059 = vpop.f32.mrb[0].mxu0
        %v2060 = vadd.f32 %v1965, %v2059
        %v2061 = vpop.f32.mrb[0].mxu0
        %v2062 = vadd.f32 %v1967, %v2061
        %2063 = vmatprep.mubr.f32.mxu0 %v1858
        %2064 = vmatmul.mubr.f32.gmra.mrb[0].mxu0 %v1856
        %v2065 = vpop.f32.mrb[0].mxu0
        %v2066 = vadd.f32 %v1971, %v2065
        %v2067 = vpop.f32.mrb[0].mxu0
        %v2068 = vadd.f32 %v1973, %v2067
        %2069 = vdwg.mxu0
        %2070 = vmatprep.subr.mxu0 %v1539
        %2071 = vmatpush1.msra.mxu0 %v1538
        %2072 = vmatprep.subr.mxu0 %v1541
        %2073 = vmatpush1.msra.mxu0 %v1540
        %2074 = vmatprep.subr.mxu0 %v1543
        %2075 = vmatpush1.msra.mxu0 %v1542
        %2076 = vmatprep.subr.mxu0 %v1545
        %2077 = vmatpush1.msra.mxu0 %v1544
        %2078 = vmatprep.subr.mxu0 %v1547
        %2079 = vmatpush1.msra.mxu0 %v1546
        %2080 = vmatprep.subr.mxu0 %v1549
        %2081 = vmatpush1.msra.mxu0 %v1548
        %2082 = vmatprep.subr.mxu0 %v1551
        %2083 = vmatpush1.msra.mxu0 %v1550
        %2084 = vmatprep.subr.mxu0 %v1553
        %2085 = vmatpush1.msra.mxu0 %v1552
        %2086 = vmatprep.subr.mxu0 %v1555
        %2087 = vmatpush1.msra.mxu0 %v1554
        %2088 = vmatprep.subr.mxu0 %v1557
        %2089 = vmatpush1.msra.mxu0 %v1556
        %2090 = vmatprep.subr.mxu0 %v1559
        %2091 = vmatpush1.msra.mxu0 %v1558
        %2092 = vmatprep.subr.mxu0 %v1561
        %2093 = vmatpush1.msra.mxu0 %v1560
        %2094 = vmatprep.subr.mxu0 %v1563
        %2095 = vmatpush1.msra.mxu0 %v1562
        %2096 = vmatprep.subr.mxu0 %v1565
        %2097 = vmatpush1.msra.mxu0 %v1564
        %2098 = vmatprep.subr.mxu0 %v1567
        %2099 = vmatpush1.msra.mxu0 %v1566
        %2100 = vmatprep.subr.mxu0 %v1569
        %2101 = vmatpush1.msra.mxu0 %v1568
        %2102 = vmatprep.subr.mxu0 %v1571
        %2103 = vmatpush1.msra.mxu0 %v1570
        %2104 = vmatprep.subr.mxu0 %v1573
        %2105 = vmatpush1.msra.mxu0 %v1572
        %2106 = vmatprep.subr.mxu0 %v1575
        %2107 = vmatpush1.msra.mxu0 %v1574
        %2108 = vmatprep.subr.mxu0 %v1577
        %2109 = vmatpush1.msra.mxu0 %v1576
        %2110 = vmatprep.subr.mxu0 %v1579
        %2111 = vmatpush1.msra.mxu0 %v1578
        %2112 = vmatprep.subr.mxu0 %v1581
        %2113 = vmatpush1.msra.mxu0 %v1580
        %2114 = vmatprep.subr.mxu0 %v1583
        %2115 = vmatpush1.msra.mxu0 %v1582
        %2116 = vmatprep.subr.mxu0 %v1585
        %2117 = vmatpush1.msra.mxu0 %v1584
        %2118 = vmatprep.subr.mxu0 %v1587
        %2119 = vmatpush1.msra.mxu0 %v1586
        %2120 = vmatprep.subr.mxu0 %v1589
        %2121 = vmatpush1.msra.mxu0 %v1588
        %2122 = vmatprep.subr.mxu0 %v1591
        %2123 = vmatpush1.msra.mxu0 %v1590
        %2124 = vmatprep.subr.mxu0 %v1593
        %2125 = vmatpush1.msra.mxu0 %v1592
        %2126 = vmatprep.subr.mxu0 %v1595
        %2127 = vmatpush1.msra.mxu0 %v1594
        %2128 = vmatprep.subr.mxu0 %v1597
        %2129 = vmatpush1.msra.mxu0 %v1596
        %2130 = vmatprep.subr.mxu0 %v1599
        %2131 = vmatpush1.msra.mxu0 %v1598
        %2132 = vmatprep.subr.mxu0 %v1601
        %2133 = vmatpush1.msra.mxu0 %v1600
        %2134 = vmatprep.mubr.f32.mxu0 %v1519
        %2135 = vmatmul.mubr.f32.gmra.mrb[0].mxu0 %v1518
        %v2136 = vpop.f32.mrb[0].mxu0
        %v2137 = vadd.f32 %v2042, %v2136
        %v2138 = vpop.f32.mrb[0].mxu0
        %v2139 = vadd.f32 %v2044, %v2138
        %2140 = vmatprep.mubr.f32.mxu0 %v1523
        %2141 = vmatmul.mubr.f32.gmra.mrb[0].mxu0 %v1522
        %v2142 = vpop.f32.mrb[0].mxu0
        %v2143 = vadd.f32 %v2048, %v2142
        %v2144 = vpop.f32.mrb[0].mxu0
        %v2145 = vadd.f32 %v2050, %v2144
        %2146 = vmatprep.mubr.f32.mxu0 %v1527
        %2147 = vmatmul.mubr.f32.gmra.mrb[0].mxu0 %v1526
        %v2148 = vpop.f32.mrb[0].mxu0
        %v2149 = vadd.f32 %v2054, %v2148
        %v2150 = vpop.f32.mrb[0].mxu0
        %v2151 = vadd.f32 %v2056, %v2150
        %2152 = vmatprep.mubr.f32.mxu0 %v1531
        %2153 = vmatmul.mubr.f32.gmra.mrb[0].mxu0 %v1530
        %v2154 = vpop.f32.mrb[0].mxu0
        %v2155 = vadd.f32 %v2060, %v2154
        %v2156 = vpop.f32.mrb[0].mxu0
        %v2157 = vadd.f32 %v2062, %v2156
        %2158 = vmatprep.mubr.f32.mxu0 %v1535
        %2159 = vmatmul.mubr.f32.gmra.mrb[0].mxu0 %v1534
        %v2160 = vpop.f32.mrb[0].mxu0
        %v2161 = vadd.f32 %v2066, %v2160
        %v2162 = vpop.f32.mrb[0].mxu0
        %v2163 = vadd.f32 %v2068, %v2162
        %2164 = vdwg.mxu0
        %2165 = vmatprep.subr.mxu0 %v1603
        %2166 = vmatpush1.msra.mxu0 %v1602
        %2167 = vmatprep.subr.mxu0 %v1605
        %2168 = vmatpush1.msra.mxu0 %v1604
        %2169 = vmatprep.subr.mxu0 %v1607
        %2170 = vmatpush1.msra.mxu0 %v1606
        %2171 = vmatprep.subr.mxu0 %v1609
        %2172 = vmatpush1.msra.mxu0 %v1608
        %2173 = vmatprep.subr.mxu0 %v1611
        %2174 = vmatpush1.msra.mxu0 %v1610
        %2175 = vmatprep.subr.mxu0 %v1613
        %2176 = vmatpush1.msra.mxu0 %v1612
        %2177 = vmatprep.subr.mxu0 %v1615
        %2178 = vmatpush1.msra.mxu0 %v1614
        %2179 = vmatprep.subr.mxu0 %v1617
        %2180 = vmatpush1.msra.mxu0 %v1616
        %2181 = vmatprep.subr.mxu0 %v1619
        %2182 = vmatpush1.msra.mxu0 %v1618
        %2183 = vmatprep.subr.mxu0 %v1621
        %2184 = vmatpush1.msra.mxu0 %v1620
        %2185 = vmatprep.subr.mxu0 %v1623
        %2186 = vmatpush1.msra.mxu0 %v1622
        %2187 = vmatprep.subr.mxu0 %v1625
        %2188 = vmatpush1.msra.mxu0 %v1624
        %2189 = vmatprep.subr.mxu0 %v1627
        %2190 = vmatpush1.msra.mxu0 %v1626
        %2191 = vmatprep.subr.mxu0 %v1629
        %2192 = vmatpush1.msra.mxu0 %v1628
        %2193 = vmatprep.subr.mxu0 %v1631
        %2194 = vmatpush1.msra.mxu0 %v1630
        %2195 = vmatprep.subr.mxu0 %v1633
        %2196 = vmatpush1.msra.mxu0 %v1632
        %2197 = vmatprep.subr.mxu0 %v1635
        %2198 = vmatpush1.msra.mxu0 %v1634
        %2199 = vmatprep.subr.mxu0 %v1637
        %2200 = vmatpush1.msra.mxu0 %v1636
        %2201 = vmatprep.subr.mxu0 %v1639
        %2202 = vmatpush1.msra.mxu0 %v1638
        %2203 = vmatprep.subr.mxu0 %v1641
        %2204 = vmatpush1.msra.mxu0 %v1640
        %2205 = vmatprep.subr.mxu0 %v1643
        %2206 = vmatpush1.msra.mxu0 %v1642
        %2207 = vmatprep.subr.mxu0 %v1645
        %2208 = vmatpush1.msra.mxu0 %v1644
        %2209 = vmatprep.subr.mxu0 %v1647
        %2210 = vmatpush1.msra.mxu0 %v1646
        %2211 = vmatprep.subr.mxu0 %v1649
        %2212 = vmatpush1.msra.mxu0 %v1648
        %2213 = vmatprep.subr.mxu0 %v1651
        %2214 = vmatpush1.msra.mxu0 %v1650
        %2215 = vmatprep.subr.mxu0 %v1653
        %2216 = vmatpush1.msra.mxu0 %v1652
        %2217 = vmatprep.subr.mxu0 %v1655
        %2218 = vmatpush1.msra.mxu0 %v1654
        %2219 = vmatprep.subr.mxu0 %v1657
        %2220 = vmatpush1.msra.mxu0 %v1656
        %2221 = vmatprep.subr.mxu0 %v1659
        %2222 = vmatpush1.msra.mxu0 %v1658
        %2223 = vmatprep.subr.mxu0 %v1661
        %2224 = vmatpush1.msra.mxu0 %v1660
        %2225 = vmatprep.subr.mxu0 %v1663
        %2226 = vmatpush1.msra.mxu0 %v1662
        %2227 = vmatprep.subr.mxu0 %v1665
        %2228 = vmatpush1.msra.mxu0 %v1664
        %2229 = vmatprep.mubr.f32.mxu0 %v1521
        %2230 = vmatmul.mubr.f32.gmra.mrb[0].mxu0 %v1520
        %v2231 = vpop.f32.mrb[0].mxu0
        %v2232 = vadd.f32 %v2137, %v2231
        %v2233 = vpop.f32.mrb[0].mxu0
        %v2234 = vadd.f32 %v2139, %v2233
        %2235 = vmatprep.mubr.f32.mxu0 %v1525
        %2236 = vmatmul.mubr.f32.gmra.mrb[0].mxu0 %v1524
        %v2237 = vpop.f32.mrb[0].mxu0
        %v2238 = vadd.f32 %v2143, %v2237
        %v2239 = vpop.f32.mrb[0].mxu0
        %v2240 = vadd.f32 %v2145, %v2239
        %2241 = vmatprep.mubr.f32.mxu0 %v1529
        %2242 = vmatmul.mubr.f32.gmra.mrb[0].mxu0 %v1528
        %v2243 = vpop.f32.mrb[0].mxu0
        %v2244 = vadd.f32 %v2149, %v2243
        %v2245 = vpop.f32.mrb[0].mxu0
        %v2246 = vadd.f32 %v2151, %v2245
        %2247 = vmatprep.mubr.f32.mxu0 %v1533
        %2248 = vmatmul.mubr.f32.gmra.mrb[0].mxu0 %v1532
        %v2249 = vpop.f32.mrb[0].mxu0
        %v2250 = vadd.f32 %v2155, %v2249
        %v2251 = vpop.f32.mrb[0].mxu0
        %v2252 = vadd.f32 %v2157, %v2251
        %2253 = vmatprep.mubr.f32.mxu0 %v1537
        %2254 = vmatmul.mubr.f32.gmra.mrb[0].mxu0 %v1536
        %v2255 = vpop.f32.mrb[0].mxu0
        %v2256 = vadd.f32 %v2161, %v2255
        %v2257 = vpop.f32.mrb[0].mxu0
        %v2258 = vadd.f32 %v2163, %v2257
        %2259 = vdwg.mxu0
        %v2260 = vld [vmem:[#allocation3] sm:$0xfc]
        %v2261 = vld [vmem:[#allocation3 + $0x8] sm:$0xfc]
        %v2262 = vld [vmem:[#allocation3 + $0x10] sm:$0xfc]
        %v2263 = vld [vmem:[#allocation3 + $0x18] sm:$0xfc]
        %v2264 = vld [vmem:[#allocation3 + $0x80] sm:$0xf]
        %v2265 = vld [vmem:[#allocation3 + $0x88] sm:$0xf]
        %v2266 = vld [vmem:[#allocation3 + $0x90] sm:$0xf]
        %v2267 = vld [vmem:[#allocation3 + $0x98] sm:$0xf]
        %s2268 = scalar_lea.vmem [#allocation11], 2048
        %v2269 = vld [vmem:[%s2268] sm:$0xff]
        %v2270 = vld [vmem:[%s2268 + $0x8] sm:$0xff]
        %v2271 = vld [vmem:[%s2268 + $0x10] sm:$0xff]
        %v2272 = vld [vmem:[%s2268 + $0x18] sm:$0xff]
        %v2273 = vld [vmem:[%s2268 + $0x20] sm:$0xff]
        %v2274 = vld [vmem:[%s2268 + $0x28] sm:$0xff]
        %v2275 = vld [vmem:[%s2268 + $0x30] sm:$0xff]
        %v2276 = vld [vmem:[%s2268 + $0x38] sm:$0xff]
        %v2277 = vld [vmem:[%s2268 + $0x40] sm:$0xff]
        %v2278 = vld [vmem:[%s2268 + $0x48] sm:$0xff]
        %v2279 = vld [vmem:[%s2268 + $0x50] sm:$0xff]
        %v2280 = vld [vmem:[%s2268 + $0x58] sm:$0xff]
        %v2281 = vld [vmem:[%s2268 + $0x60] sm:$0xff]
        %v2282 = vld [vmem:[%s2268 + $0x68] sm:$0xff]
        %v2283 = vld [vmem:[%s2268 + $0x70] sm:$0xff]
        %v2284 = vld [vmem:[%s2268 + $0x78] sm:$0xff]
        %v2285 = vld [vmem:[%s2268 + $0x80] sm:$0xff]
        %v2286 = vld [vmem:[%s2268 + $0x88] sm:$0xff]
        %v2287 = vld [vmem:[%s2268 + $0x90] sm:$0xff]
        %v2288 = vld [vmem:[%s2268 + $0x98] sm:$0xff]
        %v2289 = vld [vmem:[%s2268 + $0xa0] sm:$0xff]
        %v2290 = vld [vmem:[%s2268 + $0xa8] sm:$0xff]
        %v2291 = vld [vmem:[%s2268 + $0xb0] sm:$0xff]
        %v2292 = vld [vmem:[%s2268 + $0xb8] sm:$0xff]
        %v2293 = vld [vmem:[%s2268 + $0xc0] sm:$0xff]
        %v2294 = vld [vmem:[%s2268 + $0xc8] sm:$0xff]
        %v2295 = vld [vmem:[%s2268 + $0xd0] sm:$0xff]
        %v2296 = vld [vmem:[%s2268 + $0xd8] sm:$0xff]
        %v2297 = vld [vmem:[%s2268 + $0xe0] sm:$0xff]
        %v2298 = vld [vmem:[%s2268 + $0xe8] sm:$0xff]
        %v2299 = vld [vmem:[%s2268 + $0xf0] sm:$0xff]
        %v2300 = vld [vmem:[%s2268 + $0xf8] sm:$0xff]
        %v2301 = vld [vmem:[%s2268 + $0x100] sm:$0xff]
        %v2302 = vld [vmem:[%s2268 + $0x108] sm:$0xff]
        %v2303 = vld [vmem:[%s2268 + $0x110] sm:$0xff]
        %v2304 = vld [vmem:[%s2268 + $0x118] sm:$0xff]
        %v2305 = vld [vmem:[%s2268 + $0x120] sm:$0xff]
        %v2306 = vld [vmem:[%s2268 + $0x128] sm:$0xff]
        %v2307 = vld [vmem:[%s2268 + $0x130] sm:$0xff]
        %v2308 = vld [vmem:[%s2268 + $0x138] sm:$0xff]
        %v2309 = vld [vmem:[%s2268 + $0x140] sm:$0xff]
        %v2310 = vld [vmem:[%s2268 + $0x148] sm:$0xff]
        %v2311 = vld [vmem:[%s2268 + $0x150] sm:$0xff]
        %v2312 = vld [vmem:[%s2268 + $0x158] sm:$0xff]
        %v2313 = vld [vmem:[%s2268 + $0x160] sm:$0xff]
        %v2314 = vld [vmem:[%s2268 + $0x168] sm:$0xff]
        %v2315 = vld [vmem:[%s2268 + $0x170] sm:$0xff]
        %v2316 = vld [vmem:[%s2268 + $0x178] sm:$0xff]
        %v2317 = vld [vmem:[%s2268 + $0x180] sm:$0xff]
        %v2318 = vld [vmem:[%s2268 + $0x188] sm:$0xff]
        %v2319 = vld [vmem:[%s2268 + $0x190] sm:$0xff]
        %v2320 = vld [vmem:[%s2268 + $0x198] sm:$0xff]
        %v2321 = vld [vmem:[%s2268 + $0x1a0] sm:$0xff]
        %v2322 = vld [vmem:[%s2268 + $0x1a8] sm:$0xff]
        %v2323 = vld [vmem:[%s2268 + $0x1b0] sm:$0xff]
        %v2324 = vld [vmem:[%s2268 + $0x1b8] sm:$0xff]
        %v2325 = vld [vmem:[%s2268 + $0x1c0] sm:$0xff]
        %v2326 = vld [vmem:[%s2268 + $0x1c8] sm:$0xff]
        %v2327 = vld [vmem:[%s2268 + $0x1d0] sm:$0xff]
        %v2328 = vld [vmem:[%s2268 + $0x1d8] sm:$0xff]
        %v2329 = vld [vmem:[%s2268 + $0x1e0] sm:$0xff]
        %v2330 = vld [vmem:[%s2268 + $0x1e8] sm:$0xff]
        %v2331 = vld [vmem:[%s2268 + $0x1f0] sm:$0xff]
        %v2332 = vld [vmem:[%s2268 + $0x1f8] sm:$0xff]
        %v2333 = vld [vmem:[%s2268 + $0x200] sm:$0xff]
        %v2334 = vld [vmem:[%s2268 + $0x208] sm:$0xff]
        %v2335 = vld [vmem:[%s2268 + $0x210] sm:$0xff]
        %v2336 = vld [vmem:[%s2268 + $0x218] sm:$0xff]
        %v2337 = vld [vmem:[%s2268 + $0x220] sm:$0xff]
        %v2338 = vld [vmem:[%s2268 + $0x228] sm:$0xff]
        %v2339 = vld [vmem:[%s2268 + $0x230] sm:$0xff]
        %v2340 = vld [vmem:[%s2268 + $0x238] sm:$0xff]
        %v2341 = vld [vmem:[%s2268 + $0x240] sm:$0xff]
        %v2342 = vld [vmem:[%s2268 + $0x248] sm:$0xff]
        %v2343 = vld [vmem:[%s2268 + $0x250] sm:$0xff]
        %v2344 = vld [vmem:[%s2268 + $0x258] sm:$0xff]
        %v2345 = vld [vmem:[%s2268 + $0x260] sm:$0xff]
        %v2346 = vld [vmem:[%s2268 + $0x268] sm:$0xff]
        %v2347 = vld [vmem:[%s2268 + $0x270] sm:$0xff]
        %v2348 = vld [vmem:[%s2268 + $0x278] sm:$0xff]
        %v2349 = vld [vmem:[%s2268 + $0x280] sm:$0xff]
        %v2350 = vld [vmem:[%s2268 + $0x288] sm:$0xff]
        %v2351 = vld [vmem:[%s2268 + $0x290] sm:$0xff]
        %v2352 = vld [vmem:[%s2268 + $0x298] sm:$0xff]
        %v2353 = vld [vmem:[%s2268 + $0x2a0] sm:$0xff]
        %v2354 = vld [vmem:[%s2268 + $0x2a8] sm:$0xff]
        %v2355 = vld [vmem:[%s2268 + $0x2b0] sm:$0xff]
        %v2356 = vld [vmem:[%s2268 + $0x2b8] sm:$0xff]
        %v2357 = vld [vmem:[%s2268 + $0x2c0] sm:$0xff]
        %v2358 = vld [vmem:[%s2268 + $0x2c8] sm:$0xff]
        %v2359 = vld [vmem:[%s2268 + $0x2d0] sm:$0xff]
        %v2360 = vld [vmem:[%s2268 + $0x2d8] sm:$0xff]
        %v2361 = vld [vmem:[%s2268 + $0x2e0] sm:$0xff]
        %v2362 = vld [vmem:[%s2268 + $0x2e8] sm:$0xff]
        %v2363 = vld [vmem:[%s2268 + $0x2f0] sm:$0xff]
        %v2364 = vld [vmem:[%s2268 + $0x2f8] sm:$0xff]
        %v2365 = vld [vmem:[%s2268 + $0x300] sm:$0xff]
        %v2366 = vld [vmem:[%s2268 + $0x308] sm:$0xff]
        %v2367 = vld [vmem:[%s2268 + $0x310] sm:$0xff]
        %v2368 = vld [vmem:[%s2268 + $0x318] sm:$0xff]
        %v2369 = vld [vmem:[%s2268 + $0x320] sm:$0xff]
        %v2370 = vld [vmem:[%s2268 + $0x328] sm:$0xff]
        %v2371 = vld [vmem:[%s2268 + $0x330] sm:$0xff]
        %v2372 = vld [vmem:[%s2268 + $0x338] sm:$0xff]
        %v2373 = vld [vmem:[%s2268 + $0x340] sm:$0xff]
        %v2374 = vld [vmem:[%s2268 + $0x348] sm:$0xff]
        %v2375 = vld [vmem:[%s2268 + $0x350] sm:$0xff]
        %v2376 = vld [vmem:[%s2268 + $0x358] sm:$0xff]
        %v2377 = vld [vmem:[%s2268 + $0x360] sm:$0xff]
        %v2378 = vld [vmem:[%s2268 + $0x368] sm:$0xff]
        %v2379 = vld [vmem:[%s2268 + $0x370] sm:$0xff]
        %v2380 = vld [vmem:[%s2268 + $0x378] sm:$0xff]
        %v2381 = vld [vmem:[%s2268 + $0x380] sm:$0xff]
        %v2382 = vld [vmem:[%s2268 + $0x388] sm:$0xff]
        %v2383 = vld [vmem:[%s2268 + $0x390] sm:$0xff]
        %v2384 = vld [vmem:[%s2268 + $0x398] sm:$0xff]
        %v2385 = vld [vmem:[%s2268 + $0x3a0] sm:$0xff]
        %v2386 = vld [vmem:[%s2268 + $0x3a8] sm:$0xff]
        %v2387 = vld [vmem:[%s2268 + $0x3b0] sm:$0xff]
        %v2388 = vld [vmem:[%s2268 + $0x3b8] sm:$0xff]
        %v2389 = vld [vmem:[%s2268 + $0x3c0] sm:$0xff]
        %v2390 = vld [vmem:[%s2268 + $0x3c8] sm:$0xff]
        %v2391 = vld [vmem:[%s2268 + $0x3d0] sm:$0xff]
        %v2392 = vld [vmem:[%s2268 + $0x3d8] sm:$0xff]
        %v2393 = vld [vmem:[%s2268 + $0x3e0] sm:$0xff]
        %v2394 = vld [vmem:[%s2268 + $0x3e8] sm:$0xff]
        %v2395 = vld [vmem:[%s2268 + $0x3f0] sm:$0xff]
        %v2396 = vld [vmem:[%s2268 + $0x3f8] sm:$0xff]
        %vm2405 = vcmask 1045504
        %v2406 = vrot.slane %v2260, 2
        %v2407 = vrot.slane %v1522, 2
        %v2408 = vsel %vm2405, %v2406, %v2407
        %v2409 = vrot.slane %v2261, 2
        %v2410 = vrot.slane %v1523, 2
        %v2411 = vsel %vm2405, %v2409, %v2410
        %v2412 = vrot.slane %v2262, 2
        %v2413 = vrot.slane %v1524, 2
        %v2414 = vsel %vm2405, %v2412, %v2413
        %v2415 = vrot.slane %v2263, 2
        %v2416 = vrot.slane %v1525, 2
        %v2417 = vsel %vm2405, %v2415, %v2416
        %v2418 = vrot.slane %v1526, 2
        %v2419 = vsel %vm2405, %v2407, %v2418
        %v2420 = vrot.slane %v1527, 2
        %v2421 = vsel %vm2405, %v2410, %v2420
        %v2422 = vrot.slane %v1528, 2
        %v2423 = vsel %vm2405, %v2413, %v2422
        %v2424 = vrot.slane %v1529, 2
        %v2425 = vsel %vm2405, %v2416, %v2424
        %v2426 = vrot.slane %v1530, 2
        %v2427 = vsel %vm2405, %v2418, %v2426
        %v2428 = vrot.slane %v1531, 2
        %v2429 = vsel %vm2405, %v2420, %v2428
        %v2430 = vrot.slane %v1532, 2
        %v2431 = vsel %vm2405, %v2422, %v2430
        %v2432 = vrot.slane %v1533, 2
        %v2433 = vsel %vm2405, %v2424, %v2432
        %v2434 = vrot.slane %v2264, 2
        %v2435 = vsel %vm2405, %v2426, %v2434
        %v2436 = vrot.slane %v2265, 2
        %v2437 = vsel %vm2405, %v2428, %v2436
        %v2438 = vrot.slane %v2266, 2
        %v2439 = vsel %vm2405, %v2430, %v2438
        %v2440 = vrot.slane %v2267, 2
        %v2441 = vsel %vm2405, %v2432, %v2440
        %2462 = vmatprep.subr.mxu0 %v2270
        %2463 = vmatpush1.msra.mxu0 %v2269
        %2464 = vmatprep.subr.mxu0 %v2272
        %2465 = vmatpush1.msra.mxu0 %v2271
        %2466 = vmatprep.subr.mxu0 %v2274
        %2467 = vmatpush1.msra.mxu0 %v2273
        %2468 = vmatprep.subr.mxu0 %v2276
        %2469 = vmatpush1.msra.mxu0 %v2275
        %2470 = vmatprep.subr.mxu0 %v2278
        %2471 = vmatpush1.msra.mxu0 %v2277
        %2472 = vmatprep.subr.mxu0 %v2280
        %2473 = vmatpush1.msra.mxu0 %v2279
        %2474 = vmatprep.subr.mxu0 %v2282
        %2475 = vmatpush1.msra.mxu0 %v2281
        %2476 = vmatprep.subr.mxu0 %v2284
        %2477 = vmatpush1.msra.mxu0 %v2283
        %2478 = vmatprep.subr.mxu0 %v2286
        %2479 = vmatpush1.msra.mxu0 %v2285
        %2480 = vmatprep.subr.mxu0 %v2288
        %2481 = vmatpush1.msra.mxu0 %v2287
        %2482 = vmatprep.subr.mxu0 %v2290
        %2483 = vmatpush1.msra.mxu0 %v2289
        %2484 = vmatprep.subr.mxu0 %v2292
        %2485 = vmatpush1.msra.mxu0 %v2291
        %2486 = vmatprep.subr.mxu0 %v2294
        %2487 = vmatpush1.msra.mxu0 %v2293
        %2488 = vmatprep.subr.mxu0 %v2296
        %2489 = vmatpush1.msra.mxu0 %v2295
        %2490 = vmatprep.subr.mxu0 %v2298
        %2491 = vmatpush1.msra.mxu0 %v2297
        %2492 = vmatprep.subr.mxu0 %v2300
        %2493 = vmatpush1.msra.mxu0 %v2299
        %2494 = vmatprep.subr.mxu0 %v2302
        %2495 = vmatpush1.msra.mxu0 %v2301
        %2496 = vmatprep.subr.mxu0 %v2304
        %2497 = vmatpush1.msra.mxu0 %v2303
        %2498 = vmatprep.subr.mxu0 %v2306
        %2499 = vmatpush1.msra.mxu0 %v2305
        %2500 = vmatprep.subr.mxu0 %v2308
        %2501 = vmatpush1.msra.mxu0 %v2307
        %2502 = vmatprep.subr.mxu0 %v2310
        %2503 = vmatpush1.msra.mxu0 %v2309
        %2504 = vmatprep.subr.mxu0 %v2312
        %2505 = vmatpush1.msra.mxu0 %v2311
        %2506 = vmatprep.subr.mxu0 %v2314
        %2507 = vmatpush1.msra.mxu0 %v2313
        %2508 = vmatprep.subr.mxu0 %v2316
        %2509 = vmatpush1.msra.mxu0 %v2315
        %2510 = vmatprep.subr.mxu0 %v2318
        %2511 = vmatpush1.msra.mxu0 %v2317
        %2512 = vmatprep.subr.mxu0 %v2320
        %2513 = vmatpush1.msra.mxu0 %v2319
        %2514 = vmatprep.subr.mxu0 %v2322
        %2515 = vmatpush1.msra.mxu0 %v2321
        %2516 = vmatprep.subr.mxu0 %v2324
        %2517 = vmatpush1.msra.mxu0 %v2323
        %2518 = vmatprep.subr.mxu0 %v2326
        %2519 = vmatpush1.msra.mxu0 %v2325
        %2520 = vmatprep.subr.mxu0 %v2328
        %2521 = vmatpush1.msra.mxu0 %v2327
        %2522 = vmatprep.subr.mxu0 %v2330
        %2523 = vmatpush1.msra.mxu0 %v2329
        %2524 = vmatprep.subr.mxu0 %v2332
        %2525 = vmatpush1.msra.mxu0 %v2331
        %2526 = vmatprep.mubr.f32.mxu0 %v2411
        %2527 = vmatmul.mubr.f32.gmra.mrb[0].mxu0 %v2408
        %v2528 = vpop.f32.mrb[0].mxu0
        %v2529 = vadd.f32 0.0, %v2528
        %v2530 = vpop.f32.mrb[0].mxu0
        %v2531 = vadd.f32 0.0, %v2530
        %2532 = vmatprep.mubr.f32.mxu0 %v2421
        %2533 = vmatmul.mubr.f32.gmra.mrb[0].mxu0 %v2419
        %v2534 = vpop.f32.mrb[0].mxu0
        %v2535 = vadd.f32 0.0, %v2534
        %v2536 = vpop.f32.mrb[0].mxu0
        %v2537 = vadd.f32 0.0, %v2536
        %2538 = vmatprep.mubr.f32.mxu0 %v2429
        %2539 = vmatmul.mubr.f32.gmra.mrb[0].mxu0 %v2427
        %v2540 = vpop.f32.mrb[0].mxu0
        %v2541 = vadd.f32 0.0, %v2540
        %v2542 = vpop.f32.mrb[0].mxu0
        %v2543 = vadd.f32 0.0, %v2542
        %2544 = vmatprep.mubr.f32.mxu0 %v2437
        %2545 = vmatmul.mubr.f32.gmra.mrb[0].mxu0 %v2435
        %v2546 = vpop.f32.mrb[0].mxu0
        %v2547 = vadd.f32 0.0, %v2546
        %v2548 = vpop.f32.mrb[0].mxu0
        %v2549 = vadd.f32 0.0, %v2548
        %2550 = vmatprep.mubr.f32.mxu0 %v2436
        %2551 = vmatmul.mubr.f32.gmra.mrb[0].mxu0 %v2434
        %v2552 = vpop.f32.mrb[0].mxu0
        %v2553 = vadd.f32 0.0, %v2552
        %v2554 = vpop.f32.mrb[0].mxu0
        %v2555 = vadd.f32 0.0, %v2554
        %2556 = vdwg.mxu0
        %2557 = vmatprep.subr.mxu0 %v2334
        %2558 = vmatpush1.msra.mxu0 %v2333
        %2559 = vmatprep.subr.mxu0 %v2336
        %2560 = vmatpush1.msra.mxu0 %v2335
        %2561 = vmatprep.subr.mxu0 %v2338
        %2562 = vmatpush1.msra.mxu0 %v2337
        %2563 = vmatprep.subr.mxu0 %v2340
        %2564 = vmatpush1.msra.mxu0 %v2339
        %2565 = vmatprep.subr.mxu0 %v2342
        %2566 = vmatpush1.msra.mxu0 %v2341
        %2567 = vmatprep.subr.mxu0 %v2344
        %2568 = vmatpush1.msra.mxu0 %v2343
        %2569 = vmatprep.subr.mxu0 %v2346
        %2570 = vmatpush1.msra.mxu0 %v2345
        %2571 = vmatprep.subr.mxu0 %v2348
        %2572 = vmatpush1.msra.mxu0 %v2347
        %2573 = vmatprep.subr.mxu0 %v2350
        %2574 = vmatpush1.msra.mxu0 %v2349
        %2575 = vmatprep.subr.mxu0 %v2352
        %2576 = vmatpush1.msra.mxu0 %v2351
        %2577 = vmatprep.subr.mxu0 %v2354
        %2578 = vmatpush1.msra.mxu0 %v2353
        %2579 = vmatprep.subr.mxu0 %v2356
        %2580 = vmatpush1.msra.mxu0 %v2355
        %2581 = vmatprep.subr.mxu0 %v2358
        %2582 = vmatpush1.msra.mxu0 %v2357
        %2583 = vmatprep.subr.mxu0 %v2360
        %2584 = vmatpush1.msra.mxu0 %v2359
        %2585 = vmatprep.subr.mxu0 %v2362
        %2586 = vmatpush1.msra.mxu0 %v2361
        %2587 = vmatprep.subr.mxu0 %v2364
        %2588 = vmatpush1.msra.mxu0 %v2363
        %2589 = vmatprep.subr.mxu0 %v2366
        %2590 = vmatpush1.msra.mxu0 %v2365
        %2591 = vmatprep.subr.mxu0 %v2368
        %2592 = vmatpush1.msra.mxu0 %v2367
        %2593 = vmatprep.subr.mxu0 %v2370
        %2594 = vmatpush1.msra.mxu0 %v2369
        %2595 = vmatprep.subr.mxu0 %v2372
        %2596 = vmatpush1.msra.mxu0 %v2371
        %2597 = vmatprep.subr.mxu0 %v2374
        %2598 = vmatpush1.msra.mxu0 %v2373
        %2599 = vmatprep.subr.mxu0 %v2376
        %2600 = vmatpush1.msra.mxu0 %v2375
        %2601 = vmatprep.subr.mxu0 %v2378
        %2602 = vmatpush1.msra.mxu0 %v2377
        %2603 = vmatprep.subr.mxu0 %v2380
        %2604 = vmatpush1.msra.mxu0 %v2379
        %2605 = vmatprep.subr.mxu0 %v2382
        %2606 = vmatpush1.msra.mxu0 %v2381
        %2607 = vmatprep.subr.mxu0 %v2384
        %2608 = vmatpush1.msra.mxu0 %v2383
        %2609 = vmatprep.subr.mxu0 %v2386
        %2610 = vmatpush1.msra.mxu0 %v2385
        %2611 = vmatprep.subr.mxu0 %v2388
        %2612 = vmatpush1.msra.mxu0 %v2387
        %2613 = vmatprep.subr.mxu0 %v2390
        %2614 = vmatpush1.msra.mxu0 %v2389
        %2615 = vmatprep.subr.mxu0 %v2392
        %2616 = vmatpush1.msra.mxu0 %v2391
        %2617 = vmatprep.subr.mxu0 %v2394
        %2618 = vmatpush1.msra.mxu0 %v2393
        %2619 = vmatprep.subr.mxu0 %v2396
        %2620 = vmatpush1.msra.mxu0 %v2395
        %2621 = vmatprep.mubr.f32.mxu0 %v2417
        %2622 = vmatmul.mubr.f32.gmra.mrb[0].mxu0 %v2414
        %v2623 = vpop.f32.mrb[0].mxu0
        %v2624 = vadd.f32 %v2529, %v2623
        %v2625 = vpop.f32.mrb[0].mxu0
        %v2626 = vadd.f32 %v2531, %v2625
        %2627 = vmatprep.mubr.f32.mxu0 %v2425
        %2628 = vmatmul.mubr.f32.gmra.mrb[0].mxu0 %v2423
        %v2629 = vpop.f32.mrb[0].mxu0
        %v2630 = vadd.f32 %v2535, %v2629
        %v2631 = vpop.f32.mrb[0].mxu0
        %v2632 = vadd.f32 %v2537, %v2631
        %2633 = vmatprep.mubr.f32.mxu0 %v2433
        %2634 = vmatmul.mubr.f32.gmra.mrb[0].mxu0 %v2431
        %v2635 = vpop.f32.mrb[0].mxu0
        %v2636 = vadd.f32 %v2541, %v2635
        %v2637 = vpop.f32.mrb[0].mxu0
        %v2638 = vadd.f32 %v2543, %v2637
        %2639 = vmatprep.mubr.f32.mxu0 %v2441
        %2640 = vmatmul.mubr.f32.gmra.mrb[0].mxu0 %v2439
        %v2641 = vpop.f32.mrb[0].mxu0
        %v2642 = vadd.f32 %v2547, %v2641
        %v2643 = vpop.f32.mrb[0].mxu0
        %v2644 = vadd.f32 %v2549, %v2643
        %2645 = vmatprep.mubr.f32.mxu0 %v2440
        %2646 = vmatmul.mubr.f32.gmra.mrb[0].mxu0 %v2438
        %v2647 = vpop.f32.mrb[0].mxu0
        %v2648 = vadd.f32 %v2553, %v2647
        %v2649 = vpop.f32.mrb[0].mxu0
        %v2650 = vadd.f32 %v2555, %v2649
        %2651 = vdwg.mxu0
        %v2652 = vadd.f32 %v2232, %v2624
        %v2653 = vadd.f32 %v2234, %v2626
        %v2654 = vadd.f32 %v2238, %v2630
        %v2655 = vadd.f32 %v2240, %v2632
        %v2656 = vadd.f32 %v2244, %v2636
        %v2657 = vadd.f32 %v2246, %v2638
        %v2658 = vadd.f32 %v2250, %v2642
        %v2659 = vadd.f32 %v2252, %v2644
        %v2660 = vadd.f32 %v2256, %v2648
        %v2661 = vadd.f32 %v2258, %v2650
        %v2662 = vld [vmem:[#allocation13] sm:$0xff]
        %v2663 = vld [vmem:[#allocation13 + $0x8] sm:$0xff]
        %v2664 = vld [vmem:[#allocation13 + $0x10] sm:$0xff]
        %v2665 = vld [vmem:[#allocation13 + $0x18] sm:$0xff]
        %v2666 = vld [vmem:[#allocation13 + $0x20] sm:$0xff]
        %v2667 = vld [vmem:[#allocation13 + $0x28] sm:$0xff]
        %v2668 = vld [vmem:[#allocation13 + $0x30] sm:$0xff]
        %v2669 = vld [vmem:[#allocation13 + $0x38] sm:$0xff]
        %v2670 = vld [vmem:[#allocation13 + $0x40] sm:$0xff]
        %v2671 = vld [vmem:[#allocation13 + $0x48] sm:$0xff]
        %v2672 = vld [vmem:[#allocation13 + $0x50] sm:$0xff]
        %v2673 = vld [vmem:[#allocation13 + $0x58] sm:$0xff]
        %v2674 = vld [vmem:[#allocation13 + $0x60] sm:$0xff]
        %v2675 = vld [vmem:[#allocation13 + $0x68] sm:$0xff]
        %v2676 = vld [vmem:[#allocation13 + $0x70] sm:$0xff]
        %v2677 = vld [vmem:[#allocation13 + $0x78] sm:$0xff]
        %v2678 = vld [vmem:[#allocation13 + $0x80] sm:$0xff]
        %v2679 = vld [vmem:[#allocation13 + $0x88] sm:$0xff]
        %v2680 = vld [vmem:[#allocation13 + $0x90] sm:$0xff]
        %v2681 = vld [vmem:[#allocation13 + $0x98] sm:$0xff]
        %v2682 = vld [vmem:[#allocation13 + $0xa0] sm:$0xff]
        %v2683 = vld [vmem:[#allocation13 + $0xa8] sm:$0xff]
        %v2684 = vld [vmem:[#allocation13 + $0xb0] sm:$0xff]
        %v2685 = vld [vmem:[#allocation13 + $0xb8] sm:$0xff]
        %v2686 = vld [vmem:[#allocation13 + $0xc0] sm:$0xff]
        %v2687 = vld [vmem:[#allocation13 + $0xc8] sm:$0xff]
        %v2688 = vld [vmem:[#allocation13 + $0xd0] sm:$0xff]
        %v2689 = vld [vmem:[#allocation13 + $0xd8] sm:$0xff]
        %v2690 = vld [vmem:[#allocation13 + $0xe0] sm:$0xff]
        %v2691 = vld [vmem:[#allocation13 + $0xe8] sm:$0xff]
        %v2692 = vld [vmem:[#allocation13 + $0xf0] sm:$0xff]
        %v2693 = vld [vmem:[#allocation13 + $0xf8] sm:$0xff]
        %v2694 = vld [vmem:[#allocation13 + $0x100] sm:$0xff]
        %v2695 = vld [vmem:[#allocation13 + $0x108] sm:$0xff]
        %v2696 = vld [vmem:[#allocation13 + $0x110] sm:$0xff]
        %v2697 = vld [vmem:[#allocation13 + $0x118] sm:$0xff]
        %v2698 = vld [vmem:[#allocation13 + $0x120] sm:$0xff]
        %v2699 = vld [vmem:[#allocation13 + $0x128] sm:$0xff]
        %v2700 = vld [vmem:[#allocation13 + $0x130] sm:$0xff]
        %v2701 = vld [vmem:[#allocation13 + $0x138] sm:$0xff]
        %v2702 = vld [vmem:[#allocation13 + $0x140] sm:$0xff]
        %v2703 = vld [vmem:[#allocation13 + $0x148] sm:$0xff]
        %v2704 = vld [vmem:[#allocation13 + $0x150] sm:$0xff]
        %v2705 = vld [vmem:[#allocation13 + $0x158] sm:$0xff]
        %v2706 = vld [vmem:[#allocation13 + $0x160] sm:$0xff]
        %v2707 = vld [vmem:[#allocation13 + $0x168] sm:$0xff]
        %v2708 = vld [vmem:[#allocation13 + $0x170] sm:$0xff]
        %v2709 = vld [vmem:[#allocation13 + $0x178] sm:$0xff]
        %v2710 = vld [vmem:[#allocation13 + $0x180] sm:$0xff]
        %v2711 = vld [vmem:[#allocation13 + $0x188] sm:$0xff]
        %v2712 = vld [vmem:[#allocation13 + $0x190] sm:$0xff]
        %v2713 = vld [vmem:[#allocation13 + $0x198] sm:$0xff]
        %v2714 = vld [vmem:[#allocation13 + $0x1a0] sm:$0xff]
        %v2715 = vld [vmem:[#allocation13 + $0x1a8] sm:$0xff]
        %v2716 = vld [vmem:[#allocation13 + $0x1b0] sm:$0xff]
        %v2717 = vld [vmem:[#allocation13 + $0x1b8] sm:$0xff]
        %v2718 = vld [vmem:[#allocation13 + $0x1c0] sm:$0xff]
        %v2719 = vld [vmem:[#allocation13 + $0x1c8] sm:$0xff]
        %v2720 = vld [vmem:[#allocation13 + $0x1d0] sm:$0xff]
        %v2721 = vld [vmem:[#allocation13 + $0x1d8] sm:$0xff]
        %v2722 = vld [vmem:[#allocation13 + $0x1e0] sm:$0xff]
        %v2723 = vld [vmem:[#allocation13 + $0x1e8] sm:$0xff]
        %v2724 = vld [vmem:[#allocation13 + $0x1f0] sm:$0xff]
        %v2725 = vld [vmem:[#allocation13 + $0x1f8] sm:$0xff]
        %v2726 = vld [vmem:[#allocation13 + $0x200] sm:$0xff]
        %v2727 = vld [vmem:[#allocation13 + $0x208] sm:$0xff]
        %v2728 = vld [vmem:[#allocation13 + $0x210] sm:$0xff]
        %v2729 = vld [vmem:[#allocation13 + $0x218] sm:$0xff]
        %v2730 = vld [vmem:[#allocation13 + $0x220] sm:$0xff]
        %v2731 = vld [vmem:[#allocation13 + $0x228] sm:$0xff]
        %v2732 = vld [vmem:[#allocation13 + $0x230] sm:$0xff]
        %v2733 = vld [vmem:[#allocation13 + $0x238] sm:$0xff]
        %v2734 = vld [vmem:[#allocation13 + $0x240] sm:$0xff]
        %v2735 = vld [vmem:[#allocation13 + $0x248] sm:$0xff]
        %v2736 = vld [vmem:[#allocation13 + $0x250] sm:$0xff]
        %v2737 = vld [vmem:[#allocation13 + $0x258] sm:$0xff]
        %v2738 = vld [vmem:[#allocation13 + $0x260] sm:$0xff]
        %v2739 = vld [vmem:[#allocation13 + $0x268] sm:$0xff]
        %v2740 = vld [vmem:[#allocation13 + $0x270] sm:$0xff]
        %v2741 = vld [vmem:[#allocation13 + $0x278] sm:$0xff]
        %v2742 = vld [vmem:[#allocation13 + $0x280] sm:$0xff]
        %v2743 = vld [vmem:[#allocation13 + $0x288] sm:$0xff]
        %v2744 = vld [vmem:[#allocation13 + $0x290] sm:$0xff]
        %v2745 = vld [vmem:[#allocation13 + $0x298] sm:$0xff]
        %v2746 = vld [vmem:[#allocation13 + $0x2a0] sm:$0xff]
        %v2747 = vld [vmem:[#allocation13 + $0x2a8] sm:$0xff]
        %v2748 = vld [vmem:[#allocation13 + $0x2b0] sm:$0xff]
        %v2749 = vld [vmem:[#allocation13 + $0x2b8] sm:$0xff]
        %v2750 = vld [vmem:[#allocation13 + $0x2c0] sm:$0xff]
        %v2751 = vld [vmem:[#allocation13 + $0x2c8] sm:$0xff]
        %v2752 = vld [vmem:[#allocation13 + $0x2d0] sm:$0xff]
        %v2753 = vld [vmem:[#allocation13 + $0x2d8] sm:$0xff]
        %v2754 = vld [vmem:[#allocation13 + $0x2e0] sm:$0xff]
        %v2755 = vld [vmem:[#allocation13 + $0x2e8] sm:$0xff]
        %v2756 = vld [vmem:[#allocation13 + $0x2f0] sm:$0xff]
        %v2757 = vld [vmem:[#allocation13 + $0x2f8] sm:$0xff]
        %v2758 = vld [vmem:[#allocation13 + $0x300] sm:$0xff]
        %v2759 = vld [vmem:[#allocation13 + $0x308] sm:$0xff]
        %v2760 = vld [vmem:[#allocation13 + $0x310] sm:$0xff]
        %v2761 = vld [vmem:[#allocation13 + $0x318] sm:$0xff]
        %v2762 = vld [vmem:[#allocation13 + $0x320] sm:$0xff]
        %v2763 = vld [vmem:[#allocation13 + $0x328] sm:$0xff]
        %v2764 = vld [vmem:[#allocation13 + $0x330] sm:$0xff]
        %v2765 = vld [vmem:[#allocation13 + $0x338] sm:$0xff]
        %v2766 = vld [vmem:[#allocation13 + $0x340] sm:$0xff]
        %v2767 = vld [vmem:[#allocation13 + $0x348] sm:$0xff]
        %v2768 = vld [vmem:[#allocation13 + $0x350] sm:$0xff]
        %v2769 = vld [vmem:[#allocation13 + $0x358] sm:$0xff]
        %v2770 = vld [vmem:[#allocation13 + $0x360] sm:$0xff]
        %v2771 = vld [vmem:[#allocation13 + $0x368] sm:$0xff]
        %v2772 = vld [vmem:[#allocation13 + $0x370] sm:$0xff]
        %v2773 = vld [vmem:[#allocation13 + $0x378] sm:$0xff]
        %v2774 = vld [vmem:[#allocation13 + $0x380] sm:$0xff]
        %v2775 = vld [vmem:[#allocation13 + $0x388] sm:$0xff]
        %v2776 = vld [vmem:[#allocation13 + $0x390] sm:$0xff]
        %v2777 = vld [vmem:[#allocation13 + $0x398] sm:$0xff]
        %v2778 = vld [vmem:[#allocation13 + $0x3a0] sm:$0xff]
        %v2779 = vld [vmem:[#allocation13 + $0x3a8] sm:$0xff]
        %v2780 = vld [vmem:[#allocation13 + $0x3b0] sm:$0xff]
        %v2781 = vld [vmem:[#allocation13 + $0x3b8] sm:$0xff]
        %v2782 = vld [vmem:[#allocation13 + $0x3c0] sm:$0xff]
        %v2783 = vld [vmem:[#allocation13 + $0x3c8] sm:$0xff]
        %v2784 = vld [vmem:[#allocation13 + $0x3d0] sm:$0xff]
        %v2785 = vld [vmem:[#allocation13 + $0x3d8] sm:$0xff]
        %v2786 = vld [vmem:[#allocation13 + $0x3e0] sm:$0xff]
        %v2787 = vld [vmem:[#allocation13 + $0x3e8] sm:$0xff]
        %v2788 = vld [vmem:[#allocation13 + $0x3f0] sm:$0xff]
        %v2789 = vld [vmem:[#allocation13 + $0x3f8] sm:$0xff]
        %s2790 = scalar_lea.vmem [#allocation13], 1024
        %v2791 = vld [vmem:[%s2790] sm:$0xff]
        %v2792 = vld [vmem:[%s2790 + $0x8] sm:$0xff]
        %v2793 = vld [vmem:[%s2790 + $0x10] sm:$0xff]
        %v2794 = vld [vmem:[%s2790 + $0x18] sm:$0xff]
        %v2795 = vld [vmem:[%s2790 + $0x20] sm:$0xff]
        %v2796 = vld [vmem:[%s2790 + $0x28] sm:$0xff]
        %v2797 = vld [vmem:[%s2790 + $0x30] sm:$0xff]
        %v2798 = vld [vmem:[%s2790 + $0x38] sm:$0xff]
        %v2799 = vld [vmem:[%s2790 + $0x40] sm:$0xff]
        %v2800 = vld [vmem:[%s2790 + $0x48] sm:$0xff]
        %v2801 = vld [vmem:[%s2790 + $0x50] sm:$0xff]
        %v2802 = vld [vmem:[%s2790 + $0x58] sm:$0xff]
        %v2803 = vld [vmem:[%s2790 + $0x60] sm:$0xff]
        %v2804 = vld [vmem:[%s2790 + $0x68] sm:$0xff]
        %v2805 = vld [vmem:[%s2790 + $0x70] sm:$0xff]
        %v2806 = vld [vmem:[%s2790 + $0x78] sm:$0xff]
        %v2807 = vld [vmem:[%s2790 + $0x80] sm:$0xff]
        %v2808 = vld [vmem:[%s2790 + $0x88] sm:$0xff]
        %v2809 = vld [vmem:[%s2790 + $0x90] sm:$0xff]
        %v2810 = vld [vmem:[%s2790 + $0x98] sm:$0xff]
        %v2811 = vld [vmem:[%s2790 + $0xa0] sm:$0xff]
        %v2812 = vld [vmem:[%s2790 + $0xa8] sm:$0xff]
        %v2813 = vld [vmem:[%s2790 + $0xb0] sm:$0xff]
        %v2814 = vld [vmem:[%s2790 + $0xb8] sm:$0xff]
        %v2815 = vld [vmem:[%s2790 + $0xc0] sm:$0xff]
        %v2816 = vld [vmem:[%s2790 + $0xc8] sm:$0xff]
        %v2817 = vld [vmem:[%s2790 + $0xd0] sm:$0xff]
        %v2818 = vld [vmem:[%s2790 + $0xd8] sm:$0xff]
        %v2819 = vld [vmem:[%s2790 + $0xe0] sm:$0xff]
        %v2820 = vld [vmem:[%s2790 + $0xe8] sm:$0xff]
        %v2821 = vld [vmem:[%s2790 + $0xf0] sm:$0xff]
        %v2822 = vld [vmem:[%s2790 + $0xf8] sm:$0xff]
        %v2823 = vld [vmem:[%s2790 + $0x100] sm:$0xff]
        %v2824 = vld [vmem:[%s2790 + $0x108] sm:$0xff]
        %v2825 = vld [vmem:[%s2790 + $0x110] sm:$0xff]
        %v2826 = vld [vmem:[%s2790 + $0x118] sm:$0xff]
        %v2827 = vld [vmem:[%s2790 + $0x120] sm:$0xff]
        %v2828 = vld [vmem:[%s2790 + $0x128] sm:$0xff]
        %v2829 = vld [vmem:[%s2790 + $0x130] sm:$0xff]
        %v2830 = vld [vmem:[%s2790 + $0x138] sm:$0xff]
        %v2831 = vld [vmem:[%s2790 + $0x140] sm:$0xff]
        %v2832 = vld [vmem:[%s2790 + $0x148] sm:$0xff]
        %v2833 = vld [vmem:[%s2790 + $0x150] sm:$0xff]
        %v2834 = vld [vmem:[%s2790 + $0x158] sm:$0xff]
        %v2835 = vld [vmem:[%s2790 + $0x160] sm:$0xff]
        %v2836 = vld [vmem:[%s2790 + $0x168] sm:$0xff]
        %v2837 = vld [vmem:[%s2790 + $0x170] sm:$0xff]
        %v2838 = vld [vmem:[%s2790 + $0x178] sm:$0xff]
        %v2839 = vld [vmem:[%s2790 + $0x180] sm:$0xff]
        %v2840 = vld [vmem:[%s2790 + $0x188] sm:$0xff]
        %v2841 = vld [vmem:[%s2790 + $0x190] sm:$0xff]
        %v2842 = vld [vmem:[%s2790 + $0x198] sm:$0xff]
        %v2843 = vld [vmem:[%s2790 + $0x1a0] sm:$0xff]
        %v2844 = vld [vmem:[%s2790 + $0x1a8] sm:$0xff]
        %v2845 = vld [vmem:[%s2790 + $0x1b0] sm:$0xff]
        %v2846 = vld [vmem:[%s2790 + $0x1b8] sm:$0xff]
        %v2847 = vld [vmem:[%s2790 + $0x1c0] sm:$0xff]
        %v2848 = vld [vmem:[%s2790 + $0x1c8] sm:$0xff]
        %v2849 = vld [vmem:[%s2790 + $0x1d0] sm:$0xff]
        %v2850 = vld [vmem:[%s2790 + $0x1d8] sm:$0xff]
        %v2851 = vld [vmem:[%s2790 + $0x1e0] sm:$0xff]
        %v2852 = vld [vmem:[%s2790 + $0x1e8] sm:$0xff]
        %v2853 = vld [vmem:[%s2790 + $0x1f0] sm:$0xff]
        %v2854 = vld [vmem:[%s2790 + $0x1f8] sm:$0xff]
        %v2855 = vld [vmem:[%s2790 + $0x200] sm:$0xff]
        %v2856 = vld [vmem:[%s2790 + $0x208] sm:$0xff]
        %v2857 = vld [vmem:[%s2790 + $0x210] sm:$0xff]
        %v2858 = vld [vmem:[%s2790 + $0x218] sm:$0xff]
        %v2859 = vld [vmem:[%s2790 + $0x220] sm:$0xff]
        %v2860 = vld [vmem:[%s2790 + $0x228] sm:$0xff]
        %v2861 = vld [vmem:[%s2790 + $0x230] sm:$0xff]
        %v2862 = vld [vmem:[%s2790 + $0x238] sm:$0xff]
        %v2863 = vld [vmem:[%s2790 + $0x240] sm:$0xff]
        %v2864 = vld [vmem:[%s2790 + $0x248] sm:$0xff]
        %v2865 = vld [vmem:[%s2790 + $0x250] sm:$0xff]
        %v2866 = vld [vmem:[%s2790 + $0x258] sm:$0xff]
        %v2867 = vld [vmem:[%s2790 + $0x260] sm:$0xff]
        %v2868 = vld [vmem:[%s2790 + $0x268] sm:$0xff]
        %v2869 = vld [vmem:[%s2790 + $0x270] sm:$0xff]
        %v2870 = vld [vmem:[%s2790 + $0x278] sm:$0xff]
        %v2871 = vld [vmem:[%s2790 + $0x280] sm:$0xff]
        %v2872 = vld [vmem:[%s2790 + $0x288] sm:$0xff]
        %v2873 = vld [vmem:[%s2790 + $0x290] sm:$0xff]
        %v2874 = vld [vmem:[%s2790 + $0x298] sm:$0xff]
        %v2875 = vld [vmem:[%s2790 + $0x2a0] sm:$0xff]
        %v2876 = vld [vmem:[%s2790 + $0x2a8] sm:$0xff]
        %v2877 = vld [vmem:[%s2790 + $0x2b0] sm:$0xff]
        %v2878 = vld [vmem:[%s2790 + $0x2b8] sm:$0xff]
        %v2879 = vld [vmem:[%s2790 + $0x2c0] sm:$0xff]
        %v2880 = vld [vmem:[%s2790 + $0x2c8] sm:$0xff]
        %v2881 = vld [vmem:[%s2790 + $0x2d0] sm:$0xff]
        %v2882 = vld [vmem:[%s2790 + $0x2d8] sm:$0xff]
        %v2883 = vld [vmem:[%s2790 + $0x2e0] sm:$0xff]
        %v2884 = vld [vmem:[%s2790 + $0x2e8] sm:$0xff]
        %v2885 = vld [vmem:[%s2790 + $0x2f0] sm:$0xff]
        %v2886 = vld [vmem:[%s2790 + $0x2f8] sm:$0xff]
        %v2887 = vld [vmem:[%s2790 + $0x300] sm:$0xff]
        %v2888 = vld [vmem:[%s2790 + $0x308] sm:$0xff]
        %v2889 = vld [vmem:[%s2790 + $0x310] sm:$0xff]
        %v2890 = vld [vmem:[%s2790 + $0x318] sm:$0xff]
        %v2891 = vld [vmem:[%s2790 + $0x320] sm:$0xff]
        %v2892 = vld [vmem:[%s2790 + $0x328] sm:$0xff]
        %v2893 = vld [vmem:[%s2790 + $0x330] sm:$0xff]
        %v2894 = vld [vmem:[%s2790 + $0x338] sm:$0xff]
        %v2895 = vld [vmem:[%s2790 + $0x340] sm:$0xff]
        %v2896 = vld [vmem:[%s2790 + $0x348] sm:$0xff]
        %v2897 = vld [vmem:[%s2790 + $0x350] sm:$0xff]
        %v2898 = vld [vmem:[%s2790 + $0x358] sm:$0xff]
        %v2899 = vld [vmem:[%s2790 + $0x360] sm:$0xff]
        %v2900 = vld [vmem:[%s2790 + $0x368] sm:$0xff]
        %v2901 = vld [vmem:[%s2790 + $0x370] sm:$0xff]
        %v2902 = vld [vmem:[%s2790 + $0x378] sm:$0xff]
        %v2903 = vld [vmem:[%s2790 + $0x380] sm:$0xff]
        %v2904 = vld [vmem:[%s2790 + $0x388] sm:$0xff]
        %v2905 = vld [vmem:[%s2790 + $0x390] sm:$0xff]
        %v2906 = vld [vmem:[%s2790 + $0x398] sm:$0xff]
        %v2907 = vld [vmem:[%s2790 + $0x3a0] sm:$0xff]
        %v2908 = vld [vmem:[%s2790 + $0x3a8] sm:$0xff]
        %v2909 = vld [vmem:[%s2790 + $0x3b0] sm:$0xff]
        %v2910 = vld [vmem:[%s2790 + $0x3b8] sm:$0xff]
        %v2911 = vld [vmem:[%s2790 + $0x3c0] sm:$0xff]
        %v2912 = vld [vmem:[%s2790 + $0x3c8] sm:$0xff]
        %v2913 = vld [vmem:[%s2790 + $0x3d0] sm:$0xff]
        %v2914 = vld [vmem:[%s2790 + $0x3d8] sm:$0xff]
        %v2915 = vld [vmem:[%s2790 + $0x3e0] sm:$0xff]
        %v2916 = vld [vmem:[%s2790 + $0x3e8] sm:$0xff]
        %v2917 = vld [vmem:[%s2790 + $0x3f0] sm:$0xff]
        %v2918 = vld [vmem:[%s2790 + $0x3f8] sm:$0xff]
        %2919 = vmatprep.subr.mxu0 %v2792
        %2920 = vmatpush1.msra.mxu0 %v2791
        %2921 = vmatprep.subr.mxu0 %v2794
        %2922 = vmatpush1.msra.mxu0 %v2793
        %2923 = vmatprep.subr.mxu0 %v2796
        %2924 = vmatpush1.msra.mxu0 %v2795
        %2925 = vmatprep.subr.mxu0 %v2798
        %2926 = vmatpush1.msra.mxu0 %v2797
        %2927 = vmatprep.subr.mxu0 %v2800
        %2928 = vmatpush1.msra.mxu0 %v2799
        %2929 = vmatprep.subr.mxu0 %v2802
        %2930 = vmatpush1.msra.mxu0 %v2801
        %2931 = vmatprep.subr.mxu0 %v2804
        %2932 = vmatpush1.msra.mxu0 %v2803
        %2933 = vmatprep.subr.mxu0 %v2806
        %2934 = vmatpush1.msra.mxu0 %v2805
        %2935 = vmatprep.subr.mxu0 %v2808
        %2936 = vmatpush1.msra.mxu0 %v2807
        %2937 = vmatprep.subr.mxu0 %v2810
        %2938 = vmatpush1.msra.mxu0 %v2809
        %2939 = vmatprep.subr.mxu0 %v2812
        %2940 = vmatpush1.msra.mxu0 %v2811
        %2941 = vmatprep.subr.mxu0 %v2814
        %2942 = vmatpush1.msra.mxu0 %v2813
        %2943 = vmatprep.subr.mxu0 %v2816
        %2944 = vmatpush1.msra.mxu0 %v2815
        %2945 = vmatprep.subr.mxu0 %v2818
        %2946 = vmatpush1.msra.mxu0 %v2817
        %2947 = vmatprep.subr.mxu0 %v2820
        %2948 = vmatpush1.msra.mxu0 %v2819
        %2949 = vmatprep.subr.mxu0 %v2822
        %2950 = vmatpush1.msra.mxu0 %v2821
        %2951 = vmatprep.subr.mxu0 %v2824
        %2952 = vmatpush1.msra.mxu0 %v2823
        %2953 = vmatprep.subr.mxu0 %v2826
        %2954 = vmatpush1.msra.mxu0 %v2825
        %2955 = vmatprep.subr.mxu0 %v2828
        %2956 = vmatpush1.msra.mxu0 %v2827
        %2957 = vmatprep.subr.mxu0 %v2830
        %2958 = vmatpush1.msra.mxu0 %v2829
        %2959 = vmatprep.subr.mxu0 %v2832
        %2960 = vmatpush1.msra.mxu0 %v2831
        %2961 = vmatprep.subr.mxu0 %v2834
        %2962 = vmatpush1.msra.mxu0 %v2833
        %2963 = vmatprep.subr.mxu0 %v2836
        %2964 = vmatpush1.msra.mxu0 %v2835
        %2965 = vmatprep.subr.mxu0 %v2838
        %2966 = vmatpush1.msra.mxu0 %v2837
        %2967 = vmatprep.subr.mxu0 %v2840
        %2968 = vmatpush1.msra.mxu0 %v2839
        %2969 = vmatprep.subr.mxu0 %v2842
        %2970 = vmatpush1.msra.mxu0 %v2841
        %2971 = vmatprep.subr.mxu0 %v2844
        %2972 = vmatpush1.msra.mxu0 %v2843
        %2973 = vmatprep.subr.mxu0 %v2846
        %2974 = vmatpush1.msra.mxu0 %v2845
        %2975 = vmatprep.subr.mxu0 %v2848
        %2976 = vmatpush1.msra.mxu0 %v2847
        %2977 = vmatprep.subr.mxu0 %v2850
        %2978 = vmatpush1.msra.mxu0 %v2849
        %2979 = vmatprep.subr.mxu0 %v2852
        %2980 = vmatpush1.msra.mxu0 %v2851
        %2981 = vmatprep.subr.mxu0 %v2854
        %2982 = vmatpush1.msra.mxu0 %v2853
        %2983 = vmatprep.mubr.f32.mxu0 %v1829
        %2984 = vmatmul.mubr.f32.gmra.mrb[0].mxu0 %v1826
        %v2985 = vpop.f32.mrb[0].mxu0
        %v2986 = vadd.f32 0.0, %v2985
        %v2987 = vpop.f32.mrb[0].mxu0
        %v2988 = vadd.f32 0.0, %v2987
        %2989 = vmatprep.mubr.f32.mxu0 %v1839
        %2990 = vmatmul.mubr.f32.gmra.mrb[0].mxu0 %v1837
        %v2991 = vpop.f32.mrb[0].mxu0
        %v2992 = vadd.f32 0.0, %v2991
        %v2993 = vpop.f32.mrb[0].mxu0
        %v2994 = vadd.f32 0.0, %v2993
        %2995 = vmatprep.mubr.f32.mxu0 %v1847
        %2996 = vmatmul.mubr.f32.gmra.mrb[0].mxu0 %v1845
        %v2997 = vpop.f32.mrb[0].mxu0
        %v2998 = vadd.f32 0.0, %v2997
        %v2999 = vpop.f32.mrb[0].mxu0
        %v3000 = vadd.f32 0.0, %v2999
        %3001 = vmatprep.mubr.f32.mxu0 %v1855
        %3002 = vmatmul.mubr.f32.gmra.mrb[0].mxu0 %v1853
        %v3003 = vpop.f32.mrb[0].mxu0
        %v3004 = vadd.f32 0.0, %v3003
        %v3005 = vpop.f32.mrb[0].mxu0
        %v3006 = vadd.f32 0.0, %v3005
        %3007 = vmatprep.mubr.f32.mxu0 %v1854
        %3008 = vmatmul.mubr.f32.gmra.mrb[0].mxu0 %v1852
        %v3009 = vpop.f32.mrb[0].mxu0
        %v3010 = vadd.f32 0.0, %v3009
        %v3011 = vpop.f32.mrb[0].mxu0
        %v3012 = vadd.f32 0.0, %v3011
        %3013 = vdwg.mxu0
        %3014 = vmatprep.subr.mxu0 %v2856
        %3015 = vmatpush1.msra.mxu0 %v2855
        %3016 = vmatprep.subr.mxu0 %v2858
        %3017 = vmatpush1.msra.mxu0 %v2857
        %3018 = vmatprep.subr.mxu0 %v2860
        %3019 = vmatpush1.msra.mxu0 %v2859
        %3020 = vmatprep.subr.mxu0 %v2862
        %3021 = vmatpush1.msra.mxu0 %v2861
        %3022 = vmatprep.subr.mxu0 %v2864
        %3023 = vmatpush1.msra.mxu0 %v2863
        %3024 = vmatprep.subr.mxu0 %v2866
        %3025 = vmatpush1.msra.mxu0 %v2865
        %3026 = vmatprep.subr.mxu0 %v2868
        %3027 = vmatpush1.msra.mxu0 %v2867
        %3028 = vmatprep.subr.mxu0 %v2870
        %3029 = vmatpush1.msra.mxu0 %v2869
        %3030 = vmatprep.subr.mxu0 %v2872
        %3031 = vmatpush1.msra.mxu0 %v2871
        %3032 = vmatprep.subr.mxu0 %v2874
        %3033 = vmatpush1.msra.mxu0 %v2873
        %3034 = vmatprep.subr.mxu0 %v2876
        %3035 = vmatpush1.msra.mxu0 %v2875
        %3036 = vmatprep.subr.mxu0 %v2878
        %3037 = vmatpush1.msra.mxu0 %v2877
        %3038 = vmatprep.subr.mxu0 %v2880
        %3039 = vmatpush1.msra.mxu0 %v2879
        %3040 = vmatprep.subr.mxu0 %v2882
        %3041 = vmatpush1.msra.mxu0 %v2881
        %3042 = vmatprep.subr.mxu0 %v2884
        %3043 = vmatpush1.msra.mxu0 %v2883
        %3044 = vmatprep.subr.mxu0 %v2886
        %3045 = vmatpush1.msra.mxu0 %v2885
        %3046 = vmatprep.subr.mxu0 %v2888
        %3047 = vmatpush1.msra.mxu0 %v2887
        %3048 = vmatprep.subr.mxu0 %v2890
        %3049 = vmatpush1.msra.mxu0 %v2889
        %3050 = vmatprep.subr.mxu0 %v2892
        %3051 = vmatpush1.msra.mxu0 %v2891
        %3052 = vmatprep.subr.mxu0 %v2894
        %3053 = vmatpush1.msra.mxu0 %v2893
        %3054 = vmatprep.subr.mxu0 %v2896
        %3055 = vmatpush1.msra.mxu0 %v2895
        %3056 = vmatprep.subr.mxu0 %v2898
        %3057 = vmatpush1.msra.mxu0 %v2897
        %3058 = vmatprep.subr.mxu0 %v2900
        %3059 = vmatpush1.msra.mxu0 %v2899
        %3060 = vmatprep.subr.mxu0 %v2902
        %3061 = vmatpush1.msra.mxu0 %v2901
        %3062 = vmatprep.subr.mxu0 %v2904
        %3063 = vmatpush1.msra.mxu0 %v2903
        %3064 = vmatprep.subr.mxu0 %v2906
        %3065 = vmatpush1.msra.mxu0 %v2905
        %3066 = vmatprep.subr.mxu0 %v2908
        %3067 = vmatpush1.msra.mxu0 %v2907
        %3068 = vmatprep.subr.mxu0 %v2910
        %3069 = vmatpush1.msra.mxu0 %v2909
        %3070 = vmatprep.subr.mxu0 %v2912
        %3071 = vmatpush1.msra.mxu0 %v2911
        %3072 = vmatprep.subr.mxu0 %v2914
        %3073 = vmatpush1.msra.mxu0 %v2913
        %3074 = vmatprep.subr.mxu0 %v2916
        %3075 = vmatpush1.msra.mxu0 %v2915
        %3076 = vmatprep.subr.mxu0 %v2918
        %3077 = vmatpush1.msra.mxu0 %v2917
        %3078 = vmatprep.mubr.f32.mxu0 %v1835
        %3079 = vmatmul.mubr.f32.gmra.mrb[0].mxu0 %v1832
        %v3080 = vpop.f32.mrb[0].mxu0
        %v3081 = vadd.f32 %v2986, %v3080
        %v3082 = vpop.f32.mrb[0].mxu0
        %v3083 = vadd.f32 %v2988, %v3082
        %3084 = vmatprep.mubr.f32.mxu0 %v1843
        %3085 = vmatmul.mubr.f32.gmra.mrb[0].mxu0 %v1841
        %v3086 = vpop.f32.mrb[0].mxu0
        %v3087 = vadd.f32 %v2992, %v3086
        %v3088 = vpop.f32.mrb[0].mxu0
        %v3089 = vadd.f32 %v2994, %v3088
        %3090 = vmatprep.mubr.f32.mxu0 %v1851
        %3091 = vmatmul.mubr.f32.gmra.mrb[0].mxu0 %v1849
        %v3092 = vpop.f32.mrb[0].mxu0
        %v3093 = vadd.f32 %v2998, %v3092
        %v3094 = vpop.f32.mrb[0].mxu0
        %v3095 = vadd.f32 %v3000, %v3094
        %3096 = vmatprep.mubr.f32.mxu0 %v1859
        %3097 = vmatmul.mubr.f32.gmra.mrb[0].mxu0 %v1857
        %v3098 = vpop.f32.mrb[0].mxu0
        %v3099 = vadd.f32 %v3004, %v3098
        %v3100 = vpop.f32.mrb[0].mxu0
        %v3101 = vadd.f32 %v3006, %v3100
        %3102 = vmatprep.mubr.f32.mxu0 %v1858
        %3103 = vmatmul.mubr.f32.gmra.mrb[0].mxu0 %v1856
        %v3104 = vpop.f32.mrb[0].mxu0
        %v3105 = vadd.f32 %v3010, %v3104
        %v3106 = vpop.f32.mrb[0].mxu0
        %v3107 = vadd.f32 %v3012, %v3106
        %3108 = vdwg.mxu0
        %3109 = vmatprep.subr.mxu0 %v2663
        %3110 = vmatpush1.msra.mxu0 %v2662
        %3111 = vmatprep.subr.mxu0 %v2665
        %3112 = vmatpush1.msra.mxu0 %v2664
        %3113 = vmatprep.subr.mxu0 %v2667
        %3114 = vmatpush1.msra.mxu0 %v2666
        %3115 = vmatprep.subr.mxu0 %v2669
        %3116 = vmatpush1.msra.mxu0 %v2668
        %3117 = vmatprep.subr.mxu0 %v2671
        %3118 = vmatpush1.msra.mxu0 %v2670
        %3119 = vmatprep.subr.mxu0 %v2673
        %3120 = vmatpush1.msra.mxu0 %v2672
        %3121 = vmatprep.subr.mxu0 %v2675
        %3122 = vmatpush1.msra.mxu0 %v2674
        %3123 = vmatprep.subr.mxu0 %v2677
        %3124 = vmatpush1.msra.mxu0 %v2676
        %3125 = vmatprep.subr.mxu0 %v2679
        %3126 = vmatpush1.msra.mxu0 %v2678
        %3127 = vmatprep.subr.mxu0 %v2681
        %3128 = vmatpush1.msra.mxu0 %v2680
        %3129 = vmatprep.subr.mxu0 %v2683
        %3130 = vmatpush1.msra.mxu0 %v2682
        %3131 = vmatprep.subr.mxu0 %v2685
        %3132 = vmatpush1.msra.mxu0 %v2684
        %3133 = vmatprep.subr.mxu0 %v2687
        %3134 = vmatpush1.msra.mxu0 %v2686
        %3135 = vmatprep.subr.mxu0 %v2689
        %3136 = vmatpush1.msra.mxu0 %v2688
        %3137 = vmatprep.subr.mxu0 %v2691
        %3138 = vmatpush1.msra.mxu0 %v2690
        %3139 = vmatprep.subr.mxu0 %v2693
        %3140 = vmatpush1.msra.mxu0 %v2692
        %3141 = vmatprep.subr.mxu0 %v2695
        %3142 = vmatpush1.msra.mxu0 %v2694
        %3143 = vmatprep.subr.mxu0 %v2697
        %3144 = vmatpush1.msra.mxu0 %v2696
        %3145 = vmatprep.subr.mxu0 %v2699
        %3146 = vmatpush1.msra.mxu0 %v2698
        %3147 = vmatprep.subr.mxu0 %v2701
        %3148 = vmatpush1.msra.mxu0 %v2700
        %3149 = vmatprep.subr.mxu0 %v2703
        %3150 = vmatpush1.msra.mxu0 %v2702
        %3151 = vmatprep.subr.mxu0 %v2705
        %3152 = vmatpush1.msra.mxu0 %v2704
        %3153 = vmatprep.subr.mxu0 %v2707
        %3154 = vmatpush1.msra.mxu0 %v2706
        %3155 = vmatprep.subr.mxu0 %v2709
        %3156 = vmatpush1.msra.mxu0 %v2708
        %3157 = vmatprep.subr.mxu0 %v2711
        %3158 = vmatpush1.msra.mxu0 %v2710
        %3159 = vmatprep.subr.mxu0 %v2713
        %3160 = vmatpush1.msra.mxu0 %v2712
        %3161 = vmatprep.subr.mxu0 %v2715
        %3162 = vmatpush1.msra.mxu0 %v2714
        %3163 = vmatprep.subr.mxu0 %v2717
        %3164 = vmatpush1.msra.mxu0 %v2716
        %3165 = vmatprep.subr.mxu0 %v2719
        %3166 = vmatpush1.msra.mxu0 %v2718
        %3167 = vmatprep.subr.mxu0 %v2721
        %3168 = vmatpush1.msra.mxu0 %v2720
        %3169 = vmatprep.subr.mxu0 %v2723
        %3170 = vmatpush1.msra.mxu0 %v2722
        %3171 = vmatprep.subr.mxu0 %v2725
        %3172 = vmatpush1.msra.mxu0 %v2724
        %3173 = vmatprep.mubr.f32.mxu0 %v1519
        %3174 = vmatmul.mubr.f32.gmra.mrb[0].mxu0 %v1518
        %v3175 = vpop.f32.mrb[0].mxu0
        %v3176 = vadd.f32 %v3081, %v3175
        %v3177 = vpop.f32.mrb[0].mxu0
        %v3178 = vadd.f32 %v3083, %v3177
        %3179 = vmatprep.mubr.f32.mxu0 %v1523
        %3180 = vmatmul.mubr.f32.gmra.mrb[0].mxu0 %v1522
        %v3181 = vpop.f32.mrb[0].mxu0
        %v3182 = vadd.f32 %v3087, %v3181
        %v3183 = vpop.f32.mrb[0].mxu0
        %v3184 = vadd.f32 %v3089, %v3183
        %3185 = vmatprep.mubr.f32.mxu0 %v1527
        %3186 = vmatmul.mubr.f32.gmra.mrb[0].mxu0 %v1526
        %v3187 = vpop.f32.mrb[0].mxu0
        %v3188 = vadd.f32 %v3093, %v3187
        %v3189 = vpop.f32.mrb[0].mxu0
        %v3190 = vadd.f32 %v3095, %v3189
        %3191 = vmatprep.mubr.f32.mxu0 %v1531
        %3192 = vmatmul.mubr.f32.gmra.mrb[0].mxu0 %v1530
        %v3193 = vpop.f32.mrb[0].mxu0
        %v3194 = vadd.f32 %v3099, %v3193
        %v3195 = vpop.f32.mrb[0].mxu0
        %v3196 = vadd.f32 %v3101, %v3195
        %3197 = vmatprep.mubr.f32.mxu0 %v1535
        %3198 = vmatmul.mubr.f32.gmra.mrb[0].mxu0 %v1534
        %v3199 = vpop.f32.mrb[0].mxu0
        %v3200 = vadd.f32 %v3105, %v3199
        %v3201 = vpop.f32.mrb[0].mxu0
        %v3202 = vadd.f32 %v3107, %v3201
        %3203 = vdwg.mxu0
        %3204 = vmatprep.subr.mxu0 %v2727
        %3205 = vmatpush1.msra.mxu0 %v2726
        %3206 = vmatprep.subr.mxu0 %v2729
        %3207 = vmatpush1.msra.mxu0 %v2728
        %3208 = vmatprep.subr.mxu0 %v2731
        %3209 = vmatpush1.msra.mxu0 %v2730
        %3210 = vmatprep.subr.mxu0 %v2733
        %3211 = vmatpush1.msra.mxu0 %v2732
        %3212 = vmatprep.subr.mxu0 %v2735
        %3213 = vmatpush1.msra.mxu0 %v2734
        %3214 = vmatprep.subr.mxu0 %v2737
        %3215 = vmatpush1.msra.mxu0 %v2736
        %3216 = vmatprep.subr.mxu0 %v2739
        %3217 = vmatpush1.msra.mxu0 %v2738
        %3218 = vmatprep.subr.mxu0 %v2741
        %3219 = vmatpush1.msra.mxu0 %v2740
        %3220 = vmatprep.subr.mxu0 %v2743
        %3221 = vmatpush1.msra.mxu0 %v2742
        %3222 = vmatprep.subr.mxu0 %v2745
        %3223 = vmatpush1.msra.mxu0 %v2744
        %3224 = vmatprep.subr.mxu0 %v2747
        %3225 = vmatpush1.msra.mxu0 %v2746
        %3226 = vmatprep.subr.mxu0 %v2749
        %3227 = vmatpush1.msra.mxu0 %v2748
        %3228 = vmatprep.subr.mxu0 %v2751
        %3229 = vmatpush1.msra.mxu0 %v2750
        %3230 = vmatprep.subr.mxu0 %v2753
        %3231 = vmatpush1.msra.mxu0 %v2752
        %3232 = vmatprep.subr.mxu0 %v2755
        %3233 = vmatpush1.msra.mxu0 %v2754
        %3234 = vmatprep.subr.mxu0 %v2757
        %3235 = vmatpush1.msra.mxu0 %v2756
        %3236 = vmatprep.subr.mxu0 %v2759
        %3237 = vmatpush1.msra.mxu0 %v2758
        %3238 = vmatprep.subr.mxu0 %v2761
        %3239 = vmatpush1.msra.mxu0 %v2760
        %3240 = vmatprep.subr.mxu0 %v2763
        %3241 = vmatpush1.msra.mxu0 %v2762
        %3242 = vmatprep.subr.mxu0 %v2765
        %3243 = vmatpush1.msra.mxu0 %v2764
        %3244 = vmatprep.subr.mxu0 %v2767
        %3245 = vmatpush1.msra.mxu0 %v2766
        %3246 = vmatprep.subr.mxu0 %v2769
        %3247 = vmatpush1.msra.mxu0 %v2768
        %3248 = vmatprep.subr.mxu0 %v2771
        %3249 = vmatpush1.msra.mxu0 %v2770
        %3250 = vmatprep.subr.mxu0 %v2773
        %3251 = vmatpush1.msra.mxu0 %v2772
        %3252 = vmatprep.subr.mxu0 %v2775
        %3253 = vmatpush1.msra.mxu0 %v2774
        %3254 = vmatprep.subr.mxu0 %v2777
        %3255 = vmatpush1.msra.mxu0 %v2776
        %3256 = vmatprep.subr.mxu0 %v2779
        %3257 = vmatpush1.msra.mxu0 %v2778
        %3258 = vmatprep.subr.mxu0 %v2781
        %3259 = vmatpush1.msra.mxu0 %v2780
        %3260 = vmatprep.subr.mxu0 %v2783
        %3261 = vmatpush1.msra.mxu0 %v2782
        %3262 = vmatprep.subr.mxu0 %v2785
        %3263 = vmatpush1.msra.mxu0 %v2784
        %3264 = vmatprep.subr.mxu0 %v2787
        %3265 = vmatpush1.msra.mxu0 %v2786
        %3266 = vmatprep.subr.mxu0 %v2789
        %3267 = vmatpush1.msra.mxu0 %v2788
        %3268 = vmatprep.mubr.f32.mxu0 %v1521
        %3269 = vmatmul.mubr.f32.gmra.mrb[0].mxu0 %v1520
        %v3270 = vpop.f32.mrb[0].mxu0
        %v3271 = vadd.f32 %v3176, %v3270
        %v3272 = vpop.f32.mrb[0].mxu0
        %v3273 = vadd.f32 %v3178, %v3272
        %3274 = vmatprep.mubr.f32.mxu0 %v1525
        %3275 = vmatmul.mubr.f32.gmra.mrb[0].mxu0 %v1524
        %v3276 = vpop.f32.mrb[0].mxu0
        %v3277 = vadd.f32 %v3182, %v3276
        %v3278 = vpop.f32.mrb[0].mxu0
        %v3279 = vadd.f32 %v3184, %v3278
        %3280 = vmatprep.mubr.f32.mxu0 %v1529
        %3281 = vmatmul.mubr.f32.gmra.mrb[0].mxu0 %v1528
        %v3282 = vpop.f32.mrb[0].mxu0
        %v3283 = vadd.f32 %v3188, %v3282
        %v3284 = vpop.f32.mrb[0].mxu0
        %v3285 = vadd.f32 %v3190, %v3284
        %3286 = vmatprep.mubr.f32.mxu0 %v1533
        %3287 = vmatmul.mubr.f32.gmra.mrb[0].mxu0 %v1532
        %v3288 = vpop.f32.mrb[0].mxu0
        %v3289 = vadd.f32 %v3194, %v3288
        %v3290 = vpop.f32.mrb[0].mxu0
        %v3291 = vadd.f32 %v3196, %v3290
        %3292 = vmatprep.mubr.f32.mxu0 %v1537
        %3293 = vmatmul.mubr.f32.gmra.mrb[0].mxu0 %v1536
        %v3294 = vpop.f32.mrb[0].mxu0
        %v3295 = vadd.f32 %v3200, %v3294
        %v3296 = vpop.f32.mrb[0].mxu0
        %v3297 = vadd.f32 %v3202, %v3296
        %3298 = vdwg.mxu0
        %s3299 = scalar_lea.vmem [#allocation13], 2048
        %v3300 = vld [vmem:[%s3299] sm:$0xff]
        %v3301 = vld [vmem:[%s3299 + $0x8] sm:$0xff]
        %v3302 = vld [vmem:[%s3299 + $0x10] sm:$0xff]
        %v3303 = vld [vmem:[%s3299 + $0x18] sm:$0xff]
        %v3304 = vld [vmem:[%s3299 + $0x20] sm:$0xff]
        %v3305 = vld [vmem:[%s3299 + $0x28] sm:$0xff]
        %v3306 = vld [vmem:[%s3299 + $0x30] sm:$0xff]
        %v3307 = vld [vmem:[%s3299 + $0x38] sm:$0xff]
        %v3308 = vld [vmem:[%s3299 + $0x40] sm:$0xff]
        %v3309 = vld [vmem:[%s3299 + $0x48] sm:$0xff]
        %v3310 = vld [vmem:[%s3299 + $0x50] sm:$0xff]
        %v3311 = vld [vmem:[%s3299 + $0x58] sm:$0xff]
        %v3312 = vld [vmem:[%s3299 + $0x60] sm:$0xff]
        %v3313 = vld [vmem:[%s3299 + $0x68] sm:$0xff]
        %v3314 = vld [vmem:[%s3299 + $0x70] sm:$0xff]
        %v3315 = vld [vmem:[%s3299 + $0x78] sm:$0xff]
        %v3316 = vld [vmem:[%s3299 + $0x80] sm:$0xff]
        %v3317 = vld [vmem:[%s3299 + $0x88] sm:$0xff]
        %v3318 = vld [vmem:[%s3299 + $0x90] sm:$0xff]
        %v3319 = vld [vmem:[%s3299 + $0x98] sm:$0xff]
        %v3320 = vld [vmem:[%s3299 + $0xa0] sm:$0xff]
        %v3321 = vld [vmem:[%s3299 + $0xa8] sm:$0xff]
        %v3322 = vld [vmem:[%s3299 + $0xb0] sm:$0xff]
        %v3323 = vld [vmem:[%s3299 + $0xb8] sm:$0xff]
        %v3324 = vld [vmem:[%s3299 + $0xc0] sm:$0xff]
        %v3325 = vld [vmem:[%s3299 + $0xc8] sm:$0xff]
        %v3326 = vld [vmem:[%s3299 + $0xd0] sm:$0xff]
        %v3327 = vld [vmem:[%s3299 + $0xd8] sm:$0xff]
        %v3328 = vld [vmem:[%s3299 + $0xe0] sm:$0xff]
        %v3329 = vld [vmem:[%s3299 + $0xe8] sm:$0xff]
        %v3330 = vld [vmem:[%s3299 + $0xf0] sm:$0xff]
        %v3331 = vld [vmem:[%s3299 + $0xf8] sm:$0xff]
        %v3332 = vld [vmem:[%s3299 + $0x100] sm:$0xff]
        %v3333 = vld [vmem:[%s3299 + $0x108] sm:$0xff]
        %v3334 = vld [vmem:[%s3299 + $0x110] sm:$0xff]
        %v3335 = vld [vmem:[%s3299 + $0x118] sm:$0xff]
        %v3336 = vld [vmem:[%s3299 + $0x120] sm:$0xff]
        %v3337 = vld [vmem:[%s3299 + $0x128] sm:$0xff]
        %v3338 = vld [vmem:[%s3299 + $0x130] sm:$0xff]
        %v3339 = vld [vmem:[%s3299 + $0x138] sm:$0xff]
        %v3340 = vld [vmem:[%s3299 + $0x140] sm:$0xff]
        %v3341 = vld [vmem:[%s3299 + $0x148] sm:$0xff]
        %v3342 = vld [vmem:[%s3299 + $0x150] sm:$0xff]
        %v3343 = vld [vmem:[%s3299 + $0x158] sm:$0xff]
        %v3344 = vld [vmem:[%s3299 + $0x160] sm:$0xff]
        %v3345 = vld [vmem:[%s3299 + $0x168] sm:$0xff]
        %v3346 = vld [vmem:[%s3299 + $0x170] sm:$0xff]
        %v3347 = vld [vmem:[%s3299 + $0x178] sm:$0xff]
        %v3348 = vld [vmem:[%s3299 + $0x180] sm:$0xff]
        %v3349 = vld [vmem:[%s3299 + $0x188] sm:$0xff]
        %v3350 = vld [vmem:[%s3299 + $0x190] sm:$0xff]
        %v3351 = vld [vmem:[%s3299 + $0x198] sm:$0xff]
        %v3352 = vld [vmem:[%s3299 + $0x1a0] sm:$0xff]
        %v3353 = vld [vmem:[%s3299 + $0x1a8] sm:$0xff]
        %v3354 = vld [vmem:[%s3299 + $0x1b0] sm:$0xff]
        %v3355 = vld [vmem:[%s3299 + $0x1b8] sm:$0xff]
        %v3356 = vld [vmem:[%s3299 + $0x1c0] sm:$0xff]
        %v3357 = vld [vmem:[%s3299 + $0x1c8] sm:$0xff]
        %v3358 = vld [vmem:[%s3299 + $0x1d0] sm:$0xff]
        %v3359 = vld [vmem:[%s3299 + $0x1d8] sm:$0xff]
        %v3360 = vld [vmem:[%s3299 + $0x1e0] sm:$0xff]
        %v3361 = vld [vmem:[%s3299 + $0x1e8] sm:$0xff]
        %v3362 = vld [vmem:[%s3299 + $0x1f0] sm:$0xff]
        %v3363 = vld [vmem:[%s3299 + $0x1f8] sm:$0xff]
        %v3364 = vld [vmem:[%s3299 + $0x200] sm:$0xff]
        %v3365 = vld [vmem:[%s3299 + $0x208] sm:$0xff]
        %v3366 = vld [vmem:[%s3299 + $0x210] sm:$0xff]
        %v3367 = vld [vmem:[%s3299 + $0x218] sm:$0xff]
        %v3368 = vld [vmem:[%s3299 + $0x220] sm:$0xff]
        %v3369 = vld [vmem:[%s3299 + $0x228] sm:$0xff]
        %v3370 = vld [vmem:[%s3299 + $0x230] sm:$0xff]
        %v3371 = vld [vmem:[%s3299 + $0x238] sm:$0xff]
        %v3372 = vld [vmem:[%s3299 + $0x240] sm:$0xff]
        %v3373 = vld [vmem:[%s3299 + $0x248] sm:$0xff]
        %v3374 = vld [vmem:[%s3299 + $0x250] sm:$0xff]
        %v3375 = vld [vmem:[%s3299 + $0x258] sm:$0xff]
        %v3376 = vld [vmem:[%s3299 + $0x260] sm:$0xff]
        %v3377 = vld [vmem:[%s3299 + $0x268] sm:$0xff]
        %v3378 = vld [vmem:[%s3299 + $0x270] sm:$0xff]
        %v3379 = vld [vmem:[%s3299 + $0x278] sm:$0xff]
        %v3380 = vld [vmem:[%s3299 + $0x280] sm:$0xff]
        %v3381 = vld [vmem:[%s3299 + $0x288] sm:$0xff]
        %v3382 = vld [vmem:[%s3299 + $0x290] sm:$0xff]
        %v3383 = vld [vmem:[%s3299 + $0x298] sm:$0xff]
        %v3384 = vld [vmem:[%s3299 + $0x2a0] sm:$0xff]
        %v3385 = vld [vmem:[%s3299 + $0x2a8] sm:$0xff]
        %v3386 = vld [vmem:[%s3299 + $0x2b0] sm:$0xff]
        %v3387 = vld [vmem:[%s3299 + $0x2b8] sm:$0xff]
        %v3388 = vld [vmem:[%s3299 + $0x2c0] sm:$0xff]
        %v3389 = vld [vmem:[%s3299 + $0x2c8] sm:$0xff]
        %v3390 = vld [vmem:[%s3299 + $0x2d0] sm:$0xff]
        %v3391 = vld [vmem:[%s3299 + $0x2d8] sm:$0xff]
        %v3392 = vld [vmem:[%s3299 + $0x2e0] sm:$0xff]
        %v3393 = vld [vmem:[%s3299 + $0x2e8] sm:$0xff]
        %v3394 = vld [vmem:[%s3299 + $0x2f0] sm:$0xff]
        %v3395 = vld [vmem:[%s3299 + $0x2f8] sm:$0xff]
        %v3396 = vld [vmem:[%s3299 + $0x300] sm:$0xff]
        %v3397 = vld [vmem:[%s3299 + $0x308] sm:$0xff]
        %v3398 = vld [vmem:[%s3299 + $0x310] sm:$0xff]
        %v3399 = vld [vmem:[%s3299 + $0x318] sm:$0xff]
        %v3400 = vld [vmem:[%s3299 + $0x320] sm:$0xff]
        %v3401 = vld [vmem:[%s3299 + $0x328] sm:$0xff]
        %v3402 = vld [vmem:[%s3299 + $0x330] sm:$0xff]
        %v3403 = vld [vmem:[%s3299 + $0x338] sm:$0xff]
        %v3404 = vld [vmem:[%s3299 + $0x340] sm:$0xff]
        %v3405 = vld [vmem:[%s3299 + $0x348] sm:$0xff]
        %v3406 = vld [vmem:[%s3299 + $0x350] sm:$0xff]
        %v3407 = vld [vmem:[%s3299 + $0x358] sm:$0xff]
        %v3408 = vld [vmem:[%s3299 + $0x360] sm:$0xff]
        %v3409 = vld [vmem:[%s3299 + $0x368] sm:$0xff]
        %v3410 = vld [vmem:[%s3299 + $0x370] sm:$0xff]
        %v3411 = vld [vmem:[%s3299 + $0x378] sm:$0xff]
        %v3412 = vld [vmem:[%s3299 + $0x380] sm:$0xff]
        %v3413 = vld [vmem:[%s3299 + $0x388] sm:$0xff]
        %v3414 = vld [vmem:[%s3299 + $0x390] sm:$0xff]
        %v3415 = vld [vmem:[%s3299 + $0x398] sm:$0xff]
        %v3416 = vld [vmem:[%s3299 + $0x3a0] sm:$0xff]
        %v3417 = vld [vmem:[%s3299 + $0x3a8] sm:$0xff]
        %v3418 = vld [vmem:[%s3299 + $0x3b0] sm:$0xff]
        %v3419 = vld [vmem:[%s3299 + $0x3b8] sm:$0xff]
        %v3420 = vld [vmem:[%s3299 + $0x3c0] sm:$0xff]
        %v3421 = vld [vmem:[%s3299 + $0x3c8] sm:$0xff]
        %v3422 = vld [vmem:[%s3299 + $0x3d0] sm:$0xff]
        %v3423 = vld [vmem:[%s3299 + $0x3d8] sm:$0xff]
        %v3424 = vld [vmem:[%s3299 + $0x3e0] sm:$0xff]
        %v3425 = vld [vmem:[%s3299 + $0x3e8] sm:$0xff]
        %v3426 = vld [vmem:[%s3299 + $0x3f0] sm:$0xff]
        %v3427 = vld [vmem:[%s3299 + $0x3f8] sm:$0xff]
        %3428 = vmatprep.subr.mxu0 %v3301
        %3429 = vmatpush1.msra.mxu0 %v3300
        %3430 = vmatprep.subr.mxu0 %v3303
        %3431 = vmatpush1.msra.mxu0 %v3302
        %3432 = vmatprep.subr.mxu0 %v3305
        %3433 = vmatpush1.msra.mxu0 %v3304
        %3434 = vmatprep.subr.mxu0 %v3307
        %3435 = vmatpush1.msra.mxu0 %v3306
        %3436 = vmatprep.subr.mxu0 %v3309
        %3437 = vmatpush1.msra.mxu0 %v3308
        %3438 = vmatprep.subr.mxu0 %v3311
        %3439 = vmatpush1.msra.mxu0 %v3310
        %3440 = vmatprep.subr.mxu0 %v3313
        %3441 = vmatpush1.msra.mxu0 %v3312
        %3442 = vmatprep.subr.mxu0 %v3315
        %3443 = vmatpush1.msra.mxu0 %v3314
        %3444 = vmatprep.subr.mxu0 %v3317
        %3445 = vmatpush1.msra.mxu0 %v3316
        %3446 = vmatprep.subr.mxu0 %v3319
        %3447 = vmatpush1.msra.mxu0 %v3318
        %3448 = vmatprep.subr.mxu0 %v3321
        %3449 = vmatpush1.msra.mxu0 %v3320
        %3450 = vmatprep.subr.mxu0 %v3323
        %3451 = vmatpush1.msra.mxu0 %v3322
        %3452 = vmatprep.subr.mxu0 %v3325
        %3453 = vmatpush1.msra.mxu0 %v3324
        %3454 = vmatprep.subr.mxu0 %v3327
        %3455 = vmatpush1.msra.mxu0 %v3326
        %3456 = vmatprep.subr.mxu0 %v3329
        %3457 = vmatpush1.msra.mxu0 %v3328
        %3458 = vmatprep.subr.mxu0 %v3331
        %3459 = vmatpush1.msra.mxu0 %v3330
        %3460 = vmatprep.subr.mxu0 %v3333
        %3461 = vmatpush1.msra.mxu0 %v3332
        %3462 = vmatprep.subr.mxu0 %v3335
        %3463 = vmatpush1.msra.mxu0 %v3334
        %3464 = vmatprep.subr.mxu0 %v3337
        %3465 = vmatpush1.msra.mxu0 %v3336
        %3466 = vmatprep.subr.mxu0 %v3339
        %3467 = vmatpush1.msra.mxu0 %v3338
        %3468 = vmatprep.subr.mxu0 %v3341
        %3469 = vmatpush1.msra.mxu0 %v3340
        %3470 = vmatprep.subr.mxu0 %v3343
        %3471 = vmatpush1.msra.mxu0 %v3342
        %3472 = vmatprep.subr.mxu0 %v3345
        %3473 = vmatpush1.msra.mxu0 %v3344
        %3474 = vmatprep.subr.mxu0 %v3347
        %3475 = vmatpush1.msra.mxu0 %v3346
        %3476 = vmatprep.subr.mxu0 %v3349
        %3477 = vmatpush1.msra.mxu0 %v3348
        %3478 = vmatprep.subr.mxu0 %v3351
        %3479 = vmatpush1.msra.mxu0 %v3350
        %3480 = vmatprep.subr.mxu0 %v3353
        %3481 = vmatpush1.msra.mxu0 %v3352
        %3482 = vmatprep.subr.mxu0 %v3355
        %3483 = vmatpush1.msra.mxu0 %v3354
        %3484 = vmatprep.subr.mxu0 %v3357
        %3485 = vmatpush1.msra.mxu0 %v3356
        %3486 = vmatprep.subr.mxu0 %v3359
        %3487 = vmatpush1.msra.mxu0 %v3358
        %3488 = vmatprep.subr.mxu0 %v3361
        %3489 = vmatpush1.msra.mxu0 %v3360
        %3490 = vmatprep.subr.mxu0 %v3363
        %3491 = vmatpush1.msra.mxu0 %v3362
        %3492 = vmatprep.mubr.f32.mxu0 %v2411
        %3493 = vmatmul.mubr.f32.gmra.mrb[0].mxu0 %v2408
        %v3494 = vpop.f32.mrb[0].mxu0
        %v3495 = vadd.f32 0.0, %v3494
        %v3496 = vpop.f32.mrb[0].mxu0
        %v3497 = vadd.f32 0.0, %v3496
        %3498 = vmatprep.mubr.f32.mxu0 %v2421
        %3499 = vmatmul.mubr.f32.gmra.mrb[0].mxu0 %v2419
        %v3500 = vpop.f32.mrb[0].mxu0
        %v3501 = vadd.f32 0.0, %v3500
        %v3502 = vpop.f32.mrb[0].mxu0
        %v3503 = vadd.f32 0.0, %v3502
        %3504 = vmatprep.mubr.f32.mxu0 %v2429
        %3505 = vmatmul.mubr.f32.gmra.mrb[0].mxu0 %v2427
        %v3506 = vpop.f32.mrb[0].mxu0
        %v3507 = vadd.f32 0.0, %v3506
        %v3508 = vpop.f32.mrb[0].mxu0
        %v3509 = vadd.f32 0.0, %v3508
        %3510 = vmatprep.mubr.f32.mxu0 %v2437
        %3511 = vmatmul.mubr.f32.gmra.mrb[0].mxu0 %v2435
        %v3512 = vpop.f32.mrb[0].mxu0
        %v3513 = vadd.f32 0.0, %v3512
        %v3514 = vpop.f32.mrb[0].mxu0
        %v3515 = vadd.f32 0.0, %v3514
        %3516 = vmatprep.mubr.f32.mxu0 %v2436
        %3517 = vmatmul.mubr.f32.gmra.mrb[0].mxu0 %v2434
        %v3518 = vpop.f32.mrb[0].mxu0
        %v3519 = vadd.f32 0.0, %v3518
        %v3520 = vpop.f32.mrb[0].mxu0
        %v3521 = vadd.f32 0.0, %v3520
        %3522 = vdwg.mxu0
        %3523 = vmatprep.subr.mxu0 %v3365
        %3524 = vmatpush1.msra.mxu0 %v3364
        %3525 = vmatprep.subr.mxu0 %v3367
        %3526 = vmatpush1.msra.mxu0 %v3366
        %3527 = vmatprep.subr.mxu0 %v3369
        %3528 = vmatpush1.msra.mxu0 %v3368
        %3529 = vmatprep.subr.mxu0 %v3371
        %3530 = vmatpush1.msra.mxu0 %v3370
        %3531 = vmatprep.subr.mxu0 %v3373
        %3532 = vmatpush1.msra.mxu0 %v3372
        %3533 = vmatprep.subr.mxu0 %v3375
        %3534 = vmatpush1.msra.mxu0 %v3374
        %3535 = vmatprep.subr.mxu0 %v3377
        %3536 = vmatpush1.msra.mxu0 %v3376
        %3537 = vmatprep.subr.mxu0 %v3379
        %3538 = vmatpush1.msra.mxu0 %v3378
        %3539 = vmatprep.subr.mxu0 %v3381
        %3540 = vmatpush1.msra.mxu0 %v3380
        %3541 = vmatprep.subr.mxu0 %v3383
        %3542 = vmatpush1.msra.mxu0 %v3382
        %3543 = vmatprep.subr.mxu0 %v3385
        %3544 = vmatpush1.msra.mxu0 %v3384
        %3545 = vmatprep.subr.mxu0 %v3387
        %3546 = vmatpush1.msra.mxu0 %v3386
        %3547 = vmatprep.subr.mxu0 %v3389
        %3548 = vmatpush1.msra.mxu0 %v3388
        %3549 = vmatprep.subr.mxu0 %v3391
        %3550 = vmatpush1.msra.mxu0 %v3390
        %3551 = vmatprep.subr.mxu0 %v3393
        %3552 = vmatpush1.msra.mxu0 %v3392
        %3553 = vmatprep.subr.mxu0 %v3395
        %3554 = vmatpush1.msra.mxu0 %v3394
        %3555 = vmatprep.subr.mxu0 %v3397
        %3556 = vmatpush1.msra.mxu0 %v3396
        %3557 = vmatprep.subr.mxu0 %v3399
        %3558 = vmatpush1.msra.mxu0 %v3398
        %3559 = vmatprep.subr.mxu0 %v3401
        %3560 = vmatpush1.msra.mxu0 %v3400
        %3561 = vmatprep.subr.mxu0 %v3403
        %3562 = vmatpush1.msra.mxu0 %v3402
        %3563 = vmatprep.subr.mxu0 %v3405
        %3564 = vmatpush1.msra.mxu0 %v3404
        %3565 = vmatprep.subr.mxu0 %v3407
        %3566 = vmatpush1.msra.mxu0 %v3406
        %3567 = vmatprep.subr.mxu0 %v3409
        %3568 = vmatpush1.msra.mxu0 %v3408
        %3569 = vmatprep.subr.mxu0 %v3411
        %3570 = vmatpush1.msra.mxu0 %v3410
        %3571 = vmatprep.subr.mxu0 %v3413
        %3572 = vmatpush1.msra.mxu0 %v3412
        %3573 = vmatprep.subr.mxu0 %v3415
        %3574 = vmatpush1.msra.mxu0 %v3414
        %3575 = vmatprep.subr.mxu0 %v3417
        %3576 = vmatpush1.msra.mxu0 %v3416
        %3577 = vmatprep.subr.mxu0 %v3419
        %3578 = vmatpush1.msra.mxu0 %v3418
        %3579 = vmatprep.subr.mxu0 %v3421
        %3580 = vmatpush1.msra.mxu0 %v3420
        %3581 = vmatprep.subr.mxu0 %v3423
        %3582 = vmatpush1.msra.mxu0 %v3422
        %3583 = vmatprep.subr.mxu0 %v3425
        %3584 = vmatpush1.msra.mxu0 %v3424
        %3585 = vmatprep.subr.mxu0 %v3427
        %3586 = vmatpush1.msra.mxu0 %v3426
        %3587 = vmatprep.mubr.f32.mxu0 %v2417
        %3588 = vmatmul.mubr.f32.gmra.mrb[0].mxu0 %v2414
        %v3589 = vpop.f32.mrb[0].mxu0
        %v3590 = vadd.f32 %v3495, %v3589
        %v3591 = vpop.f32.mrb[0].mxu0
        %v3592 = vadd.f32 %v3497, %v3591
        %3593 = vmatprep.mubr.f32.mxu0 %v2425
        %3594 = vmatmul.mubr.f32.gmra.mrb[0].mxu0 %v2423
        %v3595 = vpop.f32.mrb[0].mxu0
        %v3596 = vadd.f32 %v3501, %v3595
        %v3597 = vpop.f32.mrb[0].mxu0
        %v3598 = vadd.f32 %v3503, %v3597
        %3599 = vmatprep.mubr.f32.mxu0 %v2433
        %3600 = vmatmul.mubr.f32.gmra.mrb[0].mxu0 %v2431
        %v3601 = vpop.f32.mrb[0].mxu0
        %v3602 = vadd.f32 %v3507, %v3601
        %v3603 = vpop.f32.mrb[0].mxu0
        %v3604 = vadd.f32 %v3509, %v3603
        %3605 = vmatprep.mubr.f32.mxu0 %v2441
        %3606 = vmatmul.mubr.f32.gmra.mrb[0].mxu0 %v2439
        %v3607 = vpop.f32.mrb[0].mxu0
        %v3608 = vadd.f32 %v3513, %v3607
        %v3609 = vpop.f32.mrb[0].mxu0
        %v3610 = vadd.f32 %v3515, %v3609
        %3611 = vmatprep.mubr.f32.mxu0 %v2440
        %3612 = vmatmul.mubr.f32.gmra.mrb[0].mxu0 %v2438
        %v3613 = vpop.f32.mrb[0].mxu0
        %v3614 = vadd.f32 %v3519, %v3613
        %v3615 = vpop.f32.mrb[0].mxu0
        %v3616 = vadd.f32 %v3521, %v3615
        %3617 = vdwg.mxu0
        %v3618 = vadd.f32 %v3271, %v3590
        %v3619 = vadd.f32 %v3273, %v3592
        %v3620 = vadd.f32 %v3277, %v3596
        %v3621 = vadd.f32 %v3279, %v3598
        %v3622 = vadd.f32 %v3283, %v3602
        %v3623 = vadd.f32 %v3285, %v3604
        %v3624 = vadd.f32 %v3289, %v3608
        %v3625 = vadd.f32 %v3291, %v3610
        %v3626 = vadd.f32 %v3295, %v3614
        %v3627 = vadd.f32 %v3297, %v3616
        %v3628 = vmax.f32 %v2652, %v3618
        %v3629 = vmax.f32 %v2653, %v3619
        %v3630 = vmax.f32 %v2654, %v3620
        %v3631 = vmax.f32 %v2655, %v3621
        %v3632 = vmax.f32 %v2656, %v3622
        %v3633 = vmax.f32 %v2657, %v3623
        %v3634 = vmax.f32 %v2658, %v3624
        %v3635 = vmax.f32 %v2659, %v3625
        %v3636 = vmax.f32 %v2660, %v3626
        %v3637 = vmax.f32 %v2661, %v3627
        %v3638 = vld [vmem:[#allocation14] sm:$0x3]
        %v3640 = vlaneseq
        %v3641 = vshrl.u32 %v3640, 7
        %v3642 = vsub.s32 0, %v3641
        %v3643 = vrot.slane %v3638, %v3642
        %v3644 = vlaneseq
        %v3645 = vshrl.u32 %v3644, 7
        %v3646 = vsub.s32 1, %v3645
        %v3647 = vrot.slane %v3638, %v3646
        %v3650 = vadd.f32 %v3628, %v3643
        %v3651 = vadd.f32 %v3629, %v3647
        %v3652 = vadd.f32 %v3630, %v3643
        %v3653 = vadd.f32 %v3631, %v3647
        %v3654 = vadd.f32 %v3632, %v3643
        %v3655 = vadd.f32 %v3633, %v3647
        %v3656 = vadd.f32 %v3634, %v3643
        %v3657 = vadd.f32 %v3635, %v3647
        %v3658 = vadd.f32 %v3636, %v3643
        %v3659 = vadd.f32 %v3637, %v3647
        %v3660 = vmax.f32 %v3650, 0.0
        %v3661 = vmax.f32 %v3651, 0.0
        %v3662 = vmax.f32 %v3652, 0.0
        %v3663 = vmax.f32 %v3653, 0.0
        %v3664 = vmax.f32 %v3654, 0.0
        %v3665 = vmax.f32 %v3655, 0.0
        %v3666 = vmax.f32 %v3656, 0.0
        %v3667 = vmax.f32 %v3657, 0.0
        %v3668 = vmax.f32 %v3658, 0.0
        %v3669 = vmax.f32 %v3659, 0.0
        %v3680 = vrot.slane %v3660, 7
        %v3681 = vrot.slane %v3661, 7
        %v3682 = vrot.slane %v3662, 7
        %v3683 = vsel %vm1426, %v3680, %v3682
        %v3684 = vrot.slane %v3663, 7
        %v3685 = vsel %vm1426, %v3681, %v3684
        %v3686 = vrot.slane %v3664, 7
        %v3687 = vsel %vm1426, %v3682, %v3686
        %v3688 = vrot.slane %v3665, 7
        %v3689 = vsel %vm1426, %v3684, %v3688
        %v3690 = vrot.slane %v3666, 7
        %v3691 = vsel %vm1426, %v3686, %v3690
        %v3692 = vrot.slane %v3667, 7
        %v3693 = vsel %vm1426, %v3688, %v3692
        %v3694 = vrot.slane %v3668, 7
        %v3695 = vsel %vm1426, %v3690, %v3694
        %v3696 = vrot.slane %v3669, 7
        %v3697 = vsel %vm1426, %v3692, %v3696
        %3708 = vst [vmem:[#allocation4] sm:$0xfe] %v3680
        %3709 = vst [vmem:[#allocation4 + $0x8] sm:$0xfe] %v3681
        %3710 = vst [vmem:[#allocation4 + $0x10] sm:$0xff] %v3683
        %3711 = vst [vmem:[#allocation4 + $0x18] sm:$0xff] %v3685
        %3712 = vst [vmem:[#allocation4 + $0x20] sm:$0xff] %v3687
        %3713 = vst [vmem:[#allocation4 + $0x28] sm:$0xff] %v3689
        %3714 = vst [vmem:[#allocation4 + $0x30] sm:$0xff] %v3691
        %3715 = vst [vmem:[#allocation4 + $0x38] sm:$0xff] %v3693
        %3716 = vst [vmem:[#allocation4 + $0x40] sm:$0x7] %v3695
        %3717 = vst [vmem:[#allocation4 + $0x48] sm:$0x7] %v3697
        %vm3718 = vcmp.lt.s32.totalorder %v1503, 256
        %vm3719 = vmand %vm1504, %vm3718
        %3720 = vst.msk [vmem:[#allocation4] ss:$8 sm:$0x3] %vm3719, 0.0
        %3721 = vst.msk [vmem:[#allocation4] ss:$8 sm:$0x0] %vm3719, 0.0
        %s3722 = scalar_lea.vmem [#allocation4], 33
        %3723 = vst.msk [vmem:[%s3722] ss:$8 sm:$0x3] %vm3719, 0.0
        %3724 = vst.msk [vmem:[%s3722] ss:$8 sm:$0x0] %vm3719, 0.0
        %s3725 = scalar_lea.vmem [#allocation4], 34
        %3726 = vst.msk [vmem:[%s3725] ss:$8 sm:$0x3] %vm3719, 0.0
        %3727 = vst.msk [vmem:[%s3725] ss:$8 sm:$0x0] %vm3719, 0.0
        %s3728 = scalar_lea.vmem [#allocation4], 67
        %3729 = vst.msk [vmem:[%s3728] ss:$8 sm:$0x3] %vm3719, 0.0
        %3730 = vst.msk [vmem:[%s3728] ss:$8 sm:$0x0] %vm3719, 0.0
        %v3731 = vld [vmem:[#allocation4] sm:$0xff]
        %v3732 = vld [vmem:[#allocation4 + $0x8] sm:$0xff]
        %v3733 = vld [vmem:[#allocation4 + $0x10] sm:$0xff]
        %v3734 = vld [vmem:[#allocation4 + $0x18] sm:$0xff]
        %v3735 = vld [vmem:[#allocation4 + $0x20] sm:$0xff]
        %v3736 = vld [vmem:[#allocation4 + $0x28] sm:$0xff]
        %v3737 = vld [vmem:[#allocation4 + $0x30] sm:$0xff]
        %v3738 = vld [vmem:[#allocation4 + $0x38] sm:$0xff]
        %v3739 = vld [vmem:[#allocation4 + $0x40] sm:$0x3]
        %v3740 = vld [vmem:[#allocation4 + $0x48] sm:$0x3]
        %v3741 = vld [vmem:[#allocation16] sm:$0xff]
        %v3742 = vld [vmem:[#allocation16 + $0x8] sm:$0xff]
        %v3743 = vld [vmem:[#allocation16 + $0x10] sm:$0xff]
        %v3744 = vld [vmem:[#allocation16 + $0x18] sm:$0xff]
        %v3745 = vld [vmem:[#allocation16 + $0x20] sm:$0xff]
        %v3746 = vld [vmem:[#allocation16 + $0x28] sm:$0xff]
        %v3747 = vld [vmem:[#allocation16 + $0x30] sm:$0xff]
        %v3748 = vld [vmem:[#allocation16 + $0x38] sm:$0xff]
        %v3749 = vld [vmem:[#allocation16 + $0x40] sm:$0xff]
        %v3750 = vld [vmem:[#allocation16 + $0x48] sm:$0xff]
        %v3751 = vld [vmem:[#allocation16 + $0x50] sm:$0xff]
        %v3752 = vld [vmem:[#allocation16 + $0x58] sm:$0xff]
        %v3753 = vld [vmem:[#allocation16 + $0x60] sm:$0xff]
        %v3754 = vld [vmem:[#allocation16 + $0x68] sm:$0xff]
        %v3755 = vld [vmem:[#allocation16 + $0x70] sm:$0xff]
        %v3756 = vld [vmem:[#allocation16 + $0x78] sm:$0xff]
        %v3757 = vld [vmem:[#allocation16 + $0x80] sm:$0xff]
        %v3758 = vld [vmem:[#allocation16 + $0x88] sm:$0xff]
        %v3759 = vld [vmem:[#allocation16 + $0x90] sm:$0xff]
        %v3760 = vld [vmem:[#allocation16 + $0x98] sm:$0xff]
        %v3761 = vld [vmem:[#allocation16 + $0xa0] sm:$0xff]
        %v3762 = vld [vmem:[#allocation16 + $0xa8] sm:$0xff]
        %v3763 = vld [vmem:[#allocation16 + $0xb0] sm:$0xff]
        %v3764 = vld [vmem:[#allocation16 + $0xb8] sm:$0xff]
        %v3765 = vld [vmem:[#allocation16 + $0xc0] sm:$0xff]
        %v3766 = vld [vmem:[#allocation16 + $0xc8] sm:$0xff]
        %v3767 = vld [vmem:[#allocation16 + $0xd0] sm:$0xff]
        %v3768 = vld [vmem:[#allocation16 + $0xd8] sm:$0xff]
        %v3769 = vld [vmem:[#allocation16 + $0xe0] sm:$0xff]
        %v3770 = vld [vmem:[#allocation16 + $0xe8] sm:$0xff]
        %v3771 = vld [vmem:[#allocation16 + $0xf0] sm:$0xff]
        %v3772 = vld [vmem:[#allocation16 + $0xf8] sm:$0xff]
        %v3773 = vld [vmem:[#allocation16 + $0x100] sm:$0xff]
        %v3774 = vld [vmem:[#allocation16 + $0x108] sm:$0xff]
        %v3775 = vld [vmem:[#allocation16 + $0x110] sm:$0xff]
        %v3776 = vld [vmem:[#allocation16 + $0x118] sm:$0xff]
        %v3777 = vld [vmem:[#allocation16 + $0x120] sm:$0xff]
        %v3778 = vld [vmem:[#allocation16 + $0x128] sm:$0xff]
        %v3779 = vld [vmem:[#allocation16 + $0x130] sm:$0xff]
        %v3780 = vld [vmem:[#allocation16 + $0x138] sm:$0xff]
        %v3781 = vld [vmem:[#allocation16 + $0x140] sm:$0xff]
        %v3782 = vld [vmem:[#allocation16 + $0x148] sm:$0xff]
        %v3783 = vld [vmem:[#allocation16 + $0x150] sm:$0xff]
        %v3784 = vld [vmem:[#allocation16 + $0x158] sm:$0xff]
        %v3785 = vld [vmem:[#allocation16 + $0x160] sm:$0xff]
        %v3786 = vld [vmem:[#allocation16 + $0x168] sm:$0xff]
        %v3787 = vld [vmem:[#allocation16 + $0x170] sm:$0xff]
        %v3788 = vld [vmem:[#allocation16 + $0x178] sm:$0xff]
        %v3789 = vld [vmem:[#allocation16 + $0x180] sm:$0xff]
        %v3790 = vld [vmem:[#allocation16 + $0x188] sm:$0xff]
        %v3791 = vld [vmem:[#allocation16 + $0x190] sm:$0xff]
        %v3792 = vld [vmem:[#allocation16 + $0x198] sm:$0xff]
        %v3793 = vld [vmem:[#allocation16 + $0x1a0] sm:$0xff]
        %v3794 = vld [vmem:[#allocation16 + $0x1a8] sm:$0xff]
        %v3795 = vld [vmem:[#allocation16 + $0x1b0] sm:$0xff]
        %v3796 = vld [vmem:[#allocation16 + $0x1b8] sm:$0xff]
        %v3797 = vld [vmem:[#allocation16 + $0x1c0] sm:$0xff]
        %v3798 = vld [vmem:[#allocation16 + $0x1c8] sm:$0xff]
        %v3799 = vld [vmem:[#allocation16 + $0x1d0] sm:$0xff]
        %v3800 = vld [vmem:[#allocation16 + $0x1d8] sm:$0xff]
        %v3801 = vld [vmem:[#allocation16 + $0x1e0] sm:$0xff]
        %v3802 = vld [vmem:[#allocation16 + $0x1e8] sm:$0xff]
        %v3803 = vld [vmem:[#allocation16 + $0x1f0] sm:$0xff]
        %v3804 = vld [vmem:[#allocation16 + $0x1f8] sm:$0xff]
        %v3805 = vld [vmem:[#allocation4] sm:$0xfe]
        %v3806 = vld [vmem:[#allocation4 + $0x8] sm:$0xfe]
        %v3807 = vld [vmem:[#allocation4 + $0x40] sm:$0x7]
        %v3808 = vld [vmem:[#allocation4 + $0x48] sm:$0x7]
        %s3809 = scalar_lea.vmem [#allocation16], 512
        %v3810 = vld [vmem:[%s3809] sm:$0xff]
        %v3811 = vld [vmem:[%s3809 + $0x8] sm:$0xff]
        %v3812 = vld [vmem:[%s3809 + $0x10] sm:$0xff]
        %v3813 = vld [vmem:[%s3809 + $0x18] sm:$0xff]
        %v3814 = vld [vmem:[%s3809 + $0x20] sm:$0xff]
        %v3815 = vld [vmem:[%s3809 + $0x28] sm:$0xff]
        %v3816 = vld [vmem:[%s3809 + $0x30] sm:$0xff]
        %v3817 = vld [vmem:[%s3809 + $0x38] sm:$0xff]
        %v3818 = vld [vmem:[%s3809 + $0x40] sm:$0xff]
        %v3819 = vld [vmem:[%s3809 + $0x48] sm:$0xff]
        %v3820 = vld [vmem:[%s3809 + $0x50] sm:$0xff]
        %v3821 = vld [vmem:[%s3809 + $0x58] sm:$0xff]
        %v3822 = vld [vmem:[%s3809 + $0x60] sm:$0xff]
        %v3823 = vld [vmem:[%s3809 + $0x68] sm:$0xff]
        %v3824 = vld [vmem:[%s3809 + $0x70] sm:$0xff]
        %v3825 = vld [vmem:[%s3809 + $0x78] sm:$0xff]
        %v3826 = vld [vmem:[%s3809 + $0x80] sm:$0xff]
        %v3827 = vld [vmem:[%s3809 + $0x88] sm:$0xff]
        %v3828 = vld [vmem:[%s3809 + $0x90] sm:$0xff]
        %v3829 = vld [vmem:[%s3809 + $0x98] sm:$0xff]
        %v3830 = vld [vmem:[%s3809 + $0xa0] sm:$0xff]
        %v3831 = vld [vmem:[%s3809 + $0xa8] sm:$0xff]
        %v3832 = vld [vmem:[%s3809 + $0xb0] sm:$0xff]
        %v3833 = vld [vmem:[%s3809 + $0xb8] sm:$0xff]
        %v3834 = vld [vmem:[%s3809 + $0xc0] sm:$0xff]
        %v3835 = vld [vmem:[%s3809 + $0xc8] sm:$0xff]
        %v3836 = vld [vmem:[%s3809 + $0xd0] sm:$0xff]
        %v3837 = vld [vmem:[%s3809 + $0xd8] sm:$0xff]
        %v3838 = vld [vmem:[%s3809 + $0xe0] sm:$0xff]
        %v3839 = vld [vmem:[%s3809 + $0xe8] sm:$0xff]
        %v3840 = vld [vmem:[%s3809 + $0xf0] sm:$0xff]
        %v3841 = vld [vmem:[%s3809 + $0xf8] sm:$0xff]
        %v3842 = vld [vmem:[%s3809 + $0x100] sm:$0xff]
        %v3843 = vld [vmem:[%s3809 + $0x108] sm:$0xff]
        %v3844 = vld [vmem:[%s3809 + $0x110] sm:$0xff]
        %v3845 = vld [vmem:[%s3809 + $0x118] sm:$0xff]
        %v3846 = vld [vmem:[%s3809 + $0x120] sm:$0xff]
        %v3847 = vld [vmem:[%s3809 + $0x128] sm:$0xff]
        %v3848 = vld [vmem:[%s3809 + $0x130] sm:$0xff]
        %v3849 = vld [vmem:[%s3809 + $0x138] sm:$0xff]
        %v3850 = vld [vmem:[%s3809 + $0x140] sm:$0xff]
        %v3851 = vld [vmem:[%s3809 + $0x148] sm:$0xff]
        %v3852 = vld [vmem:[%s3809 + $0x150] sm:$0xff]
        %v3853 = vld [vmem:[%s3809 + $0x158] sm:$0xff]
        %v3854 = vld [vmem:[%s3809 + $0x160] sm:$0xff]
        %v3855 = vld [vmem:[%s3809 + $0x168] sm:$0xff]
        %v3856 = vld [vmem:[%s3809 + $0x170] sm:$0xff]
        %v3857 = vld [vmem:[%s3809 + $0x178] sm:$0xff]
        %v3858 = vld [vmem:[%s3809 + $0x180] sm:$0xff]
        %v3859 = vld [vmem:[%s3809 + $0x188] sm:$0xff]
        %v3860 = vld [vmem:[%s3809 + $0x190] sm:$0xff]
        %v3861 = vld [vmem:[%s3809 + $0x198] sm:$0xff]
        %v3862 = vld [vmem:[%s3809 + $0x1a0] sm:$0xff]
        %v3863 = vld [vmem:[%s3809 + $0x1a8] sm:$0xff]
        %v3864 = vld [vmem:[%s3809 + $0x1b0] sm:$0xff]
        %v3865 = vld [vmem:[%s3809 + $0x1b8] sm:$0xff]
        %v3866 = vld [vmem:[%s3809 + $0x1c0] sm:$0xff]
        %v3867 = vld [vmem:[%s3809 + $0x1c8] sm:$0xff]
        %v3868 = vld [vmem:[%s3809 + $0x1d0] sm:$0xff]
        %v3869 = vld [vmem:[%s3809 + $0x1d8] sm:$0xff]
        %v3870 = vld [vmem:[%s3809 + $0x1e0] sm:$0xff]
        %v3871 = vld [vmem:[%s3809 + $0x1e8] sm:$0xff]
        %v3872 = vld [vmem:[%s3809 + $0x1f0] sm:$0xff]
        %v3873 = vld [vmem:[%s3809 + $0x1f8] sm:$0xff]
        %v3884 = vrot.slane %v3805, 1
        %v3885 = vrot.slane %v3733, 1
        %v3886 = vsel %vm1823, %v3884, %v3885
        %v3887 = vrot.slane %v3806, 1
        %v3888 = vrot.slane %v3734, 1
        %v3889 = vsel %vm1823, %v3887, %v3888
        %v3890 = vrot.slane %v3735, 1
        %v3891 = vsel %vm1823, %v3885, %v3890
        %v3892 = vrot.slane %v3736, 1
        %v3893 = vsel %vm1823, %v3888, %v3892
        %v3894 = vrot.slane %v3737, 1
        %v3895 = vsel %vm1823, %v3890, %v3894
        %v3896 = vrot.slane %v3738, 1
        %v3897 = vsel %vm1823, %v3892, %v3896
        %v3898 = vrot.slane %v3807, 1
        %v3899 = vsel %vm1823, %v3894, %v3898
        %v3900 = vrot.slane %v3808, 1
        %v3901 = vsel %vm1823, %v3896, %v3900
        %3912 = vmatprep.subr.mxu0 %v3811
        %3913 = vmatpush1.msra.mxu0 %v3810
        %3914 = vmatprep.subr.mxu0 %v3813
        %3915 = vmatpush1.msra.mxu0 %v3812
        %3916 = vmatprep.subr.mxu0 %v3815
        %3917 = vmatpush1.msra.mxu0 %v3814
        %3918 = vmatprep.subr.mxu0 %v3817
        %3919 = vmatpush1.msra.mxu0 %v3816
        %3920 = vmatprep.subr.mxu0 %v3819
        %3921 = vmatpush1.msra.mxu0 %v3818
        %3922 = vmatprep.subr.mxu0 %v3821
        %3923 = vmatpush1.msra.mxu0 %v3820
        %3924 = vmatprep.subr.mxu0 %v3823
        %3925 = vmatpush1.msra.mxu0 %v3822
        %3926 = vmatprep.subr.mxu0 %v3825
        %3927 = vmatpush1.msra.mxu0 %v3824
        %3928 = vmatprep.subr.mxu0 %v3827
        %3929 = vmatpush1.msra.mxu0 %v3826
        %3930 = vmatprep.subr.mxu0 %v3829
        %3931 = vmatpush1.msra.mxu0 %v3828
        %3932 = vmatprep.subr.mxu0 %v3831
        %3933 = vmatpush1.msra.mxu0 %v3830
        %3934 = vmatprep.subr.mxu0 %v3833
        %3935 = vmatpush1.msra.mxu0 %v3832
        %3936 = vmatprep.subr.mxu0 %v3835
        %3937 = vmatpush1.msra.mxu0 %v3834
        %3938 = vmatprep.subr.mxu0 %v3837
        %3939 = vmatpush1.msra.mxu0 %v3836
        %3940 = vmatprep.subr.mxu0 %v3839
        %3941 = vmatpush1.msra.mxu0 %v3838
        %3942 = vmatprep.subr.mxu0 %v3841
        %3943 = vmatpush1.msra.mxu0 %v3840
        %3944 = vmatprep.subr.mxu0 %v3843
        %3945 = vmatpush1.msra.mxu0 %v3842
        %3946 = vmatprep.subr.mxu0 %v3845
        %3947 = vmatpush1.msra.mxu0 %v3844
        %3948 = vmatprep.subr.mxu0 %v3847
        %3949 = vmatpush1.msra.mxu0 %v3846
        %3950 = vmatprep.subr.mxu0 %v3849
        %3951 = vmatpush1.msra.mxu0 %v3848
        %3952 = vmatprep.subr.mxu0 %v3851
        %3953 = vmatpush1.msra.mxu0 %v3850
        %3954 = vmatprep.subr.mxu0 %v3853
        %3955 = vmatpush1.msra.mxu0 %v3852
        %3956 = vmatprep.subr.mxu0 %v3855
        %3957 = vmatpush1.msra.mxu0 %v3854
        %3958 = vmatprep.subr.mxu0 %v3857
        %3959 = vmatpush1.msra.mxu0 %v3856
        %3960 = vmatprep.subr.mxu0 %v3859
        %3961 = vmatpush1.msra.mxu0 %v3858
        %3962 = vmatprep.subr.mxu0 %v3861
        %3963 = vmatpush1.msra.mxu0 %v3860
        %3964 = vmatprep.subr.mxu0 %v3863
        %3965 = vmatpush1.msra.mxu0 %v3862
        %3966 = vmatprep.subr.mxu0 %v3865
        %3967 = vmatpush1.msra.mxu0 %v3864
        %3968 = vmatprep.subr.mxu0 %v3867
        %3969 = vmatpush1.msra.mxu0 %v3866
        %3970 = vmatprep.subr.mxu0 %v3869
        %3971 = vmatpush1.msra.mxu0 %v3868
        %3972 = vmatprep.subr.mxu0 %v3871
        %3973 = vmatpush1.msra.mxu0 %v3870
        %3974 = vmatprep.subr.mxu0 %v3873
        %3975 = vmatpush1.msra.mxu0 %v3872
        %3976 = vmatprep.mubr.f32.mxu0 %v3889
        %3977 = vmatmul.mubr.f32.gmra.mrb[0].mxu0 %v3886
        %v3978 = vpop.f32.mrb[0].mxu0
        %v3979 = vadd.f32 0.0, %v3978
        %v3980 = vpop.f32.mrb[0].mxu0
        %v3981 = vadd.f32 0.0, %v3980
        %3982 = vmatprep.mubr.f32.mxu0 %v3893
        %3983 = vmatmul.mubr.f32.gmra.mrb[0].mxu0 %v3891
        %v3984 = vpop.f32.mrb[0].mxu0
        %v3985 = vadd.f32 0.0, %v3984
        %v3986 = vpop.f32.mrb[0].mxu0
        %v3987 = vadd.f32 0.0, %v3986
        %3988 = vmatprep.mubr.f32.mxu0 %v3897
        %3989 = vmatmul.mubr.f32.gmra.mrb[0].mxu0 %v3895
        %v3990 = vpop.f32.mrb[0].mxu0
        %v3991 = vadd.f32 0.0, %v3990
        %v3992 = vpop.f32.mrb[0].mxu0
        %v3993 = vadd.f32 0.0, %v3992
        %3994 = vmatprep.mubr.f32.mxu0 %v3901
        %3995 = vmatmul.mubr.f32.gmra.mrb[0].mxu0 %v3899
        %v3996 = vpop.f32.mrb[0].mxu0
        %v3997 = vadd.f32 0.0, %v3996
        %v3998 = vpop.f32.mrb[0].mxu0
        %v3999 = vadd.f32 0.0, %v3998
        %4000 = vmatprep.mubr.f32.mxu0 %v3900
        %4001 = vmatmul.mubr.f32.gmra.mrb[0].mxu0 %v3898
        %v4002 = vpop.f32.mrb[0].mxu0
        %v4003 = vadd.f32 0.0, %v4002
        %v4004 = vpop.f32.mrb[0].mxu0
        %v4005 = vadd.f32 0.0, %v4004
        %4006 = vdwg.mxu0
        %4007 = vmatprep.subr.mxu0 %v3742
        %4008 = vmatpush1.msra.mxu0 %v3741
        %4009 = vmatprep.subr.mxu0 %v3744
        %4010 = vmatpush1.msra.mxu0 %v3743
        %4011 = vmatprep.subr.mxu0 %v3746
        %4012 = vmatpush1.msra.mxu0 %v3745
        %4013 = vmatprep.subr.mxu0 %v3748
        %4014 = vmatpush1.msra.mxu0 %v3747
        %4015 = vmatprep.subr.mxu0 %v3750
        %4016 = vmatpush1.msra.mxu0 %v3749
        %4017 = vmatprep.subr.mxu0 %v3752
        %4018 = vmatpush1.msra.mxu0 %v3751
        %4019 = vmatprep.subr.mxu0 %v3754
        %4020 = vmatpush1.msra.mxu0 %v3753
        %4021 = vmatprep.subr.mxu0 %v3756
        %4022 = vmatpush1.msra.mxu0 %v3755
        %4023 = vmatprep.subr.mxu0 %v3758
        %4024 = vmatpush1.msra.mxu0 %v3757
        %4025 = vmatprep.subr.mxu0 %v3760
        %4026 = vmatpush1.msra.mxu0 %v3759
        %4027 = vmatprep.subr.mxu0 %v3762
        %4028 = vmatpush1.msra.mxu0 %v3761
        %4029 = vmatprep.subr.mxu0 %v3764
        %4030 = vmatpush1.msra.mxu0 %v3763
        %4031 = vmatprep.subr.mxu0 %v3766
        %4032 = vmatpush1.msra.mxu0 %v3765
        %4033 = vmatprep.subr.mxu0 %v3768
        %4034 = vmatpush1.msra.mxu0 %v3767
        %4035 = vmatprep.subr.mxu0 %v3770
        %4036 = vmatpush1.msra.mxu0 %v3769
        %4037 = vmatprep.subr.mxu0 %v3772
        %4038 = vmatpush1.msra.mxu0 %v3771
        %4039 = vmatprep.subr.mxu0 %v3774
        %4040 = vmatpush1.msra.mxu0 %v3773
        %4041 = vmatprep.subr.mxu0 %v3776
        %4042 = vmatpush1.msra.mxu0 %v3775
        %4043 = vmatprep.subr.mxu0 %v3778
        %4044 = vmatpush1.msra.mxu0 %v3777
        %4045 = vmatprep.subr.mxu0 %v3780
        %4046 = vmatpush1.msra.mxu0 %v3779
        %4047 = vmatprep.subr.mxu0 %v3782
        %4048 = vmatpush1.msra.mxu0 %v3781
        %4049 = vmatprep.subr.mxu0 %v3784
        %4050 = vmatpush1.msra.mxu0 %v3783
        %4051 = vmatprep.subr.mxu0 %v3786
        %4052 = vmatpush1.msra.mxu0 %v3785
        %4053 = vmatprep.subr.mxu0 %v3788
        %4054 = vmatpush1.msra.mxu0 %v3787
        %4055 = vmatprep.subr.mxu0 %v3790
        %4056 = vmatpush1.msra.mxu0 %v3789
        %4057 = vmatprep.subr.mxu0 %v3792
        %4058 = vmatpush1.msra.mxu0 %v3791
        %4059 = vmatprep.subr.mxu0 %v3794
        %4060 = vmatpush1.msra.mxu0 %v3793
        %4061 = vmatprep.subr.mxu0 %v3796
        %4062 = vmatpush1.msra.mxu0 %v3795
        %4063 = vmatprep.subr.mxu0 %v3798
        %4064 = vmatpush1.msra.mxu0 %v3797
        %4065 = vmatprep.subr.mxu0 %v3800
        %4066 = vmatpush1.msra.mxu0 %v3799
        %4067 = vmatprep.subr.mxu0 %v3802
        %4068 = vmatpush1.msra.mxu0 %v3801
        %4069 = vmatprep.subr.mxu0 %v3804
        %4070 = vmatpush1.msra.mxu0 %v3803
        %4071 = vmatprep.mubr.f32.mxu0 %v3732
        %4072 = vmatmul.mubr.f32.gmra.mrb[0].mxu0 %v3731
        %v4073 = vpop.f32.mrb[0].mxu0
        %v4074 = vadd.f32 %v3979, %v4073
        %v4075 = vpop.f32.mrb[0].mxu0
        %v4076 = vadd.f32 %v3981, %v4075
        %4077 = vmatprep.mubr.f32.mxu0 %v3734
        %4078 = vmatmul.mubr.f32.gmra.mrb[0].mxu0 %v3733
        %v4079 = vpop.f32.mrb[0].mxu0
        %v4080 = vadd.f32 %v3985, %v4079
        %v4081 = vpop.f32.mrb[0].mxu0
        %v4082 = vadd.f32 %v3987, %v4081
        %4083 = vmatprep.mubr.f32.mxu0 %v3736
        %4084 = vmatmul.mubr.f32.gmra.mrb[0].mxu0 %v3735
        %v4085 = vpop.f32.mrb[0].mxu0
        %v4086 = vadd.f32 %v3991, %v4085
        %v4087 = vpop.f32.mrb[0].mxu0
        %v4088 = vadd.f32 %v3993, %v4087
        %4089 = vmatprep.mubr.f32.mxu0 %v3738
        %4090 = vmatmul.mubr.f32.gmra.mrb[0].mxu0 %v3737
        %v4091 = vpop.f32.mrb[0].mxu0
        %v4092 = vadd.f32 %v3997, %v4091
        %v4093 = vpop.f32.mrb[0].mxu0
        %v4094 = vadd.f32 %v3999, %v4093
        %4095 = vmatprep.mubr.f32.mxu0 %v3740
        %4096 = vmatmul.mubr.f32.gmra.mrb[0].mxu0 %v3739
        %v4097 = vpop.f32.mrb[0].mxu0
        %v4098 = vadd.f32 %v4003, %v4097
        %v4099 = vpop.f32.mrb[0].mxu0
        %v4100 = vadd.f32 %v4005, %v4099
        %4101 = vdwg.mxu0
        %v4102 = vld [vmem:[#allocation4] sm:$0xfc]
        %v4103 = vld [vmem:[#allocation4 + $0x8] sm:$0xfc]
        %v4104 = vld [vmem:[#allocation4 + $0x40] sm:$0xf]
        %v4105 = vld [vmem:[#allocation4 + $0x48] sm:$0xf]
        %s4106 = scalar_lea.vmem [#allocation16], 1024
        %v4107 = vld [vmem:[%s4106] sm:$0xff]
        %v4108 = vld [vmem:[%s4106 + $0x8] sm:$0xff]
        %v4109 = vld [vmem:[%s4106 + $0x10] sm:$0xff]
        %v4110 = vld [vmem:[%s4106 + $0x18] sm:$0xff]
        %v4111 = vld [vmem:[%s4106 + $0x20] sm:$0xff]
        %v4112 = vld [vmem:[%s4106 + $0x28] sm:$0xff]
        %v4113 = vld [vmem:[%s4106 + $0x30] sm:$0xff]
        %v4114 = vld [vmem:[%s4106 + $0x38] sm:$0xff]
        %v4115 = vld [vmem:[%s4106 + $0x40] sm:$0xff]
        %v4116 = vld [vmem:[%s4106 + $0x48] sm:$0xff]
        %v4117 = vld [vmem:[%s4106 + $0x50] sm:$0xff]
        %v4118 = vld [vmem:[%s4106 + $0x58] sm:$0xff]
        %v4119 = vld [vmem:[%s4106 + $0x60] sm:$0xff]
        %v4120 = vld [vmem:[%s4106 + $0x68] sm:$0xff]
        %v4121 = vld [vmem:[%s4106 + $0x70] sm:$0xff]
        %v4122 = vld [vmem:[%s4106 + $0x78] sm:$0xff]
        %v4123 = vld [vmem:[%s4106 + $0x80] sm:$0xff]
        %v4124 = vld [vmem:[%s4106 + $0x88] sm:$0xff]
        %v4125 = vld [vmem:[%s4106 + $0x90] sm:$0xff]
        %v4126 = vld [vmem:[%s4106 + $0x98] sm:$0xff]
        %v4127 = vld [vmem:[%s4106 + $0xa0] sm:$0xff]
        %v4128 = vld [vmem:[%s4106 + $0xa8] sm:$0xff]
        %v4129 = vld [vmem:[%s4106 + $0xb0] sm:$0xff]
        %v4130 = vld [vmem:[%s4106 + $0xb8] sm:$0xff]
        %v4131 = vld [vmem:[%s4106 + $0xc0] sm:$0xff]
        %v4132 = vld [vmem:[%s4106 + $0xc8] sm:$0xff]
        %v4133 = vld [vmem:[%s4106 + $0xd0] sm:$0xff]
        %v4134 = vld [vmem:[%s4106 + $0xd8] sm:$0xff]
        %v4135 = vld [vmem:[%s4106 + $0xe0] sm:$0xff]
        %v4136 = vld [vmem:[%s4106 + $0xe8] sm:$0xff]
        %v4137 = vld [vmem:[%s4106 + $0xf0] sm:$0xff]
        %v4138 = vld [vmem:[%s4106 + $0xf8] sm:$0xff]
        %v4139 = vld [vmem:[%s4106 + $0x100] sm:$0xff]
        %v4140 = vld [vmem:[%s4106 + $0x108] sm:$0xff]
        %v4141 = vld [vmem:[%s4106 + $0x110] sm:$0xff]
        %v4142 = vld [vmem:[%s4106 + $0x118] sm:$0xff]
        %v4143 = vld [vmem:[%s4106 + $0x120] sm:$0xff]
        %v4144 = vld [vmem:[%s4106 + $0x128] sm:$0xff]
        %v4145 = vld [vmem:[%s4106 + $0x130] sm:$0xff]
        %v4146 = vld [vmem:[%s4106 + $0x138] sm:$0xff]
        %v4147 = vld [vmem:[%s4106 + $0x140] sm:$0xff]
        %v4148 = vld [vmem:[%s4106 + $0x148] sm:$0xff]
        %v4149 = vld [vmem:[%s4106 + $0x150] sm:$0xff]
        %v4150 = vld [vmem:[%s4106 + $0x158] sm:$0xff]
        %v4151 = vld [vmem:[%s4106 + $0x160] sm:$0xff]
        %v4152 = vld [vmem:[%s4106 + $0x168] sm:$0xff]
        %v4153 = vld [vmem:[%s4106 + $0x170] sm:$0xff]
        %v4154 = vld [vmem:[%s4106 + $0x178] sm:$0xff]
        %v4155 = vld [vmem:[%s4106 + $0x180] sm:$0xff]
        %v4156 = vld [vmem:[%s4106 + $0x188] sm:$0xff]
        %v4157 = vld [vmem:[%s4106 + $0x190] sm:$0xff]
        %v4158 = vld [vmem:[%s4106 + $0x198] sm:$0xff]
        %v4159 = vld [vmem:[%s4106 + $0x1a0] sm:$0xff]
        %v4160 = vld [vmem:[%s4106 + $0x1a8] sm:$0xff]
        %v4161 = vld [vmem:[%s4106 + $0x1b0] sm:$0xff]
        %v4162 = vld [vmem:[%s4106 + $0x1b8] sm:$0xff]
        %v4163 = vld [vmem:[%s4106 + $0x1c0] sm:$0xff]
        %v4164 = vld [vmem:[%s4106 + $0x1c8] sm:$0xff]
        %v4165 = vld [vmem:[%s4106 + $0x1d0] sm:$0xff]
        %v4166 = vld [vmem:[%s4106 + $0x1d8] sm:$0xff]
        %v4167 = vld [vmem:[%s4106 + $0x1e0] sm:$0xff]
        %v4168 = vld [vmem:[%s4106 + $0x1e8] sm:$0xff]
        %v4169 = vld [vmem:[%s4106 + $0x1f0] sm:$0xff]
        %v4170 = vld [vmem:[%s4106 + $0x1f8] sm:$0xff]
        %v4175 = vrot.slane %v4102, 2
        %v4176 = vrot.slane %v3733, 2
        %v4177 = vsel %vm2405, %v4175, %v4176
        %v4178 = vrot.slane %v4103, 2
        %v4179 = vrot.slane %v3734, 2
        %v4180 = vsel %vm2405, %v4178, %v4179
        %v4181 = vrot.slane %v3735, 2
        %v4182 = vsel %vm2405, %v4176, %v4181
        %v4183 = vrot.slane %v3736, 2
        %v4184 = vsel %vm2405, %v4179, %v4183
        %v4185 = vrot.slane %v3737, 2
        %v4186 = vsel %vm2405, %v4181, %v4185
        %v4187 = vrot.slane %v3738, 2
        %v4188 = vsel %vm2405, %v4183, %v4187
        %v4189 = vrot.slane %v4104, 2
        %v4190 = vsel %vm2405, %v4185, %v4189
        %v4191 = vrot.slane %v4105, 2
        %v4192 = vsel %vm2405, %v4187, %v4191
        %4203 = vmatprep.subr.mxu0 %v4108
        %4204 = vmatpush1.msra.mxu0 %v4107
        %4205 = vmatprep.subr.mxu0 %v4110
        %4206 = vmatpush1.msra.mxu0 %v4109
        %4207 = vmatprep.subr.mxu0 %v4112
        %4208 = vmatpush1.msra.mxu0 %v4111
        %4209 = vmatprep.subr.mxu0 %v4114
        %4210 = vmatpush1.msra.mxu0 %v4113
        %4211 = vmatprep.subr.mxu0 %v4116
        %4212 = vmatpush1.msra.mxu0 %v4115
        %4213 = vmatprep.subr.mxu0 %v4118
        %4214 = vmatpush1.msra.mxu0 %v4117
        %4215 = vmatprep.subr.mxu0 %v4120
        %4216 = vmatpush1.msra.mxu0 %v4119
        %4217 = vmatprep.subr.mxu0 %v4122
        %4218 = vmatpush1.msra.mxu0 %v4121
        %4219 = vmatprep.subr.mxu0 %v4124
        %4220 = vmatpush1.msra.mxu0 %v4123
        %4221 = vmatprep.subr.mxu0 %v4126
        %4222 = vmatpush1.msra.mxu0 %v4125
        %4223 = vmatprep.subr.mxu0 %v4128
        %4224 = vmatpush1.msra.mxu0 %v4127
        %4225 = vmatprep.subr.mxu0 %v4130
        %4226 = vmatpush1.msra.mxu0 %v4129
        %4227 = vmatprep.subr.mxu0 %v4132
        %4228 = vmatpush1.msra.mxu0 %v4131
        %4229 = vmatprep.subr.mxu0 %v4134
        %4230 = vmatpush1.msra.mxu0 %v4133
        %4231 = vmatprep.subr.mxu0 %v4136
        %4232 = vmatpush1.msra.mxu0 %v4135
        %4233 = vmatprep.subr.mxu0 %v4138
        %4234 = vmatpush1.msra.mxu0 %v4137
        %4235 = vmatprep.subr.mxu0 %v4140
        %4236 = vmatpush1.msra.mxu0 %v4139
        %4237 = vmatprep.subr.mxu0 %v4142
        %4238 = vmatpush1.msra.mxu0 %v4141
        %4239 = vmatprep.subr.mxu0 %v4144
        %4240 = vmatpush1.msra.mxu0 %v4143
        %4241 = vmatprep.subr.mxu0 %v4146
        %4242 = vmatpush1.msra.mxu0 %v4145
        %4243 = vmatprep.subr.mxu0 %v4148
        %4244 = vmatpush1.msra.mxu0 %v4147
        %4245 = vmatprep.subr.mxu0 %v4150
        %4246 = vmatpush1.msra.mxu0 %v4149
        %4247 = vmatprep.subr.mxu0 %v4152
        %4248 = vmatpush1.msra.mxu0 %v4151
        %4249 = vmatprep.subr.mxu0 %v4154
        %4250 = vmatpush1.msra.mxu0 %v4153
        %4251 = vmatprep.subr.mxu0 %v4156
        %4252 = vmatpush1.msra.mxu0 %v4155
        %4253 = vmatprep.subr.mxu0 %v4158
        %4254 = vmatpush1.msra.mxu0 %v4157
        %4255 = vmatprep.subr.mxu0 %v4160
        %4256 = vmatpush1.msra.mxu0 %v4159
        %4257 = vmatprep.subr.mxu0 %v4162
        %4258 = vmatpush1.msra.mxu0 %v4161
        %4259 = vmatprep.subr.mxu0 %v4164
        %4260 = vmatpush1.msra.mxu0 %v4163
        %4261 = vmatprep.subr.mxu0 %v4166
        %4262 = vmatpush1.msra.mxu0 %v4165
        %4263 = vmatprep.subr.mxu0 %v4168
        %4264 = vmatpush1.msra.mxu0 %v4167
        %4265 = vmatprep.subr.mxu0 %v4170
        %4266 = vmatpush1.msra.mxu0 %v4169
        %4267 = vmatprep.mubr.f32.mxu0 %v4180
        %4268 = vmatmul.mubr.f32.gmra.mrb[0].mxu0 %v4177
        %v4269 = vpop.f32.mrb[0].mxu0
        %v4270 = vadd.f32 0.0, %v4269
        %v4271 = vpop.f32.mrb[0].mxu0
        %v4272 = vadd.f32 0.0, %v4271
        %4273 = vmatprep.mubr.f32.mxu0 %v4184
        %4274 = vmatmul.mubr.f32.gmra.mrb[0].mxu0 %v4182
        %v4275 = vpop.f32.mrb[0].mxu0
        %v4276 = vadd.f32 0.0, %v4275
        %v4277 = vpop.f32.mrb[0].mxu0
        %v4278 = vadd.f32 0.0, %v4277
        %4279 = vmatprep.mubr.f32.mxu0 %v4188
        %4280 = vmatmul.mubr.f32.gmra.mrb[0].mxu0 %v4186
        %v4281 = vpop.f32.mrb[0].mxu0
        %v4282 = vadd.f32 0.0, %v4281
        %v4283 = vpop.f32.mrb[0].mxu0
        %v4284 = vadd.f32 0.0, %v4283
        %4285 = vmatprep.mubr.f32.mxu0 %v4192
        %4286 = vmatmul.mubr.f32.gmra.mrb[0].mxu0 %v4190
        %v4287 = vpop.f32.mrb[0].mxu0
        %v4288 = vadd.f32 0.0, %v4287
        %v4289 = vpop.f32.mrb[0].mxu0
        %v4290 = vadd.f32 0.0, %v4289
        %4291 = vmatprep.mubr.f32.mxu0 %v4191
        %4292 = vmatmul.mubr.f32.gmra.mrb[0].mxu0 %v4189
        %v4293 = vpop.f32.mrb[0].mxu0
        %v4294 = vadd.f32 0.0, %v4293
        %v4295 = vpop.f32.mrb[0].mxu0
        %v4296 = vadd.f32 0.0, %v4295
        %4297 = vdwg.mxu0
        %v4298 = vadd.f32 %v4074, %v4270
        %v4299 = vadd.f32 %v4076, %v4272
        %v4300 = vadd.f32 %v4080, %v4276
        %v4301 = vadd.f32 %v4082, %v4278
        %v4302 = vadd.f32 %v4086, %v4282
        %v4303 = vadd.f32 %v4088, %v4284
        %v4304 = vadd.f32 %v4092, %v4288
        %v4305 = vadd.f32 %v4094, %v4290
        %v4306 = vadd.f32 %v4098, %v4294
        %v4307 = vadd.f32 %v4100, %v4296
        %v4308 = vld [vmem:[#allocation17] sm:$0xff]
        %v4309 = vld [vmem:[#allocation17 + $0x8] sm:$0xff]
        %v4310 = vld [vmem:[#allocation17 + $0x10] sm:$0xff]
        %v4311 = vld [vmem:[#allocation17 + $0x18] sm:$0xff]
        %v4312 = vld [vmem:[#allocation17 + $0x20] sm:$0xff]
        %v4313 = vld [vmem:[#allocation17 + $0x28] sm:$0xff]
        %v4314 = vld [vmem:[#allocation17 + $0x30] sm:$0xff]
        %v4315 = vld [vmem:[#allocation17 + $0x38] sm:$0xff]
        %v4316 = vld [vmem:[#allocation17 + $0x40] sm:$0xff]
        %v4317 = vld [vmem:[#allocation17 + $0x48] sm:$0xff]
        %v4318 = vld [vmem:[#allocation17 + $0x50] sm:$0xff]
        %v4319 = vld [vmem:[#allocation17 + $0x58] sm:$0xff]
        %v4320 = vld [vmem:[#allocation17 + $0x60] sm:$0xff]
        %v4321 = vld [vmem:[#allocation17 + $0x68] sm:$0xff]
        %v4322 = vld [vmem:[#allocation17 + $0x70] sm:$0xff]
        %v4323 = vld [vmem:[#allocation17 + $0x78] sm:$0xff]
        %v4324 = vld [vmem:[#allocation17 + $0x80] sm:$0xff]
        %v4325 = vld [vmem:[#allocation17 + $0x88] sm:$0xff]
        %v4326 = vld [vmem:[#allocation17 + $0x90] sm:$0xff]
        %v4327 = vld [vmem:[#allocation17 + $0x98] sm:$0xff]
        %v4328 = vld [vmem:[#allocation17 + $0xa0] sm:$0xff]
        %v4329 = vld [vmem:[#allocation17 + $0xa8] sm:$0xff]
        %v4330 = vld [vmem:[#allocation17 + $0xb0] sm:$0xff]
        %v4331 = vld [vmem:[#allocation17 + $0xb8] sm:$0xff]
        %v4332 = vld [vmem:[#allocation17 + $0xc0] sm:$0xff]
        %v4333 = vld [vmem:[#allocation17 + $0xc8] sm:$0xff]
        %v4334 = vld [vmem:[#allocation17 + $0xd0] sm:$0xff]
        %v4335 = vld [vmem:[#allocation17 + $0xd8] sm:$0xff]
        %v4336 = vld [vmem:[#allocation17 + $0xe0] sm:$0xff]
        %v4337 = vld [vmem:[#allocation17 + $0xe8] sm:$0xff]
        %v4338 = vld [vmem:[#allocation17 + $0xf0] sm:$0xff]
        %v4339 = vld [vmem:[#allocation17 + $0xf8] sm:$0xff]
        %v4340 = vld [vmem:[#allocation17 + $0x100] sm:$0xff]
        %v4341 = vld [vmem:[#allocation17 + $0x108] sm:$0xff]
        %v4342 = vld [vmem:[#allocation17 + $0x110] sm:$0xff]
        %v4343 = vld [vmem:[#allocation17 + $0x118] sm:$0xff]
        %v4344 = vld [vmem:[#allocation17 + $0x120] sm:$0xff]
        %v4345 = vld [vmem:[#allocation17 + $0x128] sm:$0xff]
        %v4346 = vld [vmem:[#allocation17 + $0x130] sm:$0xff]
        %v4347 = vld [vmem:[#allocation17 + $0x138] sm:$0xff]
        %v4348 = vld [vmem:[#allocation17 + $0x140] sm:$0xff]
        %v4349 = vld [vmem:[#allocation17 + $0x148] sm:$0xff]
        %v4350 = vld [vmem:[#allocation17 + $0x150] sm:$0xff]
        %v4351 = vld [vmem:[#allocation17 + $0x158] sm:$0xff]
        %v4352 = vld [vmem:[#allocation17 + $0x160] sm:$0xff]
        %v4353 = vld [vmem:[#allocation17 + $0x168] sm:$0xff]
        %v4354 = vld [vmem:[#allocation17 + $0x170] sm:$0xff]
        %v4355 = vld [vmem:[#allocation17 + $0x178] sm:$0xff]
        %v4356 = vld [vmem:[#allocation17 + $0x180] sm:$0xff]
        %v4357 = vld [vmem:[#allocation17 + $0x188] sm:$0xff]
        %v4358 = vld [vmem:[#allocation17 + $0x190] sm:$0xff]
        %v4359 = vld [vmem:[#allocation17 + $0x198] sm:$0xff]
        %v4360 = vld [vmem:[#allocation17 + $0x1a0] sm:$0xff]
        %v4361 = vld [vmem:[#allocation17 + $0x1a8] sm:$0xff]
        %v4362 = vld [vmem:[#allocation17 + $0x1b0] sm:$0xff]
        %v4363 = vld [vmem:[#allocation17 + $0x1b8] sm:$0xff]
        %v4364 = vld [vmem:[#allocation17 + $0x1c0] sm:$0xff]
        %v4365 = vld [vmem:[#allocation17 + $0x1c8] sm:$0xff]
        %v4366 = vld [vmem:[#allocation17 + $0x1d0] sm:$0xff]
        %v4367 = vld [vmem:[#allocation17 + $0x1d8] sm:$0xff]
        %v4368 = vld [vmem:[#allocation17 + $0x1e0] sm:$0xff]
        %v4369 = vld [vmem:[#allocation17 + $0x1e8] sm:$0xff]
        %v4370 = vld [vmem:[#allocation17 + $0x1f0] sm:$0xff]
        %v4371 = vld [vmem:[#allocation17 + $0x1f8] sm:$0xff]
        %s4372 = scalar_lea.vmem [#allocation17], 512
        %v4373 = vld [vmem:[%s4372] sm:$0xff]
        %v4374 = vld [vmem:[%s4372 + $0x8] sm:$0xff]
        %v4375 = vld [vmem:[%s4372 + $0x10] sm:$0xff]
        %v4376 = vld [vmem:[%s4372 + $0x18] sm:$0xff]
        %v4377 = vld [vmem:[%s4372 + $0x20] sm:$0xff]
        %v4378 = vld [vmem:[%s4372 + $0x28] sm:$0xff]
        %v4379 = vld [vmem:[%s4372 + $0x30] sm:$0xff]
        %v4380 = vld [vmem:[%s4372 + $0x38] sm:$0xff]
        %v4381 = vld [vmem:[%s4372 + $0x40] sm:$0xff]
        %v4382 = vld [vmem:[%s4372 + $0x48] sm:$0xff]
        %v4383 = vld [vmem:[%s4372 + $0x50] sm:$0xff]
        %v4384 = vld [vmem:[%s4372 + $0x58] sm:$0xff]
        %v4385 = vld [vmem:[%s4372 + $0x60] sm:$0xff]
        %v4386 = vld [vmem:[%s4372 + $0x68] sm:$0xff]
        %v4387 = vld [vmem:[%s4372 + $0x70] sm:$0xff]
        %v4388 = vld [vmem:[%s4372 + $0x78] sm:$0xff]
        %v4389 = vld [vmem:[%s4372 + $0x80] sm:$0xff]
        %v4390 = vld [vmem:[%s4372 + $0x88] sm:$0xff]
        %v4391 = vld [vmem:[%s4372 + $0x90] sm:$0xff]
        %v4392 = vld [vmem:[%s4372 + $0x98] sm:$0xff]
        %v4393 = vld [vmem:[%s4372 + $0xa0] sm:$0xff]
        %v4394 = vld [vmem:[%s4372 + $0xa8] sm:$0xff]
        %v4395 = vld [vmem:[%s4372 + $0xb0] sm:$0xff]
        %v4396 = vld [vmem:[%s4372 + $0xb8] sm:$0xff]
        %v4397 = vld [vmem:[%s4372 + $0xc0] sm:$0xff]
        %v4398 = vld [vmem:[%s4372 + $0xc8] sm:$0xff]
        %v4399 = vld [vmem:[%s4372 + $0xd0] sm:$0xff]
        %v4400 = vld [vmem:[%s4372 + $0xd8] sm:$0xff]
        %v4401 = vld [vmem:[%s4372 + $0xe0] sm:$0xff]
        %v4402 = vld [vmem:[%s4372 + $0xe8] sm:$0xff]
        %v4403 = vld [vmem:[%s4372 + $0xf0] sm:$0xff]
        %v4404 = vld [vmem:[%s4372 + $0xf8] sm:$0xff]
        %v4405 = vld [vmem:[%s4372 + $0x100] sm:$0xff]
        %v4406 = vld [vmem:[%s4372 + $0x108] sm:$0xff]
        %v4407 = vld [vmem:[%s4372 + $0x110] sm:$0xff]
        %v4408 = vld [vmem:[%s4372 + $0x118] sm:$0xff]
        %v4409 = vld [vmem:[%s4372 + $0x120] sm:$0xff]
        %v4410 = vld [vmem:[%s4372 + $0x128] sm:$0xff]
        %v4411 = vld [vmem:[%s4372 + $0x130] sm:$0xff]
        %v4412 = vld [vmem:[%s4372 + $0x138] sm:$0xff]
        %v4413 = vld [vmem:[%s4372 + $0x140] sm:$0xff]
        %v4414 = vld [vmem:[%s4372 + $0x148] sm:$0xff]
        %v4415 = vld [vmem:[%s4372 + $0x150] sm:$0xff]
        %v4416 = vld [vmem:[%s4372 + $0x158] sm:$0xff]
        %v4417 = vld [vmem:[%s4372 + $0x160] sm:$0xff]
        %v4418 = vld [vmem:[%s4372 + $0x168] sm:$0xff]
        %v4419 = vld [vmem:[%s4372 + $0x170] sm:$0xff]
        %v4420 = vld [vmem:[%s4372 + $0x178] sm:$0xff]
        %v4421 = vld [vmem:[%s4372 + $0x180] sm:$0xff]
        %v4422 = vld [vmem:[%s4372 + $0x188] sm:$0xff]
        %v4423 = vld [vmem:[%s4372 + $0x190] sm:$0xff]
        %v4424 = vld [vmem:[%s4372 + $0x198] sm:$0xff]
        %v4425 = vld [vmem:[%s4372 + $0x1a0] sm:$0xff]
        %v4426 = vld [vmem:[%s4372 + $0x1a8] sm:$0xff]
        %v4427 = vld [vmem:[%s4372 + $0x1b0] sm:$0xff]
        %v4428 = vld [vmem:[%s4372 + $0x1b8] sm:$0xff]
        %v4429 = vld [vmem:[%s4372 + $0x1c0] sm:$0xff]
        %v4430 = vld [vmem:[%s4372 + $0x1c8] sm:$0xff]
        %v4431 = vld [vmem:[%s4372 + $0x1d0] sm:$0xff]
        %v4432 = vld [vmem:[%s4372 + $0x1d8] sm:$0xff]
        %v4433 = vld [vmem:[%s4372 + $0x1e0] sm:$0xff]
        %v4434 = vld [vmem:[%s4372 + $0x1e8] sm:$0xff]
        %v4435 = vld [vmem:[%s4372 + $0x1f0] sm:$0xff]
        %v4436 = vld [vmem:[%s4372 + $0x1f8] sm:$0xff]
        %4437 = vmatprep.subr.mxu0 %v4374
        %4438 = vmatpush1.msra.mxu0 %v4373
        %4439 = vmatprep.subr.mxu0 %v4376
        %4440 = vmatpush1.msra.mxu0 %v4375
        %4441 = vmatprep.subr.mxu0 %v4378
        %4442 = vmatpush1.msra.mxu0 %v4377
        %4443 = vmatprep.subr.mxu0 %v4380
        %4444 = vmatpush1.msra.mxu0 %v4379
        %4445 = vmatprep.subr.mxu0 %v4382
        %4446 = vmatpush1.msra.mxu0 %v4381
        %4447 = vmatprep.subr.mxu0 %v4384
        %4448 = vmatpush1.msra.mxu0 %v4383
        %4449 = vmatprep.subr.mxu0 %v4386
        %4450 = vmatpush1.msra.mxu0 %v4385
        %4451 = vmatprep.subr.mxu0 %v4388
        %4452 = vmatpush1.msra.mxu0 %v4387
        %4453 = vmatprep.subr.mxu0 %v4390
        %4454 = vmatpush1.msra.mxu0 %v4389
        %4455 = vmatprep.subr.mxu0 %v4392
        %4456 = vmatpush1.msra.mxu0 %v4391
        %4457 = vmatprep.subr.mxu0 %v4394
        %4458 = vmatpush1.msra.mxu0 %v4393
        %4459 = vmatprep.subr.mxu0 %v4396
        %4460 = vmatpush1.msra.mxu0 %v4395
        %4461 = vmatprep.subr.mxu0 %v4398
        %4462 = vmatpush1.msra.mxu0 %v4397
        %4463 = vmatprep.subr.mxu0 %v4400
        %4464 = vmatpush1.msra.mxu0 %v4399
        %4465 = vmatprep.subr.mxu0 %v4402
        %4466 = vmatpush1.msra.mxu0 %v4401
        %4467 = vmatprep.subr.mxu0 %v4404
        %4468 = vmatpush1.msra.mxu0 %v4403
        %4469 = vmatprep.subr.mxu0 %v4406
        %4470 = vmatpush1.msra.mxu0 %v4405
        %4471 = vmatprep.subr.mxu0 %v4408
        %4472 = vmatpush1.msra.mxu0 %v4407
        %4473 = vmatprep.subr.mxu0 %v4410
        %4474 = vmatpush1.msra.mxu0 %v4409
        %4475 = vmatprep.subr.mxu0 %v4412
        %4476 = vmatpush1.msra.mxu0 %v4411
        %4477 = vmatprep.subr.mxu0 %v4414
        %4478 = vmatpush1.msra.mxu0 %v4413
        %4479 = vmatprep.subr.mxu0 %v4416
        %4480 = vmatpush1.msra.mxu0 %v4415
        %4481 = vmatprep.subr.mxu0 %v4418
        %4482 = vmatpush1.msra.mxu0 %v4417
        %4483 = vmatprep.subr.mxu0 %v4420
        %4484 = vmatpush1.msra.mxu0 %v4419
        %4485 = vmatprep.subr.mxu0 %v4422
        %4486 = vmatpush1.msra.mxu0 %v4421
        %4487 = vmatprep.subr.mxu0 %v4424
        %4488 = vmatpush1.msra.mxu0 %v4423
        %4489 = vmatprep.subr.mxu0 %v4426
        %4490 = vmatpush1.msra.mxu0 %v4425
        %4491 = vmatprep.subr.mxu0 %v4428
        %4492 = vmatpush1.msra.mxu0 %v4427
        %4493 = vmatprep.subr.mxu0 %v4430
        %4494 = vmatpush1.msra.mxu0 %v4429
        %4495 = vmatprep.subr.mxu0 %v4432
        %4496 = vmatpush1.msra.mxu0 %v4431
        %4497 = vmatprep.subr.mxu0 %v4434
        %4498 = vmatpush1.msra.mxu0 %v4433
        %4499 = vmatprep.subr.mxu0 %v4436
        %4500 = vmatpush1.msra.mxu0 %v4435
        %4501 = vmatprep.mubr.f32.mxu0 %v3889
        %4502 = vmatmul.mubr.f32.gmra.mrb[0].mxu0 %v3886
        %v4503 = vpop.f32.mrb[0].mxu0
        %v4504 = vadd.f32 0.0, %v4503
        %v4505 = vpop.f32.mrb[0].mxu0
        %v4506 = vadd.f32 0.0, %v4505
        %4507 = vmatprep.mubr.f32.mxu0 %v3893
        %4508 = vmatmul.mubr.f32.gmra.mrb[0].mxu0 %v3891
        %v4509 = vpop.f32.mrb[0].mxu0
        %v4510 = vadd.f32 0.0, %v4509
        %v4511 = vpop.f32.mrb[0].mxu0
        %v4512 = vadd.f32 0.0, %v4511
        %4513 = vmatprep.mubr.f32.mxu0 %v3897
        %4514 = vmatmul.mubr.f32.gmra.mrb[0].mxu0 %v3895
        %v4515 = vpop.f32.mrb[0].mxu0
        %v4516 = vadd.f32 0.0, %v4515
        %v4517 = vpop.f32.mrb[0].mxu0
        %v4518 = vadd.f32 0.0, %v4517
        %4519 = vmatprep.mubr.f32.mxu0 %v3901
        %4520 = vmatmul.mubr.f32.gmra.mrb[0].mxu0 %v3899
        %v4521 = vpop.f32.mrb[0].mxu0
        %v4522 = vadd.f32 0.0, %v4521
        %v4523 = vpop.f32.mrb[0].mxu0
        %v4524 = vadd.f32 0.0, %v4523
        %4525 = vmatprep.mubr.f32.mxu0 %v3900
        %4526 = vmatmul.mubr.f32.gmra.mrb[0].mxu0 %v3898
        %v4527 = vpop.f32.mrb[0].mxu0
        %v4528 = vadd.f32 0.0, %v4527
        %v4529 = vpop.f32.mrb[0].mxu0
        %v4530 = vadd.f32 0.0, %v4529
        %4531 = vdwg.mxu0
        %4532 = vmatprep.subr.mxu0 %v4309
        %4533 = vmatpush1.msra.mxu0 %v4308
        %4534 = vmatprep.subr.mxu0 %v4311
        %4535 = vmatpush1.msra.mxu0 %v4310
        %4536 = vmatprep.subr.mxu0 %v4313
        %4537 = vmatpush1.msra.mxu0 %v4312
        %4538 = vmatprep.subr.mxu0 %v4315
        %4539 = vmatpush1.msra.mxu0 %v4314
        %4540 = vmatprep.subr.mxu0 %v4317
        %4541 = vmatpush1.msra.mxu0 %v4316
        %4542 = vmatprep.subr.mxu0 %v4319
        %4543 = vmatpush1.msra.mxu0 %v4318
        %4544 = vmatprep.subr.mxu0 %v4321
        %4545 = vmatpush1.msra.mxu0 %v4320
        %4546 = vmatprep.subr.mxu0 %v4323
        %4547 = vmatpush1.msra.mxu0 %v4322
        %4548 = vmatprep.subr.mxu0 %v4325
        %4549 = vmatpush1.msra.mxu0 %v4324
        %4550 = vmatprep.subr.mxu0 %v4327
        %4551 = vmatpush1.msra.mxu0 %v4326
        %4552 = vmatprep.subr.mxu0 %v4329
        %4553 = vmatpush1.msra.mxu0 %v4328
        %4554 = vmatprep.subr.mxu0 %v4331
        %4555 = vmatpush1.msra.mxu0 %v4330
        %4556 = vmatprep.subr.mxu0 %v4333
        %4557 = vmatpush1.msra.mxu0 %v4332
        %4558 = vmatprep.subr.mxu0 %v4335
        %4559 = vmatpush1.msra.mxu0 %v4334
        %4560 = vmatprep.subr.mxu0 %v4337
        %4561 = vmatpush1.msra.mxu0 %v4336
        %4562 = vmatprep.subr.mxu0 %v4339
        %4563 = vmatpush1.msra.mxu0 %v4338
        %4564 = vmatprep.subr.mxu0 %v4341
        %4565 = vmatpush1.msra.mxu0 %v4340
        %4566 = vmatprep.subr.mxu0 %v4343
        %4567 = vmatpush1.msra.mxu0 %v4342
        %4568 = vmatprep.subr.mxu0 %v4345
        %4569 = vmatpush1.msra.mxu0 %v4344
        %4570 = vmatprep.subr.mxu0 %v4347
        %4571 = vmatpush1.msra.mxu0 %v4346
        %4572 = vmatprep.subr.mxu0 %v4349
        %4573 = vmatpush1.msra.mxu0 %v4348
        %4574 = vmatprep.subr.mxu0 %v4351
        %4575 = vmatpush1.msra.mxu0 %v4350
        %4576 = vmatprep.subr.mxu0 %v4353
        %4577 = vmatpush1.msra.mxu0 %v4352
        %4578 = vmatprep.subr.mxu0 %v4355
        %4579 = vmatpush1.msra.mxu0 %v4354
        %4580 = vmatprep.subr.mxu0 %v4357
        %4581 = vmatpush1.msra.mxu0 %v4356
        %4582 = vmatprep.subr.mxu0 %v4359
        %4583 = vmatpush1.msra.mxu0 %v4358
        %4584 = vmatprep.subr.mxu0 %v4361
        %4585 = vmatpush1.msra.mxu0 %v4360
        %4586 = vmatprep.subr.mxu0 %v4363
        %4587 = vmatpush1.msra.mxu0 %v4362
        %4588 = vmatprep.subr.mxu0 %v4365
        %4589 = vmatpush1.msra.mxu0 %v4364
        %4590 = vmatprep.subr.mxu0 %v4367
        %4591 = vmatpush1.msra.mxu0 %v4366
        %4592 = vmatprep.subr.mxu0 %v4369
        %4593 = vmatpush1.msra.mxu0 %v4368
        %4594 = vmatprep.subr.mxu0 %v4371
        %4595 = vmatpush1.msra.mxu0 %v4370
        %4596 = vmatprep.mubr.f32.mxu0 %v3732
        %4597 = vmatmul.mubr.f32.gmra.mrb[0].mxu0 %v3731
        %v4598 = vpop.f32.mrb[0].mxu0
        %v4599 = vadd.f32 %v4504, %v4598
        %v4600 = vpop.f32.mrb[0].mxu0
        %v4601 = vadd.f32 %v4506, %v4600
        %4602 = vmatprep.mubr.f32.mxu0 %v3734
        %4603 = vmatmul.mubr.f32.gmra.mrb[0].mxu0 %v3733
        %v4604 = vpop.f32.mrb[0].mxu0
        %v4605 = vadd.f32 %v4510, %v4604
        %v4606 = vpop.f32.mrb[0].mxu0
        %v4607 = vadd.f32 %v4512, %v4606
        %4608 = vmatprep.mubr.f32.mxu0 %v3736
        %4609 = vmatmul.mubr.f32.gmra.mrb[0].mxu0 %v3735
        %v4610 = vpop.f32.mrb[0].mxu0
        %v4611 = vadd.f32 %v4516, %v4610
        %v4612 = vpop.f32.mrb[0].mxu0
        %v4613 = vadd.f32 %v4518, %v4612
        %4614 = vmatprep.mubr.f32.mxu0 %v3738
        %4615 = vmatmul.mubr.f32.gmra.mrb[0].mxu0 %v3737
        %v4616 = vpop.f32.mrb[0].mxu0
        %v4617 = vadd.f32 %v4522, %v4616
        %v4618 = vpop.f32.mrb[0].mxu0
        %v4619 = vadd.f32 %v4524, %v4618
        %4620 = vmatprep.mubr.f32.mxu0 %v3740
        %4621 = vmatmul.mubr.f32.gmra.mrb[0].mxu0 %v3739
        %v4622 = vpop.f32.mrb[0].mxu0
        %v4623 = vadd.f32 %v4528, %v4622
        %v4624 = vpop.f32.mrb[0].mxu0
        %v4625 = vadd.f32 %v4530, %v4624
        %4626 = vdwg.mxu0
        %s4627 = scalar_lea.vmem [#allocation17], 1024
        %v4628 = vld [vmem:[%s4627] sm:$0xff]
        %v4629 = vld [vmem:[%s4627 + $0x8] sm:$0xff]
        %v4630 = vld [vmem:[%s4627 + $0x10] sm:$0xff]
        %v4631 = vld [vmem:[%s4627 + $0x18] sm:$0xff]
        %v4632 = vld [vmem:[%s4627 + $0x20] sm:$0xff]
        %v4633 = vld [vmem:[%s4627 + $0x28] sm:$0xff]
        %v4634 = vld [vmem:[%s4627 + $0x30] sm:$0xff]
        %v4635 = vld [vmem:[%s4627 + $0x38] sm:$0xff]
        %v4636 = vld [vmem:[%s4627 + $0x40] sm:$0xff]
        %v4637 = vld [vmem:[%s4627 + $0x48] sm:$0xff]
        %v4638 = vld [vmem:[%s4627 + $0x50] sm:$0xff]
        %v4639 = vld [vmem:[%s4627 + $0x58] sm:$0xff]
        %v4640 = vld [vmem:[%s4627 + $0x60] sm:$0xff]
        %v4641 = vld [vmem:[%s4627 + $0x68] sm:$0xff]
        %v4642 = vld [vmem:[%s4627 + $0x70] sm:$0xff]
        %v4643 = vld [vmem:[%s4627 + $0x78] sm:$0xff]
        %v4644 = vld [vmem:[%s4627 + $0x80] sm:$0xff]
        %v4645 = vld [vmem:[%s4627 + $0x88] sm:$0xff]
        %v4646 = vld [vmem:[%s4627 + $0x90] sm:$0xff]
        %v4647 = vld [vmem:[%s4627 + $0x98] sm:$0xff]
        %v4648 = vld [vmem:[%s4627 + $0xa0] sm:$0xff]
        %v4649 = vld [vmem:[%s4627 + $0xa8] sm:$0xff]
        %v4650 = vld [vmem:[%s4627 + $0xb0] sm:$0xff]
        %v4651 = vld [vmem:[%s4627 + $0xb8] sm:$0xff]
        %v4652 = vld [vmem:[%s4627 + $0xc0] sm:$0xff]
        %v4653 = vld [vmem:[%s4627 + $0xc8] sm:$0xff]
        %v4654 = vld [vmem:[%s4627 + $0xd0] sm:$0xff]
        %v4655 = vld [vmem:[%s4627 + $0xd8] sm:$0xff]
        %v4656 = vld [vmem:[%s4627 + $0xe0] sm:$0xff]
        %v4657 = vld [vmem:[%s4627 + $0xe8] sm:$0xff]
        %v4658 = vld [vmem:[%s4627 + $0xf0] sm:$0xff]
        %v4659 = vld [vmem:[%s4627 + $0xf8] sm:$0xff]
        %v4660 = vld [vmem:[%s4627 + $0x100] sm:$0xff]
        %v4661 = vld [vmem:[%s4627 + $0x108] sm:$0xff]
        %v4662 = vld [vmem:[%s4627 + $0x110] sm:$0xff]
        %v4663 = vld [vmem:[%s4627 + $0x118] sm:$0xff]
        %v4664 = vld [vmem:[%s4627 + $0x120] sm:$0xff]
        %v4665 = vld [vmem:[%s4627 + $0x128] sm:$0xff]
        %v4666 = vld [vmem:[%s4627 + $0x130] sm:$0xff]
        %v4667 = vld [vmem:[%s4627 + $0x138] sm:$0xff]
        %v4668 = vld [vmem:[%s4627 + $0x140] sm:$0xff]
        %v4669 = vld [vmem:[%s4627 + $0x148] sm:$0xff]
        %v4670 = vld [vmem:[%s4627 + $0x150] sm:$0xff]
        %v4671 = vld [vmem:[%s4627 + $0x158] sm:$0xff]
        %v4672 = vld [vmem:[%s4627 + $0x160] sm:$0xff]
        %v4673 = vld [vmem:[%s4627 + $0x168] sm:$0xff]
        %v4674 = vld [vmem:[%s4627 + $0x170] sm:$0xff]
        %v4675 = vld [vmem:[%s4627 + $0x178] sm:$0xff]
        %v4676 = vld [vmem:[%s4627 + $0x180] sm:$0xff]
        %v4677 = vld [vmem:[%s4627 + $0x188] sm:$0xff]
        %v4678 = vld [vmem:[%s4627 + $0x190] sm:$0xff]
        %v4679 = vld [vmem:[%s4627 + $0x198] sm:$0xff]
        %v4680 = vld [vmem:[%s4627 + $0x1a0] sm:$0xff]
        %v4681 = vld [vmem:[%s4627 + $0x1a8] sm:$0xff]
        %v4682 = vld [vmem:[%s4627 + $0x1b0] sm:$0xff]
        %v4683 = vld [vmem:[%s4627 + $0x1b8] sm:$0xff]
        %v4684 = vld [vmem:[%s4627 + $0x1c0] sm:$0xff]
        %v4685 = vld [vmem:[%s4627 + $0x1c8] sm:$0xff]
        %v4686 = vld [vmem:[%s4627 + $0x1d0] sm:$0xff]
        %v4687 = vld [vmem:[%s4627 + $0x1d8] sm:$0xff]
        %v4688 = vld [vmem:[%s4627 + $0x1e0] sm:$0xff]
        %v4689 = vld [vmem:[%s4627 + $0x1e8] sm:$0xff]
        %v4690 = vld [vmem:[%s4627 + $0x1f0] sm:$0xff]
        %v4691 = vld [vmem:[%s4627 + $0x1f8] sm:$0xff]
        %4692 = vmatprep.subr.mxu0 %v4629
        %4693 = vmatpush1.msra.mxu0 %v4628
        %4694 = vmatprep.subr.mxu0 %v4631
        %4695 = vmatpush1.msra.mxu0 %v4630
        %4696 = vmatprep.subr.mxu0 %v4633
        %4697 = vmatpush1.msra.mxu0 %v4632
        %4698 = vmatprep.subr.mxu0 %v4635
        %4699 = vmatpush1.msra.mxu0 %v4634
        %4700 = vmatprep.subr.mxu0 %v4637
        %4701 = vmatpush1.msra.mxu0 %v4636
        %4702 = vmatprep.subr.mxu0 %v4639
        %4703 = vmatpush1.msra.mxu0 %v4638
        %4704 = vmatprep.subr.mxu0 %v4641
        %4705 = vmatpush1.msra.mxu0 %v4640
        %4706 = vmatprep.subr.mxu0 %v4643
        %4707 = vmatpush1.msra.mxu0 %v4642
        %4708 = vmatprep.subr.mxu0 %v4645
        %4709 = vmatpush1.msra.mxu0 %v4644
        %4710 = vmatprep.subr.mxu0 %v4647
        %4711 = vmatpush1.msra.mxu0 %v4646
        %4712 = vmatprep.subr.mxu0 %v4649
        %4713 = vmatpush1.msra.mxu0 %v4648
        %4714 = vmatprep.subr.mxu0 %v4651
        %4715 = vmatpush1.msra.mxu0 %v4650
        %4716 = vmatprep.subr.mxu0 %v4653
        %4717 = vmatpush1.msra.mxu0 %v4652
        %4718 = vmatprep.subr.mxu0 %v4655
        %4719 = vmatpush1.msra.mxu0 %v4654
        %4720 = vmatprep.subr.mxu0 %v4657
        %4721 = vmatpush1.msra.mxu0 %v4656
        %4722 = vmatprep.subr.mxu0 %v4659
        %4723 = vmatpush1.msra.mxu0 %v4658
        %4724 = vmatprep.subr.mxu0 %v4661
        %4725 = vmatpush1.msra.mxu0 %v4660
        %4726 = vmatprep.subr.mxu0 %v4663
        %4727 = vmatpush1.msra.mxu0 %v4662
        %4728 = vmatprep.subr.mxu0 %v4665
        %4729 = vmatpush1.msra.mxu0 %v4664
        %4730 = vmatprep.subr.mxu0 %v4667
        %4731 = vmatpush1.msra.mxu0 %v4666
        %4732 = vmatprep.subr.mxu0 %v4669
        %4733 = vmatpush1.msra.mxu0 %v4668
        %4734 = vmatprep.subr.mxu0 %v4671
        %4735 = vmatpush1.msra.mxu0 %v4670
        %4736 = vmatprep.subr.mxu0 %v4673
        %4737 = vmatpush1.msra.mxu0 %v4672
        %4738 = vmatprep.subr.mxu0 %v4675
        %4739 = vmatpush1.msra.mxu0 %v4674
        %4740 = vmatprep.subr.mxu0 %v4677
        %4741 = vmatpush1.msra.mxu0 %v4676
        %4742 = vmatprep.subr.mxu0 %v4679
        %4743 = vmatpush1.msra.mxu0 %v4678
        %4744 = vmatprep.subr.mxu0 %v4681
        %4745 = vmatpush1.msra.mxu0 %v4680
        %4746 = vmatprep.subr.mxu0 %v4683
        %4747 = vmatpush1.msra.mxu0 %v4682
        %4748 = vmatprep.subr.mxu0 %v4685
        %4749 = vmatpush1.msra.mxu0 %v4684
        %4750 = vmatprep.subr.mxu0 %v4687
        %4751 = vmatpush1.msra.mxu0 %v4686
        %4752 = vmatprep.subr.mxu0 %v4689
        %4753 = vmatpush1.msra.mxu0 %v4688
        %4754 = vmatprep.subr.mxu0 %v4691
        %4755 = vmatpush1.msra.mxu0 %v4690
        %4756 = vmatprep.mubr.f32.mxu0 %v4180
        %4757 = vmatmul.mubr.f32.gmra.mrb[0].mxu0 %v4177
        %v4758 = vpop.f32.mrb[0].mxu0
        %v4759 = vadd.f32 0.0, %v4758
        %v4760 = vpop.f32.mrb[0].mxu0
        %v4761 = vadd.f32 0.0, %v4760
        %4762 = vmatprep.mubr.f32.mxu0 %v4184
        %4763 = vmatmul.mubr.f32.gmra.mrb[0].mxu0 %v4182
        %v4764 = vpop.f32.mrb[0].mxu0
        %v4765 = vadd.f32 0.0, %v4764
        %v4766 = vpop.f32.mrb[0].mxu0
        %v4767 = vadd.f32 0.0, %v4766
        %4768 = vmatprep.mubr.f32.mxu0 %v4188
        %4769 = vmatmul.mubr.f32.gmra.mrb[0].mxu0 %v4186
        %v4770 = vpop.f32.mrb[0].mxu0
        %v4771 = vadd.f32 0.0, %v4770
        %v4772 = vpop.f32.mrb[0].mxu0
        %v4773 = vadd.f32 0.0, %v4772
        %4774 = vmatprep.mubr.f32.mxu0 %v4192
        %4775 = vmatmul.mubr.f32.gmra.mrb[0].mxu0 %v4190
        %v4776 = vpop.f32.mrb[0].mxu0
        %v4777 = vadd.f32 0.0, %v4776
        %v4778 = vpop.f32.mrb[0].mxu0
        %v4779 = vadd.f32 0.0, %v4778
        %4780 = vmatprep.mubr.f32.mxu0 %v4191
        %4781 = vmatmul.mubr.f32.gmra.mrb[0].mxu0 %v4189
        %v4782 = vpop.f32.mrb[0].mxu0
        %v4783 = vadd.f32 0.0, %v4782
        %v4784 = vpop.f32.mrb[0].mxu0
        %v4785 = vadd.f32 0.0, %v4784
        %4786 = vdwg.mxu0
        %v4787 = vadd.f32 %v4599, %v4759
        %v4788 = vadd.f32 %v4601, %v4761
        %v4789 = vadd.f32 %v4605, %v4765
        %v4790 = vadd.f32 %v4607, %v4767
        %v4791 = vadd.f32 %v4611, %v4771
        %v4792 = vadd.f32 %v4613, %v4773
        %v4793 = vadd.f32 %v4617, %v4777
        %v4794 = vadd.f32 %v4619, %v4779
        %v4795 = vadd.f32 %v4623, %v4783
        %v4796 = vadd.f32 %v4625, %v4785
        %v4797 = vmax.f32 %v4298, %v4787
        %v4798 = vmax.f32 %v4299, %v4788
        %v4799 = vmax.f32 %v4300, %v4789
        %v4800 = vmax.f32 %v4301, %v4790
        %v4801 = vmax.f32 %v4302, %v4791
        %v4802 = vmax.f32 %v4303, %v4792
        %v4803 = vmax.f32 %v4304, %v4793
        %v4804 = vmax.f32 %v4305, %v4794
        %v4805 = vmax.f32 %v4306, %v4795
        %v4806 = vmax.f32 %v4307, %v4796
        %v4807 = vld [vmem:[#allocation19] sm:$0x3]
        %v4809 = vlaneseq
        %v4810 = vshrl.u32 %v4809, 7
        %v4811 = vsub.s32 0, %v4810
        %v4812 = vrot.slane %v4807, %v4811
        %v4813 = vlaneseq
        %v4814 = vshrl.u32 %v4813, 7
        %v4815 = vsub.s32 1, %v4814
        %v4816 = vrot.slane %v4807, %v4815
        %v4819 = vadd.f32 %v4797, %v4812
        %v4820 = vadd.f32 %v4798, %v4816
        %v4821 = vadd.f32 %v4799, %v4812
        %v4822 = vadd.f32 %v4800, %v4816
        %v4823 = vadd.f32 %v4801, %v4812
        %v4824 = vadd.f32 %v4802, %v4816
        %v4825 = vadd.f32 %v4803, %v4812
        %v4826 = vadd.f32 %v4804, %v4816
        %v4827 = vadd.f32 %v4805, %v4812
        %v4828 = vadd.f32 %v4806, %v4816
        %v4829 = vmax.f32 %v4819, 0.0
        %v4830 = vmax.f32 %v4820, 0.0
        %v4831 = vmax.f32 %v4821, 0.0
        %v4832 = vmax.f32 %v4822, 0.0
        %v4833 = vmax.f32 %v4823, 0.0
        %v4834 = vmax.f32 %v4824, 0.0
        %v4835 = vmax.f32 %v4825, 0.0
        %v4836 = vmax.f32 %v4826, 0.0
        %v4837 = vmax.f32 %v4827, 0.0
        %v4838 = vmax.f32 %v4828, 0.0
        %v4839 = vpack.c.bf16 %v4831, %v4829
        %v4840 = vpack.c.bf16 %v4832, %v4830
        %v4841 = vpack.c.bf16 %v4835, %v4833
        %v4842 = vpack.c.bf16 %v4836, %v4834
        %v4843 = vpack.c.bf16 %v4837, %v4837
        %v4844 = vpack.c.bf16 %v4838, %v4838
        %v4845 = vld [vmem:[%s9] sm:$0xf]
        %v4846 = vld [vmem:[%s9 + $0x4] sm:$0xf]
        %v4847 = vld [vmem:[%s9 + $0x8] sm:$0xf]
        %v4848 = vld [vmem:[%s9 + $0xc] sm:$0xf]
        %v4849 = vld [vmem:[%s9 + $0x10] sm:$0xf]
        %v4850 = vld [vmem:[%s9 + $0x14] sm:$0xf]
        %v4851 = vld [vmem:[%s9 + $0x18] sm:$0xf]
        %v4852 = vld [vmem:[%s9 + $0x1c] sm:$0xf]
        %v4853 = vld [vmem:[%s9 + $0x20] sm:$0xf]
        %v4854 = vld [vmem:[%s9 + $0x24] sm:$0xf]
        %v4855 = vld [vmem:[%s9 + $0x28] sm:$0xf]
        %v4856 = vld [vmem:[%s9 + $0x2c] sm:$0xf]
        %v4857 = vld [vmem:[%s9 + $0x30] sm:$0xf]
        %v4858 = vld [vmem:[%s9 + $0x34] sm:$0xf]
        %v4859 = vld [vmem:[%s9 + $0x38] sm:$0xf]
        %v4860 = vld [vmem:[%s9 + $0x3c] sm:$0xf]
        %v4861 = vld [vmem:[%s9 + $0x40] sm:$0xf]
        %v4862 = vld [vmem:[%s9 + $0x44] sm:$0xf]
        %v4863 = vld [vmem:[%s9 + $0x48] sm:$0xf]
        %v4864 = vld [vmem:[%s9 + $0x4c] sm:$0xf]
        %v4865 = vld [vmem:[%s9 + $0x50] sm:$0xf]
        %v4866 = vld [vmem:[%s9 + $0x54] sm:$0xf]
        %v4867 = vld [vmem:[%s9 + $0x58] sm:$0xf]
        %v4868 = vld [vmem:[%s9 + $0x5c] sm:$0xf]
        %v4869 = vld [vmem:[%s9 + $0x60] sm:$0xf]
        %v4870 = vld [vmem:[%s9 + $0x64] sm:$0xf]
        %v4871 = vld [vmem:[%s9 + $0x68] sm:$0xf]
        %v4872 = vld [vmem:[%s9 + $0x6c] sm:$0xf]
        %v4873 = vld [vmem:[%s9 + $0x70] sm:$0xf]
        %v4874 = vld [vmem:[%s9 + $0x74] sm:$0xf]
        %v4875 = vld [vmem:[%s9 + $0x78] sm:$0xf]
        %v4876 = vld [vmem:[%s9 + $0x7c] sm:$0xf]
        %v4877 = vld [vmem:[#allocation20] sm:$0x1]
        %v4879 = vlaneseq
        %v4880 = vshrl.u32 %v4879, 7
        %v4881 = vsub.s32 0, %v4880
        %v4882 = vrot.slane %v4877, %v4881
        %v4916 = vunpack.c.l.b16 %v4845
        %v4917 = vunpack.c.l.b16 %v4846
        %v4918 = vunpack.c.l.b16 %v4847
        %v4919 = vunpack.c.l.b16 %v4848
        %v4920 = vunpack.c.l.b16 %v4849
        %v4921 = vunpack.c.l.b16 %v4850
        %v4922 = vunpack.c.l.b16 %v4851
        %v4923 = vunpack.c.l.b16 %v4852
        %v4924 = vunpack.c.l.b16 %v4853
        %v4925 = vunpack.c.l.b16 %v4854
        %v4926 = vunpack.c.l.b16 %v4855
        %v4927 = vunpack.c.l.b16 %v4856
        %v4928 = vunpack.c.l.b16 %v4857
        %v4929 = vunpack.c.l.b16 %v4858
        %v4930 = vunpack.c.l.b16 %v4859
        %v4931 = vunpack.c.l.b16 %v4860
        %v4932 = vunpack.c.l.b16 %v4861
        %v4933 = vunpack.c.l.b16 %v4862
        %v4934 = vunpack.c.l.b16 %v4863
        %v4935 = vunpack.c.l.b16 %v4864
        %v4936 = vunpack.c.l.b16 %v4865
        %v4937 = vunpack.c.l.b16 %v4866
        %v4938 = vunpack.c.l.b16 %v4867
        %v4939 = vunpack.c.l.b16 %v4868
        %v4940 = vunpack.c.l.b16 %v4869
        %v4941 = vunpack.c.l.b16 %v4870
        %v4942 = vunpack.c.l.b16 %v4871
        %v4943 = vunpack.c.l.b16 %v4872
        %v4944 = vunpack.c.l.b16 %v4873
        %v4945 = vunpack.c.l.b16 %v4874
        %v4946 = vunpack.c.l.b16 %v4875
        %v4947 = vunpack.c.l.b16 %v4876
        %v4948 = vpack.c.b16 %v4917, %v4916
        %v4949 = vpack.c.b16 %v4919, %v4918
        %v4950 = vpack.c.b16 %v4921, %v4920
        %v4951 = vpack.c.b16 %v4923, %v4922
        %v4952 = vpack.c.b16 %v4925, %v4924
        %v4953 = vpack.c.b16 %v4927, %v4926
        %v4954 = vpack.c.b16 %v4929, %v4928
        %v4955 = vpack.c.b16 %v4931, %v4930
        %v4956 = vpack.c.b16 %v4933, %v4932
        %v4957 = vpack.c.b16 %v4935, %v4934
        %v4958 = vpack.c.b16 %v4937, %v4936
        %v4959 = vpack.c.b16 %v4939, %v4938
        %v4960 = vpack.c.b16 %v4941, %v4940
        %v4961 = vpack.c.b16 %v4943, %v4942
        %v4962 = vpack.c.b16 %v4945, %v4944
        %v4963 = vpack.c.b16 %v4947, %v4946
        %4980 = vmatprep.subr.bf16.mxu0 0
        %4981 = vmatpush1.bf16.msra.mxu0 %v4948
        %4982 = vmatprep.subr.bf16.mxu0 0
        %4983 = vmatpush1.bf16.msra.mxu0 %v4949
        %4984 = vmatprep.subr.bf16.mxu0 0
        %4985 = vmatpush1.bf16.msra.mxu0 %v4950
        %4986 = vmatprep.subr.bf16.mxu0 0
        %4987 = vmatpush1.bf16.msra.mxu0 %v4951
        %4988 = vmatprep.subr.bf16.mxu0 0
        %4989 = vmatpush1.bf16.msra.mxu0 %v4952
        %4990 = vmatprep.subr.bf16.mxu0 0
        %4991 = vmatpush1.bf16.msra.mxu0 %v4953
        %4992 = vmatprep.subr.bf16.mxu0 0
        %4993 = vmatpush1.bf16.msra.mxu0 %v4954
        %4994 = vmatprep.subr.bf16.mxu0 0
        %4995 = vmatpush1.bf16.msra.mxu0 %v4955
        %4996 = vmatprep.subr.bf16.mxu0 0
        %4997 = vmatpush1.bf16.msra.mxu0 %v4956
        %4998 = vmatprep.subr.bf16.mxu0 0
        %4999 = vmatpush1.bf16.msra.mxu0 %v4957
        %5000 = vmatprep.subr.bf16.mxu0 0
        %5001 = vmatpush1.bf16.msra.mxu0 %v4958
        %5002 = vmatprep.subr.bf16.mxu0 0
        %5003 = vmatpush1.bf16.msra.mxu0 %v4959
        %5004 = vmatprep.subr.bf16.mxu0 0
        %5005 = vmatpush1.bf16.msra.mxu0 %v4960
        %5006 = vmatprep.subr.bf16.mxu0 0
        %5007 = vmatpush1.bf16.msra.mxu0 %v4961
        %5008 = vmatprep.subr.bf16.mxu0 0
        %5009 = vmatpush1.bf16.msra.mxu0 %v4962
        %5010 = vmatprep.subr.bf16.mxu0 0
        %5011 = vmatpush1.bf16.msra.mxu0 %v4963
        %5012 = vmatprep.mubr.bf16.mxu0 %v4840
        %5013 = vmatmul.mubr.bf16.gmra.mrb[0].mxu0 %v4839
        %v5014 = vpop.f32.mrb[0].mxu0
        %v5015 = vadd.f32 %v4882, %v5014
        %v5016 = vpop.f32.mrb[0].mxu0
        %v5017 = vpop.f32.mrb[0].mxu0
        %v5018 = vadd.f32 %v4882, %v5017
        %v5019 = vpop.f32.mrb[0].mxu0
        %5020 = vmatprep.mubr.bf16.mxu0 %v4842
        %5021 = vmatmul.mubr.bf16.gmra.mrb[0].mxu0 %v4841
        %v5022 = vpop.f32.mrb[0].mxu0
        %v5023 = vadd.f32 %v4882, %v5022
        %v5024 = vpop.f32.mrb[0].mxu0
        %v5025 = vpop.f32.mrb[0].mxu0
        %v5026 = vadd.f32 %v4882, %v5025
        %v5027 = vpop.f32.mrb[0].mxu0
        %5028 = vmatprep.mubr.bf16.mxu0 %v4844
        %5029 = vmatmul.mubr.bf16.gmra.mrb[0].mxu0 %v4843
        %v5030 = vpop.f32.mrb[0].mxu0
        %v5031 = vadd.f32 %v4882, %v5030
        %v5032 = vpop.f32.mrb[0].mxu0
        %v5033 = vpop.f32.mrb[0].mxu0
        %v5034 = vpop.f32.mrb[0].mxu0
        %5035 = vdwg.mxu0
        %vm5036 = vcmask 523264
        %5037 = vst.msk [vmem:[%s528] sm:$0xff] %vm5036, %v5015
        %5038 = vst.msk [vmem:[%s528 + $0x8] sm:$0xff] %vm5036, %v5018
        %s5039 = scalar_lea.vmem %s528, 16 [#allocation22]
        %vm5040 = vcmask 523266
        %5041 = vst.msk [vmem:[%s5039 - $0x2] sm:$0xfc] %vm5040, %v5023
        %5042 = vst.msk [vmem:[%s5039 + $0x6] sm:$0xff] %vm5036, %v5026
        %vm5043 = vcmask 517120
        %5044 = vst.msk [vmem:[%s5039 + $0xe] sm:$0x3] %vm5043, %v5031
        %s5045 = sand.u32 %s277, 1
        %s5046 = scalar_lea.sflag [#allocation7], %s5045
        %s5047 = sand.u32 %s277, 1
        %s5048 = smul.addr %s5047, 32
        %s5049 = scalar_lea.vmem [#allocation22], %s5048
        // Predicated region
        $region105: #{tpu_custom_call.1} parent=63 // pred_check
          %p5050 = pneg %p287
        $region106: #{tpu_custom_call.1} parent=63 // pred_check_branch
          %5052 = sbr.rel (%p5050) target = $region108
        $region107: #{tpu_custom_call.1} parent=63 // pred_region
          %s5053 = smul.u32 2, %s33
          %s5055 = ssub.s32 512, 512
          %5056 = vsyncadd %s5046, %s5055
          %s5057 = smul.addr %s5053, 2
          %s5058 = smul.addr %s5057, 128
          %s5059 = scalar_lea.hbm %s11, %s5058
          %s5060 = sshll.u32 %s5049, 4
          %s5061 = int_to_ptr.vmem [resolvable:$true] %s5060
          %5066 = dma.vmem_to_hbm [thread:$0]  %s5061, 512, %s5059, %s5046, 128, 128, 8
        $region108: #{tpu_custom_call.1} parent=63 // pred_fallthru
          _
      $region64: #{tpu_custom_call.1} parent=5 // pred_fallthru
        _
      %p5067 = scmp.le.s32.totalorder 2, %s28
      // Predicated region
      $region109: #{tpu_custom_call.1} parent=5 // pred_check
        %p5068 = pneg %p5067
      $region110: #{tpu_custom_call.1} parent=5 // pred_check_branch
        %5070 = sbr.rel (%p5068) target = $region112
      $region111: #{tpu_custom_call.1} parent=5 // pred_region
        %s5071 = ssub.s32 %s28, 2
        // Predicated region
        $region113: #{tpu_custom_call.1} parent=111 // pred_check
          %p5072 = pneg %p293
        $region114: #{tpu_custom_call.1} parent=111 // pred_check_branch
          %5074 = sbr.rel (%p5072) target = $region116
        $region115: #{tpu_custom_call.1} parent=111 // pred_region
          %s5075 = sand.u32 %s278, 1
          %s5076 = scalar_lea.sflag [#allocation7], %s5075
          %s5077 = sand.u32 %s278, 1
          %s5078 = smul.addr %s5077, 32
          %s5079 = scalar_lea.vmem [#allocation22], %s5078
          %5080 = dma.done %s5076, 512
        $region116: #{tpu_custom_call.1} parent=111 // pred_fallthru
          _
      $region112: #{tpu_custom_call.1} parent=5 // pred_fallthru
        _
    $region6: #{tpu_custom_call.1} parent=1 // loop_footer
      %s32 = sadd.s32 1, %s28
    $region7: #{tpu_custom_call.1} parent=1 // loop_footer_branch
      %27 = sbr.rel target = $region3
    $region8: #{tpu_custom_call.1} parent=1 // loop_exit
      _
    %5081 = vsyncpa [#allocation6], 1
    %s5082 = scalar_lea.sflag [#allocation6], 1
    %5083 = vsyncpa %s5082, 1
    %5084 = vsyncpa [#allocation9], 1
    %5085 = vsyncpa [#allocation12], 1
    %5086 = vsyncpa [#allocation15], 1
    %5087 = vsyncpa [#allocation18], 1
    %5088 = vsyncpa [#allocation21], 1
    %5089 = vsyncpa [#allocation7], 1
    %s5090 = scalar_lea.sflag [#allocation7], 1
    %5091 = vsyncpa %s5090, 1

</llo_original>
